<compile_context>
chip_gen: v5e
topology: v5e:2x2
jax: 0.10.0
libtpu: 0.0.40
codegen_flags: <defaults>
</compile_context>

<pallas_src>
import math

import jax
import jax.numpy as jnp
from jax import lax
from jax.experimental import pallas as pl
from jax.experimental.pallas import tpu as pltpu


MXU_DTYPE = jnp.bfloat16   # MXU operand dtype (all accumulation stays f32)
LANE = 128                 # TPU vreg lane width
RET_LANES = 128            # lane-dense slab holding the 2 discriminator scores


def _round_up(x, m):
    return (x + m - 1) // m * m


def _pad2(x, rows, cols):
    r, c = x.shape
    if r == rows and c == cols:
        return x
    return jnp.pad(x, ((0, rows - r), (0, cols - c)))


def _vmem_budget_bytes(n, in_p, out_p, k_p):
    """Shape-derived scoped-VMEM budget, clamped to this chip's capacity."""
    bf = 2 if MXU_DTYPE == jnp.bfloat16 else 4
    f4 = 4
    need = 0
    need += 2 * n * n * bf                                    # adj + graph_neigh (1-buf)
    need += (in_p * 512 + 512 * out_p + out_p * in_p
             + out_p * out_p + out_p * k_p) * bf              # resident weights
    need += (3 * n + 1 + k_p) * f4                            # lamda1/2, inv_rs, biases
    need += 2 * n * in_p * bf                                 # feats block (2-buf)
    need += 2 * 3 * n * out_p * f4                            # z_scr + g_scr
    need += 3 * n * 512 * f4                                  # u, pu, t live together
    need += 2 * n * out_p * f4                                # v, pv
    need += (n * out_p + n * in_p + 3 * n * RET_LANES
             + 2 * n * k_p + 1) * f4                          # resident outputs
    need = int(need * 1.5) + (4 << 20)                        # regalloc / epilogue slack
    try:
        cap = pltpu.get_tpu_info().vmem_capacity_bytes        # 128MiB v5e/v6e, 64MiB/TC v7x
    except Exception:
        cap = 64 << 20
    return max(16 << 20, min(need, int(cap * 0.9)))


def encoder_forward(params, feat, feat_a, feat_mask, adj, identify_matrix,
                    graph_neigh):
    del identify_matrix  # folded algebraically: a_eff @ X = l1*X + l2*(adj @ X)
    f32 = jnp.float32

    n, in_f = feat.shape
    out_f = params["weight2_2"].shape[1]
    k = params["cluster_w"].shape[0]

    in_p = _round_up(in_f, LANE)
    out_p = _round_up(out_f, LANE)
    k_p = _round_up(k, LANE)

    # ---- host-side layout plumbing: zero-pad feature dims to lane multiples,
    #      cast MXU operands to bf16, pre-transpose, stack the 3 branches. ----
    feats = jnp.stack([feat, feat_a, feat_mask], axis=0)
    feats = jnp.pad(feats, ((0, 0), (0, 0), (0, in_p - in_f))).astype(MXU_DTYPE)
    adj_c = adj.astype(MXU_DTYPE)
    gn_c = graph_neigh.astype(MXU_DTYPE)

    w1 = _pad2(params["weight2_1"], in_p, 512).astype(MXU_DTYPE)
    w2 = _pad2(params["weight2_2"], 512, out_p).astype(MXU_DTYPE)
    wdec = _pad2(params["weight2"], out_p, in_p).astype(MXU_DTYPE)
    disc_wT = _pad2(params["disc_w"].T, out_p, out_p).astype(MXU_DTYPE)
    clus_wT = _pad2(params["cluster_w"].T, out_p, k_p).astype(MXU_DTYPE)
    clus_b = _pad2(params["cluster_b"], 1, k_p).astype(f32)
    disc_b = params["disc_b"].astype(f32)
    lam1 = params["lamda1"].astype(f32)
    lam2 = params["lamda2"].astype(f32)

    # branch-invariant 1/row_sum(graph_neigh): exact f32, zero-row guarded.
    row_sum = jnp.sum(graph_neigh.astype(f32), axis=1, keepdims=True)
    inv_rs = jnp.where(row_sum != 0.0, 1.0 / row_sum, 0.0)

    # -------------------------------------------------------------------------
    # Fused kernel: GCN 2-hop + readout/sigmoid per branch, decoder at b==0,
    # cross-branch epilogue (disc / cluster / DINO loss) at b==2.
    # -------------------------------------------------------------------------
    def fused_kernel(feat_ref, adj_ref, gn_ref, inv_rs_ref, l1_ref, l2_ref,
                     w1_ref, w2_ref, wdec_ref, disc_wT_ref, disc_b_ref,
                     clus_wT_ref, clus_b_ref,
                     hiden_ref, h_ref, ret_ref, c_ref, cmask_ref, loss_ref,
                     z_scr, g_scr):
        b = pl.program_id(0)
        adj_b = adj_ref[...]                       # resident (single-buffered)
        l1v = l1_ref[...]
        l2v = l2_ref[...]
        x = feat_ref[0]                            # (n, in_p) bf16

        # hop 1:  t = relu( l1*(x@W1) + l2*(adj @ (x@W1)) )
        u = jnp.dot(x, w1_ref[...], preferred_element_type=f32)           # (n, 512)
        pu = jnp.dot(adj_b, u.astype(MXU_DTYPE), preferred_element_type=f32)
        t = jnp.maximum(l1v * u + l2v * pu, 0.0)

        # hop 2:  z = l1*(t@W2) + l2*(adj @ (t@W2))
        v = jnp.dot(t.astype(MXU_DTYPE), w2_ref[...], preferred_element_type=f32)
        pv = jnp.dot(adj_b, v.astype(MXU_DTYPE), preferred_element_type=f32)
        z = l1v * v + l2v * pv
        emb = jnp.maximum(z, 0.0)                  # act = relu

        # AvgReadout + L2 normalize + sigmoid (exact divide/sigmoid).
        vsum = jnp.dot(gn_ref[...], emb.astype(MXU_DTYPE), preferred_element_type=f32)
        ge = vsum * inv_rs_ref[...]
        ge = ge * lax.rsqrt(jnp.maximum(jnp.sum(ge * ge, axis=1, keepdims=True),
                                        1e-24))   # F.normalize(p=2, eps=1e-12)
        g = 1.0 / (1.0 + jnp.exp(-ge))

        # stash this branch's z / g in persistent VMEM scratch (static indices).
        for i in range(3):
            @pl.when(b == i)
            def _(i=i):
                z_scr[i] = z
                g_scr[i] = g

        # decoder (branch 0 only): hiden_emb = z ; h = adj @ (z @ W_dec)
        @pl.when(b == 0)
        def _():
            hiden_ref[...] = z
            hz = jnp.dot(z.astype(MXU_DTYPE), wdec_ref[...],
                         preferred_element_type=f32)
            h_ref[...] = jnp.dot(adj_b, hz.astype(MXU_DTYPE),
                                 preferred_element_type=f32)

        # fused cross-branch epilogue on the last branch.
        @pl.when(b == 2)
        def _():
            z0, z2 = z_scr[0], z_scr[2]
            emb0 = jnp.maximum(z0, 0.0)
            emb1 = jnp.maximum(z_scr[1], 0.0)
            emb2 = jnp.maximum(z2, 0.0)
            col2 = lax.broadcasted_iota(jnp.int32, (n, RET_LANES), 1)

            # Bilinear(h, c) with out_features=1: sc[r] = sum_ij h[r,i] W[i,j] c[r,j] + b
            def disc(gv, h_pl, h_mi):
                cw = jnp.dot(gv.astype(MXU_DTYPE), disc_wT_ref[...],
                             preferred_element_type=f32)
                s1 = jnp.sum(h_pl * cw, axis=1, keepdims=True) + disc_b_ref[...]
                s2 = jnp.sum(h_mi * cw, axis=1, keepdims=True) + disc_b_ref[...]
                # lane-dense slab: lane 0 = sc_1, lane 1 = sc_2, rest zeros.
                return jnp.where(col2 == 0, s1, jnp.where(col2 == 1, s2, 0.0))

            ret_ref[0] = disc(g_scr[0], emb0, emb1)    # ret      = disc(g,      emb,      emb_a)
            ret_ref[1] = disc(g_scr[1], emb1, emb0)    # ret_a    = disc(g_a,    emb_a,    emb)
            ret_ref[2] = disc(g_scr[2], emb2, emb0)    # ret_mask = disc(g_mask, emb_mask, emb)

            # cluster projector (bf16 operands, f32 accumulate).
            c_ref[...] = (jnp.dot(z0.astype(MXU_DTYPE), clus_wT_ref[...],
                                  preferred_element_type=f32) + clus_b_ref[...])
            cmask_ref[...] = (jnp.dot(z2.astype(MXU_DTYPE), clus_wT_ref[...],
                                      preferred_element_type=f32) + clus_b_ref[...])

            # DINO-style symmetric cross entropy (teacher_centers buffer == 0).
            colf = lax.broadcasted_iota(jnp.int32, (n, out_p), 1)
            valid = colf < out_f
            NEG = jnp.float32(-1e30)

            def masked_shift(logits, inv_temp):
                s = jnp.where(valid, logits * inv_temp, NEG)
                return s - jnp.max(s, axis=-1, keepdims=True)

            def xent(teacher, student):
                s = masked_shift(student, 1.0 / 0.9)          # student_temp
                log_sp = s - jnp.log(jnp.sum(jnp.exp(s), axis=-1, keepdims=True))
                tsh = masked_shift(teacher, 1.0 / 0.06)       # teacher_temp
                et = jnp.exp(tsh)
                tp = et / jnp.sum(et, axis=-1, keepdims=True)
                per_row = -jnp.sum(jnp.where(valid, tp * log_sp, 0.0),
                                   axis=-1, keepdims=True)
                return jnp.mean(per_row, axis=0, keepdims=True)   # (1,1)

            loss_ref[...] = (xent(z0, z2) + xent(z2, z0)) * 0.5

    # -------------------------------------------------------------------------
    def build(single_buffer):
        def const_spec(shape):
            idx = lambda b, _nd=len(shape): (0,) * _nd
            if single_buffer:
                # revisited blocks: one VMEM buffer instead of the default two.
                return pl.BlockSpec(shape, idx, pipeline_mode=pl.Buffered(1))
            return pl.BlockSpec(shape, idx)

        in_specs = [
            pl.BlockSpec((1, n, in_p), lambda b: (b, 0, 0)),   # feats (streamed)
            const_spec((n, n)),            # adj
            const_spec((n, n)),            # graph_neigh
            const_spec((n, 1)),            # 1/row_sum(graph_neigh)
            const_spec((n, 1)),            # lamda1
            const_spec((n, 1)),            # lamda2
            const_spec((in_p, 512)),       # weight2_1
            const_spec((512, out_p)),      # weight2_2
            const_spec((out_p, in_p)),     # weight2 (decoder)
            const_spec((out_p, out_p)),    # disc W^T
            const_spec((1, 1)),            # disc bias
            const_spec((out_p, k_p)),      # cluster W^T
            const_spec((1, k_p)),          # cluster bias
        ]
        out_specs = [
            pl.BlockSpec((n, out_p), lambda b: (0, 0)),            # hiden_emb
            pl.BlockSpec((n, in_p), lambda b: (0, 0)),             # h
            pl.BlockSpec((3, n, RET_LANES), lambda b: (0, 0, 0)),  # ret slab
            pl.BlockSpec((n, k_p), lambda b: (0, 0)),              # c
            pl.BlockSpec((n, k_p), lambda b: (0, 0)),              # c_mask
            pl.BlockSpec((1, 1), lambda b: (0, 0)),                # loss
        ]
        out_shape = (
            jax.ShapeDtypeStruct((n, out_p), f32),
            jax.ShapeDtypeStruct((n, in_p), f32),
            jax.ShapeDtypeStruct((3, n, RET_LANES), f32),
            jax.ShapeDtypeStruct((n, k_p), f32),
            jax.ShapeDtypeStruct((n, k_p), f32),
            jax.ShapeDtypeStruct((1, 1), f32),
        )
        scratch_shapes = [
            pltpu.VMEM((3, n, out_p), f32),   # z per branch (persistent)
            pltpu.VMEM((3, n, out_p), f32),   # g per branch (persistent)
        ]
        return pl.pallas_call(
            fused_kernel,
            grid=(3,),
            in_specs=in_specs,
            out_specs=out_specs,
            out_shape=out_shape,
            scratch_shapes=scratch_shapes,
            compiler_params=pltpu.CompilerParams(
                # Branch axis must stay sequential: cross-branch scratch, the
                # branch-0 decoder output and the fused b==2 epilogue rely on it.
                dimension_semantics=("arbitrary",),
                vmem_limit_bytes=_vmem_budget_bytes(n, in_p, out_p, k_p)),
        )

    args = (feats, adj_c, gn_c, inv_rs, lam1, lam2, w1, w2, wdec,
            disc_wT, disc_b, clus_wT, clus_b)

    try:
        outs = jax.block_until_ready(build(True)(*args))
    except Exception:
        # pipeline_mode=pl.Buffered(1) unsupported on this jax build; fall back
        # to default double buffering (identical numerics, larger VMEM use).
        outs = jax.block_until_ready(build(False)(*args))

    hiden_p, h_p, ret_slab, c_p, cmask_p, loss = outs
    hiden_emb = hiden_p[:, :out_f]
    h = h_p[:, :in_f]
    ret = ret_slab[0, :, :2]
    ret_a = ret_slab[1, :, :2]
    ret_mask = ret_slab[2, :, :2]
    c = c_p[:, :k]
    c_mask = cmask_p[:, :k]
    loss_mse = loss[0, 0]
    return hiden_emb, h, ret, ret_a, ret_mask, c, c_mask, loss_mse


# -----------------------------------------------------------------------------
# deterministic parameter init (shapes follow Encoder.__init__)
# -----------------------------------------------------------------------------
def make_params(key, nnodes, in_features, out_features, n_clusters):
    def xavier(k, shape, fan_in, fan_out):
        bound = math.sqrt(6.0 / (fan_in + fan_out))
        return jax.random.uniform(k, shape, jnp.float32, -bound, bound)

    ks = jax.random.split(key, 10)
    return {
        "weight2":   xavier(ks[0], (out_features, in_features),
                            out_features, in_features),
        "lamda1":    xavier(ks[1], (nnodes, 1), nnodes, 1),
        "lamda2":    xavier(ks[2], (nnodes, 1), nnodes, 1),
        "weight2_1": xavier(ks[3], (in_features, 512), in_features, 512),
        "weight2_2": xavier(ks[4], (512, out_features), 512, out_features),
        # Discriminator: nn.Bilinear(n_h, n_h, 1), xavier weight, zero bias
        "disc_w":    xavier(ks[5], (out_features, out_features),
                            out_features * out_features, out_features),
        "disc_b":    jnp.zeros((1, 1), jnp.float32),
        # cluster_projector: nn.Linear(out_features, n_clusters)
        "cluster_w": jax.random.uniform(ks[6], (n_clusters, out_features),
                                        jnp.float32,
                                        -1.0 / math.sqrt(out_features),
                                        1.0 / math.sqrt(out_features)),
        "cluster_b": jax.random.uniform(ks[7], (1, n_clusters), jnp.float32,
                                        -1.0 / math.sqrt(out_features),
                                        1.0 / math.sqrt(out_features)),
    }


# -----------------------------------------------------------------------------
if __name__ == "__main__":
    nnodes = 16
    in_features = 32
    out_features = 32
    n_clusters = 8

    key = jax.random.PRNGKey(0)
    kp, kf, kfa, kfm, kadj, kgn = jax.random.split(key, 6)

    params = make_params(kp, nnodes, in_features, out_features, n_clusters)

    feat = jax.random.normal(kf, (nnodes, in_features), jnp.float32)
    feat_a = jax.random.normal(kfa, (nnodes, in_features), jnp.float32)
    feat_mask = jax.random.normal(kfm, (nnodes, in_features), jnp.float32)
    adj = jax.random.uniform(kadj, (nnodes, nnodes), jnp.float32)
    identify_matrix = jnp.eye(nnodes, dtype=jnp.float32)   # unused (folded out)
    graph_neigh = jnp.minimum(
        (jax.random.uniform(kgn, (nnodes, nnodes)) > 0.5).astype(jnp.float32)
        + jnp.eye(nnodes, dtype=jnp.float32), 1.0)

    outs = encoder_forward(params, feat, feat_a, feat_mask, adj,
                           identify_matrix, graph_neigh)
    outs = jax.block_until_ready(outs)

    hiden_emb, h, ret, ret_a, ret_mask, c, c_mask, loss_mse = outs
    assert hiden_emb.shape == (nnodes, out_features)
    assert h.shape == (nnodes, in_features)
    assert ret.shape == (nnodes, 2) and ret_a.shape == (nnodes, 2)
    assert ret_mask.shape == (nnodes, 2)
    assert c.shape == (nnodes, n_clusters) and c_mask.shape == (nnodes, n_clusters)
    assert bool(jnp.isfinite(loss_mse))
    assert bool(jnp.all(jnp.isfinite(hiden_emb)))
    assert bool(jnp.all(jnp.isfinite(h)))
    assert bool(jnp.all(jnp.isfinite(ret)))
    assert bool(jnp.all(jnp.isfinite(c)))

    print("KERNEL_OK")
</pallas_src>

<mosaic_0001>
module attributes {stable_mosaic.version = 11 : i64} {
  func.func @fused_kernel(%arg0: i32, %arg1: memref<1x16x128xbf16, #tpu.memory_space<vmem>>, %arg2: memref<16x16xbf16, #tpu.memory_space<vmem>>, %arg3: memref<16x16xbf16, #tpu.memory_space<vmem>>, %arg4: memref<16x1xf32, #tpu.memory_space<vmem>>, %arg5: memref<16x1xf32, #tpu.memory_space<vmem>>, %arg6: memref<16x1xf32, #tpu.memory_space<vmem>>, %arg7: memref<128x512xbf16, #tpu.memory_space<vmem>>, %arg8: memref<512x128xbf16, #tpu.memory_space<vmem>>, %arg9: memref<128x128xbf16, #tpu.memory_space<vmem>>, %arg10: memref<128x128xbf16, #tpu.memory_space<vmem>>, %arg11: memref<1x1xf32, #tpu.memory_space<vmem>>, %arg12: memref<128x128xbf16, #tpu.memory_space<vmem>>, %arg13: memref<1x128xf32, #tpu.memory_space<vmem>>, %arg14: memref<16x128xf32, #tpu.memory_space<vmem>>, %arg15: memref<16x128xf32, #tpu.memory_space<vmem>>, %arg16: memref<3x16x128xf32, #tpu.memory_space<vmem>>, %arg17: memref<16x128xf32, #tpu.memory_space<vmem>>, %arg18: memref<16x128xf32, #tpu.memory_space<vmem>>, %arg19: memref<1x1xf32, #tpu.memory_space<vmem>>, %arg20: memref<3x16x128xf32, #tpu.memory_space<vmem>>, %arg21: memref<3x16x128xf32, #tpu.memory_space<vmem>>) attributes {dimension_semantics = [#tpu.dimension_semantics<arbitrary>], iteration_bounds = array<i64: 3>, scalar_prefetch = 0 : i64, scratch_operands = 2 : i64, tpu.core_type = #tpu.core_type<tc>, window_params = [{transform_indices = @transform_0, window_bounds = array<i64: 1, 16, 128>}, {pipeline_mode = #tpu.pipeline_mode<synchronous>, transform_indices = @transform_1, window_bounds = array<i64: 16, 16>}, {pipeline_mode = #tpu.pipeline_mode<synchronous>, transform_indices = @transform_2, window_bounds = array<i64: 16, 16>}, {pipeline_mode = #tpu.pipeline_mode<synchronous>, transform_indices = @transform_3, window_bounds = array<i64: 16, 1>}, {pipeline_mode = #tpu.pipeline_mode<synchronous>, transform_indices = @transform_4, window_bounds = array<i64: 16, 1>}, {pipeline_mode = #tpu.pipeline_mode<synchronous>, transform_indices = @transform_5, window_bounds = array<i64: 16, 1>}, {pipeline_mode = #tpu.pipeline_mode<synchronous>, transform_indices = @transform_6, window_bounds = array<i64: 128, 512>}, {pipeline_mode = #tpu.pipeline_mode<synchronous>, transform_indices = @transform_7, window_bounds = array<i64: 512, 128>}, {pipeline_mode = #tpu.pipeline_mode<synchronous>, transform_indices = @transform_8, window_bounds = array<i64: 128, 128>}, {pipeline_mode = #tpu.pipeline_mode<synchronous>, transform_indices = @transform_9, window_bounds = array<i64: 128, 128>}, {pipeline_mode = #tpu.pipeline_mode<synchronous>, transform_indices = @transform_10, window_bounds = array<i64: 1, 1>}, {pipeline_mode = #tpu.pipeline_mode<synchronous>, transform_indices = @transform_11, window_bounds = array<i64: 128, 128>}, {pipeline_mode = #tpu.pipeline_mode<synchronous>, transform_indices = @transform_12, window_bounds = array<i64: 1, 128>}, {pipeline_mode = #tpu.pipeline_mode<synchronous>, transform_indices = @transform_13, window_bounds = array<i64: 16, 128>}, {pipeline_mode = #tpu.pipeline_mode<synchronous>, transform_indices = @transform_14, window_bounds = array<i64: 16, 128>}, {pipeline_mode = #tpu.pipeline_mode<synchronous>, transform_indices = @transform_15, window_bounds = array<i64: 3, 16, 128>}, {pipeline_mode = #tpu.pipeline_mode<synchronous>, transform_indices = @transform_16, window_bounds = array<i64: 16, 128>}, {pipeline_mode = #tpu.pipeline_mode<synchronous>, transform_indices = @transform_17, window_bounds = array<i64: 16, 128>}, {pipeline_mode = #tpu.pipeline_mode<synchronous>, transform_indices = @transform_18, window_bounds = array<i64: 1, 1>}]} {
    %c0 = arith.constant 0 : index
    %c0_0 = arith.constant 0 : index
    %0 = vector.load %arg2[%c0, %c0_0] : memref<16x16xbf16, #tpu.memory_space<vmem>>, vector<16x16xbf16>
    %c0_1 = arith.constant 0 : index
    %c0_2 = arith.constant 0 : index
    %1 = vector.load %arg5[%c0_1, %c0_2] : memref<16x1xf32, #tpu.memory_space<vmem>>, vector<16x1xf32>
    %c0_3 = arith.constant 0 : index
    %c0_4 = arith.constant 0 : index
    %2 = vector.load %arg6[%c0_3, %c0_4] : memref<16x1xf32, #tpu.memory_space<vmem>>, vector<16x1xf32>
    %c0_5 = arith.constant 0 : index
    %c0_6 = arith.constant 0 : index
    %c0_7 = arith.constant 0 : index
    %3 = vector.load %arg1[%c0_5, %c0_6, %c0_7] : memref<1x16x128xbf16, #tpu.memory_space<vmem>>, vector<1x16x128xbf16>
    %4 = vector.shape_cast %3 : vector<1x16x128xbf16> to vector<16x128xbf16>
    %c0_8 = arith.constant 0 : index
    %c0_9 = arith.constant 0 : index
    %5 = vector.load %arg7[%c0_8, %c0_9] : memref<128x512xbf16, #tpu.memory_space<vmem>>, vector<128x512xbf16>
    %cst = arith.constant dense<0.000000e+00> : vector<16x512xf32>
    %6 = tpu.matmul %4, %5, %cst {dimension_numbers = #tpu.dot_dimension_numbers<[1], [0], [0], [1], [0, 0, 1, 1], [], []>} : vector<16x128xbf16>, vector<128x512xbf16>, vector<16x512xf32> -> vector<16x512xf32>
    %7 = arith.truncf %6 : vector<16x512xf32> to vector<16x512xbf16>
    %cst_10 = arith.constant dense<0.000000e+00> : vector<16x512xf32>
    %8 = tpu.matmul %0, %7, %cst_10 {dimension_numbers = #tpu.dot_dimension_numbers<[1], [0], [0], [1], [0, 0, 1, 1], [], []>} : vector<16x16xbf16>, vector<16x512xbf16>, vector<16x512xf32> -> vector<16x512xf32>
    %9 = vector.broadcast %1 : vector<16x1xf32> to vector<16x512xf32>
    %10 = arith.mulf %9, %6 : vector<16x512xf32>
    %11 = vector.broadcast %2 : vector<16x1xf32> to vector<16x512xf32>
    %12 = arith.mulf %11, %8 : vector<16x512xf32>
    %13 = arith.addf %10, %12 : vector<16x512xf32>
    %cst_11 = arith.constant 0.000000e+00 : f32
    %14 = vector.broadcast %cst_11 : f32 to vector<16x512xf32>
    %15 = arith.maximumf %13, %14 : vector<16x512xf32>
    %16 = arith.truncf %15 : vector<16x512xf32> to vector<16x512xbf16>
    %c0_12 = arith.constant 0 : index
    %c0_13 = arith.constant 0 : index
    %17 = vector.load %arg8[%c0_12, %c0_13] : memref<512x128xbf16, #tpu.memory_space<vmem>>, vector<512x128xbf16>
    %cst_14 = arith.constant dense<0.000000e+00> : vector<16x128xf32>
    %18 = tpu.matmul %16, %17, %cst_14 {dimension_numbers = #tpu.dot_dimension_numbers<[1], [0], [0], [1], [0, 0, 1, 1], [], []>} : vector<16x512xbf16>, vector<512x128xbf16>, vector<16x128xf32> -> vector<16x128xf32>
    %19 = arith.truncf %18 : vector<16x128xf32> to vector<16x128xbf16>
    %cst_15 = arith.constant dense<0.000000e+00> : vector<16x128xf32>
    %20 = tpu.matmul %0, %19, %cst_15 {dimension_numbers = #tpu.dot_dimension_numbers<[1], [0], [0], [1], [0, 0, 1, 1], [], []>} : vector<16x16xbf16>, vector<16x128xbf16>, vector<16x128xf32> -> vector<16x128xf32>
    %21 = vector.broadcast %1 : vector<16x1xf32> to vector<16x128xf32>
    %22 = arith.mulf %21, %18 : vector<16x128xf32>
    %23 = vector.broadcast %2 : vector<16x1xf32> to vector<16x128xf32>
    %24 = arith.mulf %23, %20 : vector<16x128xf32>
    %25 = arith.addf %22, %24 : vector<16x128xf32>
    %cst_16 = arith.constant 0.000000e+00 : f32
    %26 = vector.broadcast %cst_16 : f32 to vector<16x128xf32>
    %27 = arith.maximumf %25, %26 : vector<16x128xf32>
    %c0_17 = arith.constant 0 : index
    %c0_18 = arith.constant 0 : index
    %28 = vector.load %arg3[%c0_17, %c0_18] : memref<16x16xbf16, #tpu.memory_space<vmem>>, vector<16x16xbf16>
    %29 = arith.truncf %27 : vector<16x128xf32> to vector<16x128xbf16>
    %cst_19 = arith.constant dense<0.000000e+00> : vector<16x128xf32>
    %30 = tpu.matmul %28, %29, %cst_19 {dimension_numbers = #tpu.dot_dimension_numbers<[1], [0], [0], [1], [0, 0, 1, 1], [], []>} : vector<16x16xbf16>, vector<16x128xbf16>, vector<16x128xf32> -> vector<16x128xf32>
    %c0_20 = arith.constant 0 : index
    %c0_21 = arith.constant 0 : index
    %31 = vector.load %arg4[%c0_20, %c0_21] : memref<16x1xf32, #tpu.memory_space<vmem>>, vector<16x1xf32>
    %32 = vector.broadcast %31 : vector<16x1xf32> to vector<16x128xf32>
    %33 = arith.mulf %30, %32 : vector<16x128xf32>
    %34 = arith.mulf %33, %33 : vector<16x128xf32>
    %cst_22 = arith.constant dense<0.000000e+00> : vector<16xf32>
    %35 = vector.multi_reduction <add>, %34, %cst_22 [1] : vector<16x128xf32> to vector<16xf32>
    %36 = vector.shape_cast %35 : vector<16xf32> to vector<16x1xf32>
    %cst_23 = arith.constant 1.000000e-24 : f32
    %37 = vector.broadcast %cst_23 : f32 to vector<16x1xf32>
    %38 = arith.maximumf %36, %37 : vector<16x1xf32>
    %39 = math.rsqrt %38 : vector<16x1xf32>
    %40 = vector.broadcast %39 : vector<16x1xf32> to vector<16x128xf32>
    %41 = arith.mulf %33, %40 : vector<16x128xf32>
    %cst_24 = arith.constant 0.000000e+00 : f32
    %42 = vector.broadcast %cst_24 : f32 to vector<16x128xf32>
    %43 = arith.subf %42, %41 : vector<16x128xf32>
    %44 = math.exp %43 : vector<16x128xf32>
    %cst_25 = arith.constant 1.000000e+00 : f32
    %45 = vector.broadcast %cst_25 : f32 to vector<16x128xf32>
    %46 = arith.addf %45, %44 : vector<16x128xf32>
    %cst_26 = arith.constant 1.000000e+00 : f32
    %47 = vector.broadcast %cst_26 : f32 to vector<16x128xf32>
    %48 = arith.divf %47, %46 : vector<16x128xf32>
    %c0_i32 = arith.constant 0 : i32
    %49 = arith.cmpi eq, %arg0, %c0_i32 : i32
    %50 = arith.extui %49 : i1 to i32
    %c0_i32_27 = arith.constant 0 : i32
    %51 = arith.cmpi ne, %50, %c0_i32_27 : i32
    scf.if %51 {
      %c0_34 = arith.constant 0 : index
      %c0_35 = arith.constant 0 : index
      %c0_36 = arith.constant 0 : index
      %64 = vector.load %arg20[%c0_34, %c0_35, %c0_36] : memref<3x16x128xf32, #tpu.memory_space<vmem>>, vector<1x16x128xf32>
      %65 = vector.shape_cast %64 : vector<1x16x128xf32> to vector<16x128xf32>
      %66 = vector.shape_cast %25 : vector<16x128xf32> to vector<1x16x128xf32>
      tpu.vector_store %arg20[%c0_34, %c0_35, %c0_36], %66 {strides = array<i32>} : memref<3x16x128xf32, #tpu.memory_space<vmem>>, vector<1x16x128xf32>,
      %c0_37 = arith.constant 0 : index
      %c0_38 = arith.constant 0 : index
      %c0_39 = arith.constant 0 : index
      %67 = vector.load %arg21[%c0_37, %c0_38, %c0_39] : memref<3x16x128xf32, #tpu.memory_space<vmem>>, vector<1x16x128xf32>
      %68 = vector.shape_cast %67 : vector<1x16x128xf32> to vector<16x128xf32>
      %69 = vector.shape_cast %48 : vector<16x128xf32> to vector<1x16x128xf32>
      tpu.vector_store %arg21[%c0_37, %c0_38, %c0_39], %69 {strides = array<i32>} : memref<3x16x128xf32, #tpu.memory_space<vmem>>, vector<1x16x128xf32>,
    } else {
    }
    %c1_i32 = arith.constant 1 : i32
    %52 = arith.cmpi eq, %arg0, %c1_i32 : i32
    %53 = arith.extui %52 : i1 to i32
    %c0_i32_28 = arith.constant 0 : i32
    %54 = arith.cmpi ne, %53, %c0_i32_28 : i32
    scf.if %54 {
      %c1 = arith.constant 1 : index
      %c0_34 = arith.constant 0 : index
      %c0_35 = arith.constant 0 : index
      %64 = vector.load %arg20[%c1, %c0_34, %c0_35] : memref<3x16x128xf32, #tpu.memory_space<vmem>>, vector<1x16x128xf32>
      %65 = vector.shape_cast %64 : vector<1x16x128xf32> to vector<16x128xf32>
      %66 = vector.shape_cast %25 : vector<16x128xf32> to vector<1x16x128xf32>
      tpu.vector_store %arg20[%c1, %c0_34, %c0_35], %66 {strides = array<i32>} : memref<3x16x128xf32, #tpu.memory_space<vmem>>, vector<1x16x128xf32>,
      %c1_36 = arith.constant 1 : index
      %c0_37 = arith.constant 0 : index
      %c0_38 = arith.constant 0 : index
      %67 = vector.load %arg21[%c1_36, %c0_37, %c0_38] : memref<3x16x128xf32, #tpu.memory_space<vmem>>, vector<1x16x128xf32>
      %68 = vector.shape_cast %67 : vector<1x16x128xf32> to vector<16x128xf32>
      %69 = vector.shape_cast %48 : vector<16x128xf32> to vector<1x16x128xf32>
      tpu.vector_store %arg21[%c1_36, %c0_37, %c0_38], %69 {strides = array<i32>} : memref<3x16x128xf32, #tpu.memory_space<vmem>>, vector<1x16x128xf32>,
    } else {
    }
    %c2_i32 = arith.constant 2 : i32
    %55 = arith.cmpi eq, %arg0, %c2_i32 : i32
    %56 = arith.extui %55 : i1 to i32
    %c0_i32_29 = arith.constant 0 : i32
    %57 = arith.cmpi ne, %56, %c0_i32_29 : i32
    scf.if %57 {
      %c2 = arith.constant 2 : index
      %c0_34 = arith.constant 0 : index
      %c0_35 = arith.constant 0 : index
      %64 = vector.load %arg20[%c2, %c0_34, %c0_35] : memref<3x16x128xf32, #tpu.memory_space<vmem>>, vector<1x16x128xf32>
      %65 = vector.shape_cast %64 : vector<1x16x128xf32> to vector<16x128xf32>
      %66 = vector.shape_cast %25 : vector<16x128xf32> to vector<1x16x128xf32>
      tpu.vector_store %arg20[%c2, %c0_34, %c0_35], %66 {strides = array<i32>} : memref<3x16x128xf32, #tpu.memory_space<vmem>>, vector<1x16x128xf32>,
      %c2_36 = arith.constant 2 : index
      %c0_37 = arith.constant 0 : index
      %c0_38 = arith.constant 0 : index
      %67 = vector.load %arg21[%c2_36, %c0_37, %c0_38] : memref<3x16x128xf32, #tpu.memory_space<vmem>>, vector<1x16x128xf32>
      %68 = vector.shape_cast %67 : vector<1x16x128xf32> to vector<16x128xf32>
      %69 = vector.shape_cast %48 : vector<16x128xf32> to vector<1x16x128xf32>
      tpu.vector_store %arg21[%c2_36, %c0_37, %c0_38], %69 {strides = array<i32>} : memref<3x16x128xf32, #tpu.memory_space<vmem>>, vector<1x16x128xf32>,
    } else {
    }
    %c0_i32_30 = arith.constant 0 : i32
    %58 = arith.cmpi eq, %arg0, %c0_i32_30 : i32
    %59 = arith.extui %58 : i1 to i32
    %c0_i32_31 = arith.constant 0 : i32
    %60 = arith.cmpi ne, %59, %c0_i32_31 : i32
    scf.if %60 {
      %c0_34 = arith.constant 0 : index
      %c0_35 = arith.constant 0 : index
      %64 = vector.load %arg14[%c0_34, %c0_35] : memref<16x128xf32, #tpu.memory_space<vmem>>, vector<16x128xf32>
      tpu.vector_store %arg14[%c0_34, %c0_35], %25 {strides = array<i32>} : memref<16x128xf32, #tpu.memory_space<vmem>>, vector<16x128xf32>,
      %65 = arith.truncf %25 : vector<16x128xf32> to vector<16x128xbf16>
      %c0_36 = arith.constant 0 : index
      %c0_37 = arith.constant 0 : index
      %66 = vector.load %arg9[%c0_36, %c0_37] : memref<128x128xbf16, #tpu.memory_space<vmem>>, vector<128x128xbf16>
      %cst_38 = arith.constant dense<0.000000e+00> : vector<16x128xf32>
      %67 = tpu.matmul %65, %66, %cst_38 {dimension_numbers = #tpu.dot_dimension_numbers<[1], [0], [0], [1], [0, 0, 1, 1], [], []>} : vector<16x128xbf16>, vector<128x128xbf16>, vector<16x128xf32> -> vector<16x128xf32>
      %68 = arith.truncf %67 : vector<16x128xf32> to vector<16x128xbf16>
      %cst_39 = arith.constant dense<0.000000e+00> : vector<16x128xf32>
      %69 = tpu.matmul %0, %68, %cst_39 {dimension_numbers = #tpu.dot_dimension_numbers<[1], [0], [0], [1], [0, 0, 1, 1], [], []>} : vector<16x16xbf16>, vector<16x128xbf16>, vector<16x128xf32> -> vector<16x128xf32>
      %c0_40 = arith.constant 0 : index
      %c0_41 = arith.constant 0 : index
      %70 = vector.load %arg15[%c0_40, %c0_41] : memref<16x128xf32, #tpu.memory_space<vmem>>, vector<16x128xf32>
      tpu.vector_store %arg15[%c0_40, %c0_41], %69 {strides = array<i32>} : memref<16x128xf32, #tpu.memory_space<vmem>>, vector<16x128xf32>,
    } else {
    }
    %c2_i32_32 = arith.constant 2 : i32
    %61 = arith.cmpi eq, %arg0, %c2_i32_32 : i32
    %62 = arith.extui %61 : i1 to i32
    %c0_i32_33 = arith.constant 0 : i32
    %63 = arith.cmpi ne, %62, %c0_i32_33 : i32
    scf.if %63 {
      %c0_34 = arith.constant 0 : index
      %c0_35 = arith.constant 0 : index
      %c0_36 = arith.constant 0 : index
      %64 = vector.load %arg20[%c0_34, %c0_35, %c0_36] : memref<3x16x128xf32, #tpu.memory_space<vmem>>, vector<1x16x128xf32>
      %65 = vector.shape_cast %64 : vector<1x16x128xf32> to vector<16x128xf32>
      %c2 = arith.constant 2 : index
      %c0_37 = arith.constant 0 : index
      %c0_38 = arith.constant 0 : index
      %66 = vector.load %arg20[%c2, %c0_37, %c0_38] : memref<3x16x128xf32, #tpu.memory_space<vmem>>, vector<1x16x128xf32>
      %67 = vector.shape_cast %66 : vector<1x16x128xf32> to vector<16x128xf32>
      %cst_39 = arith.constant 0.000000e+00 : f32
      %68 = vector.broadcast %cst_39 : f32 to vector<16x128xf32>
      %69 = arith.maximumf %65, %68 : vector<16x128xf32>
      %c1 = arith.constant 1 : index
      %c0_40 = arith.constant 0 : index
      %c0_41 = arith.constant 0 : index
      %70 = vector.load %arg20[%c1, %c0_40, %c0_41] : memref<3x16x128xf32, #tpu.memory_space<vmem>>, vector<1x16x128xf32>
      %71 = vector.shape_cast %70 : vector<1x16x128xf32> to vector<16x128xf32>
      %cst_42 = arith.constant 0.000000e+00 : f32
      %72 = vector.broadcast %cst_42 : f32 to vector<16x128xf32>
      %73 = arith.maximumf %71, %72 : vector<16x128xf32>
      %cst_43 = arith.constant 0.000000e+00 : f32
      %74 = vector.broadcast %cst_43 : f32 to vector<16x128xf32>
      %75 = arith.maximumf %67, %74 : vector<16x128xf32>
      %76 = tpu.iota {dimensions = array<i32: 1>} : vector<16x128xi32>
      %c0_44 = arith.constant 0 : index
      %c0_45 = arith.constant 0 : index
      %c0_46 = arith.constant 0 : index
      %77 = vector.load %arg21[%c0_44, %c0_45, %c0_46] : memref<3x16x128xf32, #tpu.memory_space<vmem>>, vector<1x16x128xf32>
      %78 = vector.shape_cast %77 : vector<1x16x128xf32> to vector<16x128xf32>
      %79 = arith.truncf %78 : vector<16x128xf32> to vector<16x128xbf16>
      %c0_47 = arith.constant 0 : index
      %c0_48 = arith.constant 0 : index
      %80 = vector.load %arg10[%c0_47, %c0_48] : memref<128x128xbf16, #tpu.memory_space<vmem>>, vector<128x128xbf16>
      %cst_49 = arith.constant dense<0.000000e+00> : vector<16x128xf32>
      %81 = tpu.matmul %79, %80, %cst_49 {dimension_numbers = #tpu.dot_dimension_numbers<[1], [0], [0], [1], [0, 0, 1, 1], [], []>} : vector<16x128xbf16>, vector<128x128xbf16>, vector<16x128xf32> -> vector<16x128xf32>
      %82 = arith.mulf %69, %81 : vector<16x128xf32>
      %cst_50 = arith.constant dense<0.000000e+00> : vector<16xf32>
      %83 = vector.multi_reduction <add>, %82, %cst_50 [1] : vector<16x128xf32> to vector<16xf32>
      %84 = vector.shape_cast %83 : vector<16xf32> to vector<16x1xf32>
      %c0_51 = arith.constant 0 : index
      %c0_52 = arith.constant 0 : index
      %85 = vector.load %arg11[%c0_51, %c0_52] : memref<1x1xf32, #tpu.memory_space<vmem>>, vector<1x1xf32>
      %86 = vector.broadcast %85 : vector<1x1xf32> to vector<16x1xf32>
      %87 = arith.addf %84, %86 : vector<16x1xf32>
      %88 = arith.mulf %73, %81 : vector<16x128xf32>
      %cst_53 = arith.constant dense<0.000000e+00> : vector<16xf32>
      %89 = vector.multi_reduction <add>, %88, %cst_53 [1] : vector<16x128xf32> to vector<16xf32>
      %90 = vector.shape_cast %89 : vector<16xf32> to vector<16x1xf32>
      %c0_54 = arith.constant 0 : index
      %c0_55 = arith.constant 0 : index
      %91 = vector.load %arg11[%c0_54, %c0_55] : memref<1x1xf32, #tpu.memory_space<vmem>>, vector<1x1xf32>
      %92 = vector.broadcast %91 : vector<1x1xf32> to vector<16x1xf32>
      %93 = arith.addf %90, %92 : vector<16x1xf32>
      %c0_i32_56 = arith.constant 0 : i32
      %94 = vector.broadcast %c0_i32_56 : i32 to vector<16x128xi32>
      %95 = arith.cmpi eq, %76, %94 : vector<16x128xi32>
      %c1_i32_57 = arith.constant 1 : i32
      %96 = vector.broadcast %c1_i32_57 : i32 to vector<16x128xi32>
      %97 = arith.cmpi eq, %76, %96 : vector<16x128xi32>
      %cst_58 = arith.constant 0.000000e+00 : f32
      %98 = vector.shape_cast %93 : vector<16x1xf32> to vector<16x1xf32>
      %99 = vector.broadcast %98 : vector<16x1xf32> to vector<16x128xf32>
      %100 = vector.broadcast %cst_58 : f32 to vector<16x128xf32>
      %101 = arith.select %97, %99, %100 : vector<16x128xi1>, vector<16x128xf32>
      %102 = vector.shape_cast %87 : vector<16x1xf32> to vector<16x1xf32>
      %103 = vector.broadcast %102 : vector<16x1xf32> to vector<16x128xf32>
      %104 = arith.select %95, %103, %101 : vector<16x128xi1>, vector<16x128xf32>
      %c0_59 = arith.constant 0 : index
      %c0_60 = arith.constant 0 : index
      %c0_61 = arith.constant 0 : index
      %105 = vector.load %arg16[%c0_59, %c0_60, %c0_61] : memref<3x16x128xf32, #tpu.memory_space<vmem>>, vector<1x16x128xf32>
      %106 = vector.shape_cast %105 : vector<1x16x128xf32> to vector<16x128xf32>
      %107 = vector.shape_cast %104 : vector<16x128xf32> to vector<1x16x128xf32>
      tpu.vector_store %arg16[%c0_59, %c0_60, %c0_61], %107 {strides = array<i32>} : memref<3x16x128xf32, #tpu.memory_space<vmem>>, vector<1x16x128xf32>,
      %c1_62 = arith.constant 1 : index
      %c0_63 = arith.constant 0 : index
      %c0_64 = arith.constant 0 : index
      %108 = vector.load %arg21[%c1_62, %c0_63, %c0_64] : memref<3x16x128xf32, #tpu.memory_space<vmem>>, vector<1x16x128xf32>
      %109 = vector.shape_cast %108 : vector<1x16x128xf32> to vector<16x128xf32>
      %110 = arith.truncf %109 : vector<16x128xf32> to vector<16x128xbf16>
      %c0_65 = arith.constant 0 : index
      %c0_66 = arith.constant 0 : index
      %111 = vector.load %arg10[%c0_65, %c0_66] : memref<128x128xbf16, #tpu.memory_space<vmem>>, vector<128x128xbf16>
      %cst_67 = arith.constant dense<0.000000e+00> : vector<16x128xf32>
      %112 = tpu.matmul %110, %111, %cst_67 {dimension_numbers = #tpu.dot_dimension_numbers<[1], [0], [0], [1], [0, 0, 1, 1], [], []>} : vector<16x128xbf16>, vector<128x128xbf16>, vector<16x128xf32> -> vector<16x128xf32>
      %113 = arith.mulf %73, %112 : vector<16x128xf32>
      %cst_68 = arith.constant dense<0.000000e+00> : vector<16xf32>
      %114 = vector.multi_reduction <add>, %113, %cst_68 [1] : vector<16x128xf32> to vector<16xf32>
      %115 = vector.shape_cast %114 : vector<16xf32> to vector<16x1xf32>
      %c0_69 = arith.constant 0 : index
      %c0_70 = arith.constant 0 : index
      %116 = vector.load %arg11[%c0_69, %c0_70] : memref<1x1xf32, #tpu.memory_space<vmem>>, vector<1x1xf32>
      %117 = vector.broadcast %116 : vector<1x1xf32> to vector<16x1xf32>
      %118 = arith.addf %115, %117 : vector<16x1xf32>
      %119 = arith.mulf %69, %112 : vector<16x128xf32>
      %cst_71 = arith.constant dense<0.000000e+00> : vector<16xf32>
      %120 = vector.multi_reduction <add>, %119, %cst_71 [1] : vector<16x128xf32> to vector<16xf32>
      %121 = vector.shape_cast %120 : vector<16xf32> to vector<16x1xf32>
      %c0_72 = arith.constant 0 : index
      %c0_73 = arith.constant 0 : index
      %122 = vector.load %arg11[%c0_72, %c0_73] : memref<1x1xf32, #tpu.memory_space<vmem>>, vector<1x1xf32>
      %123 = vector.broadcast %122 : vector<1x1xf32> to vector<16x1xf32>
      %124 = arith.addf %121, %123 : vector<16x1xf32>
      %c0_i32_74 = arith.constant 0 : i32
      %125 = vector.broadcast %c0_i32_74 : i32 to vector<16x128xi32>
      %126 = arith.cmpi eq, %76, %125 : vector<16x128xi32>
      %c1_i32_75 = arith.constant 1 : i32
      %127 = vector.broadcast %c1_i32_75 : i32 to vector<16x128xi32>
      %128 = arith.cmpi eq, %76, %127 : vector<16x128xi32>
      %cst_76 = arith.constant 0.000000e+00 : f32
      %129 = vector.shape_cast %124 : vector<16x1xf32> to vector<16x1xf32>
      %130 = vector.broadcast %129 : vector<16x1xf32> to vector<16x128xf32>
      %131 = vector.broadcast %cst_76 : f32 to vector<16x128xf32>
      %132 = arith.select %128, %130, %131 : vector<16x128xi1>, vector<16x128xf32>
      %133 = vector.shape_cast %118 : vector<16x1xf32> to vector<16x1xf32>
      %134 = vector.broadcast %133 : vector<16x1xf32> to vector<16x128xf32>
      %135 = arith.select %126, %134, %132 : vector<16x128xi1>, vector<16x128xf32>
      %c1_77 = arith.constant 1 : index
      %c0_78 = arith.constant 0 : index
      %c0_79 = arith.constant 0 : index
      %136 = vector.load %arg16[%c1_77, %c0_78, %c0_79] : memref<3x16x128xf32, #tpu.memory_space<vmem>>, vector<1x16x128xf32>
      %137 = vector.shape_cast %136 : vector<1x16x128xf32> to vector<16x128xf32>
      %138 = vector.shape_cast %135 : vector<16x128xf32> to vector<1x16x128xf32>
      tpu.vector_store %arg16[%c1_77, %c0_78, %c0_79], %138 {strides = array<i32>} : memref<3x16x128xf32, #tpu.memory_space<vmem>>, vector<1x16x128xf32>,
      %c2_80 = arith.constant 2 : index
      %c0_81 = arith.constant 0 : index
      %c0_82 = arith.constant 0 : index
      %139 = vector.load %arg21[%c2_80, %c0_81, %c0_82] : memref<3x16x128xf32, #tpu.memory_space<vmem>>, vector<1x16x128xf32>
      %140 = vector.shape_cast %139 : vector<1x16x128xf32> to vector<16x128xf32>
      %141 = arith.truncf %140 : vector<16x128xf32> to vector<16x128xbf16>
      %c0_83 = arith.constant 0 : index
      %c0_84 = arith.constant 0 : index
      %142 = vector.load %arg10[%c0_83, %c0_84] : memref<128x128xbf16, #tpu.memory_space<vmem>>, vector<128x128xbf16>
      %cst_85 = arith.constant dense<0.000000e+00> : vector<16x128xf32>
      %143 = tpu.matmul %141, %142, %cst_85 {dimension_numbers = #tpu.dot_dimension_numbers<[1], [0], [0], [1], [0, 0, 1, 1], [], []>} : vector<16x128xbf16>, vector<128x128xbf16>, vector<16x128xf32> -> vector<16x128xf32>
      %144 = arith.mulf %75, %143 : vector<16x128xf32>
      %cst_86 = arith.constant dense<0.000000e+00> : vector<16xf32>
      %145 = vector.multi_reduction <add>, %144, %cst_86 [1] : vector<16x128xf32> to vector<16xf32>
      %146 = vector.shape_cast %145 : vector<16xf32> to vector<16x1xf32>
      %c0_87 = arith.constant 0 : index
      %c0_88 = arith.constant 0 : index
      %147 = vector.load %arg11[%c0_87, %c0_88] : memref<1x1xf32, #tpu.memory_space<vmem>>, vector<1x1xf32>
      %148 = vector.broadcast %147 : vector<1x1xf32> to vector<16x1xf32>
      %149 = arith.addf %146, %148 : vector<16x1xf32>
      %150 = arith.mulf %69, %143 : vector<16x128xf32>
      %cst_89 = arith.constant dense<0.000000e+00> : vector<16xf32>
      %151 = vector.multi_reduction <add>, %150, %cst_89 [1] : vector<16x128xf32> to vector<16xf32>
      %152 = vector.shape_cast %151 : vector<16xf32> to vector<16x1xf32>
      %c0_90 = arith.constant 0 : index
      %c0_91 = arith.constant 0 : index
      %153 = vector.load %arg11[%c0_90, %c0_91] : memref<1x1xf32, #tpu.memory_space<vmem>>, vector<1x1xf32>
      %154 = vector.broadcast %153 : vector<1x1xf32> to vector<16x1xf32>
      %155 = arith.addf %152, %154 : vector<16x1xf32>
      %c0_i32_92 = arith.constant 0 : i32
      %156 = vector.broadcast %c0_i32_92 : i32 to vector<16x128xi32>
      %157 = arith.cmpi eq, %76, %156 : vector<16x128xi32>
      %c1_i32_93 = arith.constant 1 : i32
      %158 = vector.broadcast %c1_i32_93 : i32 to vector<16x128xi32>
      %159 = arith.cmpi eq, %76, %158 : vector<16x128xi32>
      %cst_94 = arith.constant 0.000000e+00 : f32
      %160 = vector.shape_cast %155 : vector<16x1xf32> to vector<16x1xf32>
      %161 = vector.broadcast %160 : vector<16x1xf32> to vector<16x128xf32>
      %162 = vector.broadcast %cst_94 : f32 to vector<16x128xf32>
      %163 = arith.select %159, %161, %162 : vector<16x128xi1>, vector<16x128xf32>
      %164 = vector.shape_cast %149 : vector<16x1xf32> to vector<16x1xf32>
      %165 = vector.broadcast %164 : vector<16x1xf32> to vector<16x128xf32>
      %166 = arith.select %157, %165, %163 : vector<16x128xi1>, vector<16x128xf32>
      %c2_95 = arith.constant 2 : index
      %c0_96 = arith.constant 0 : index
      %c0_97 = arith.constant 0 : index
      %167 = vector.load %arg16[%c2_95, %c0_96, %c0_97] : memref<3x16x128xf32, #tpu.memory_space<vmem>>, vector<1x16x128xf32>
      %168 = vector.shape_cast %167 : vector<1x16x128xf32> to vector<16x128xf32>
      %169 = vector.shape_cast %166 : vector<16x128xf32> to vector<1x16x128xf32>
      tpu.vector_store %arg16[%c2_95, %c0_96, %c0_97], %169 {strides = array<i32>} : memref<3x16x128xf32, #tpu.memory_space<vmem>>, vector<1x16x128xf32>,
      %170 = arith.truncf %65 : vector<16x128xf32> to vector<16x128xbf16>
      %c0_98 = arith.constant 0 : index
      %c0_99 = arith.constant 0 : index
      %171 = vector.load %arg12[%c0_98, %c0_99] : memref<128x128xbf16, #tpu.memory_space<vmem>>, vector<128x128xbf16>
      %cst_100 = arith.constant dense<0.000000e+00> : vector<16x128xf32>
      %172 = tpu.matmul %170, %171, %cst_100 {dimension_numbers = #tpu.dot_dimension_numbers<[1], [0], [0], [1], [0, 0, 1, 1], [], []>} : vector<16x128xbf16>, vector<128x128xbf16>, vector<16x128xf32> -> vector<16x128xf32>
      %c0_101 = arith.constant 0 : index
      %c0_102 = arith.constant 0 : index
      %173 = vector.load %arg13[%c0_101, %c0_102] : memref<1x128xf32, #tpu.memory_space<vmem>>, vector<1x128xf32>
      %174 = vector.broadcast %173 : vector<1x128xf32> to vector<16x128xf32>
      %175 = arith.addf %172, %174 : vector<16x128xf32>
      %c0_103 = arith.constant 0 : index
      %c0_104 = arith.constant 0 : index
      %176 = vector.load %arg17[%c0_103, %c0_104] : memref<16x128xf32, #tpu.memory_space<vmem>>, vector<16x128xf32>
      tpu.vector_store %arg17[%c0_103, %c0_104], %175 {strides = array<i32>} : memref<16x128xf32, #tpu.memory_space<vmem>>, vector<16x128xf32>,
      %177 = arith.truncf %67 : vector<16x128xf32> to vector<16x128xbf16>
      %c0_105 = arith.constant 0 : index
      %c0_106 = arith.constant 0 : index
      %178 = vector.load %arg12[%c0_105, %c0_106] : memref<128x128xbf16, #tpu.memory_space<vmem>>, vector<128x128xbf16>
      %cst_107 = arith.constant dense<0.000000e+00> : vector<16x128xf32>
      %179 = tpu.matmul %177, %178, %cst_107 {dimension_numbers = #tpu.dot_dimension_numbers<[1], [0], [0], [1], [0, 0, 1, 1], [], []>} : vector<16x128xbf16>, vector<128x128xbf16>, vector<16x128xf32> -> vector<16x128xf32>
      %c0_108 = arith.constant 0 : index
      %c0_109 = arith.constant 0 : index
      %180 = vector.load %arg13[%c0_108, %c0_109] : memref<1x128xf32, #tpu.memory_space<vmem>>, vector<1x128xf32>
      %181 = vector.broadcast %180 : vector<1x128xf32> to vector<16x128xf32>
      %182 = arith.addf %179, %181 : vector<16x128xf32>
      %c0_110 = arith.constant 0 : index
      %c0_111 = arith.constant 0 : index
      %183 = vector.load %arg18[%c0_110, %c0_111] : memref<16x128xf32, #tpu.memory_space<vmem>>, vector<16x128xf32>
      tpu.vector_store %arg18[%c0_110, %c0_111], %182 {strides = array<i32>} : memref<16x128xf32, #tpu.memory_space<vmem>>, vector<16x128xf32>,
      %184 = tpu.iota {dimensions = array<i32: 1>} : vector<16x128xi32>
      %c32_i32 = arith.constant 32 : i32
      %185 = vector.broadcast %c32_i32 : i32 to vector<16x128xi32>
      %186 = arith.cmpi slt, %184, %185 : vector<16x128xi32>
      %cst_112 = arith.constant 1.11111116 : f32
      %187 = vector.broadcast %cst_112 : f32 to vector<16x128xf32>
      %188 = arith.mulf %67, %187 : vector<16x128xf32>
      %cst_113 = arith.constant -1.000000e+30 : f32
      %189 = vector.broadcast %cst_113 : f32 to vector<16x128xf32>
      %190 = arith.select %186, %188, %189 : vector<16x128xi1>, vector<16x128xf32>
      %cst_114 = arith.constant dense<0xFF800000> : vector<16xf32>
      %191 = vector.multi_reduction <maximumf>, %190, %cst_114 [1] : vector<16x128xf32> to vector<16xf32>
      %192 = vector.shape_cast %191 : vector<16xf32> to vector<16x1xf32>
      %193 = vector.broadcast %192 : vector<16x1xf32> to vector<16x128xf32>
      %194 = arith.subf %190, %193 : vector<16x128xf32>
      %195 = math.exp %194 : vector<16x128xf32>
      %cst_115 = arith.constant dense<0.000000e+00> : vector<16xf32>
      %196 = vector.multi_reduction <add>, %195, %cst_115 [1] : vector<16x128xf32> to vector<16xf32>
      %197 = vector.shape_cast %196 : vector<16xf32> to vector<16x1xf32>
      %198 = math.log %197 : vector<16x1xf32>
      %199 = vector.broadcast %198 : vector<16x1xf32> to vector<16x128xf32>
      %200 = arith.subf %194, %199 : vector<16x128xf32>
      %cst_116 = arith.constant 16.666666 : f32
      %201 = vector.broadcast %cst_116 : f32 to vector<16x128xf32>
      %202 = arith.mulf %65, %201 : vector<16x128xf32>
      %cst_117 = arith.constant -1.000000e+30 : f32
      %203 = vector.broadcast %cst_117 : f32 to vector<16x128xf32>
      %204 = arith.select %186, %202, %203 : vector<16x128xi1>, vector<16x128xf32>
      %cst_118 = arith.constant dense<0xFF800000> : vector<16xf32>
      %205 = vector.multi_reduction <maximumf>, %204, %cst_118 [1] : vector<16x128xf32> to vector<16xf32>
      %206 = vector.shape_cast %205 : vector<16xf32> to vector<16x1xf32>
      %207 = vector.broadcast %206 : vector<16x1xf32> to vector<16x128xf32>
      %208 = arith.subf %204, %207 : vector<16x128xf32>
      %209 = math.exp %208 : vector<16x128xf32>
      %cst_119 = arith.constant dense<0.000000e+00> : vector<16xf32>
      %210 = vector.multi_reduction <add>, %209, %cst_119 [1] : vector<16x128xf32> to vector<16xf32>
      %211 = vector.shape_cast %210 : vector<16xf32> to vector<16x1xf32>
      %212 = vector.broadcast %211 : vector<16x1xf32> to vector<16x128xf32>
      %213 = arith.divf %209, %212 : vector<16x128xf32>
      %214 = arith.mulf %213, %200 : vector<16x128xf32>
      %cst_120 = arith.constant 0.000000e+00 : f32
      %215 = vector.broadcast %cst_120 : f32 to vector<16x128xf32>
      %216 = arith.select %186, %214, %215 : vector<16x128xi1>, vector<16x128xf32>
      %cst_121 = arith.constant dense<0.000000e+00> : vector<16xf32>
      %217 = vector.multi_reduction <add>, %216, %cst_121 [1] : vector<16x128xf32> to vector<16xf32>
      %218 = vector.shape_cast %217 : vector<16xf32> to vector<16x1xf32>
      %cst_122 = arith.constant 0.000000e+00 : f32
      %219 = vector.broadcast %cst_122 : f32 to vector<16x1xf32>
      %220 = arith.subf %219, %218 : vector<16x1xf32>
      %cst_123 = arith.constant dense<0.000000e+00> : vector<1xf32>
      %221 = vector.multi_reduction <add>, %220, %cst_123 [0] : vector<16x1xf32> to vector<1xf32>
      %222 = vector.shape_cast %221 : vector<1xf32> to vector<1x1xf32>
      %cst_124 = arith.constant 1.600000e+01 : f32
      %223 = vector.broadcast %cst_124 : f32 to vector<1x1xf32>
      %224 = arith.divf %222, %223 : vector<1x1xf32>
      %cst_125 = arith.constant 1.11111116 : f32
      %225 = vector.broadcast %cst_125 : f32 to vector<16x128xf32>
      %226 = arith.mulf %65, %225 : vector<16x128xf32>
      %cst_126 = arith.constant -1.000000e+30 : f32
      %227 = vector.broadcast %cst_126 : f32 to vector<16x128xf32>
      %228 = arith.select %186, %226, %227 : vector<16x128xi1>, vector<16x128xf32>
      %cst_127 = arith.constant dense<0xFF800000> : vector<16xf32>
      %229 = vector.multi_reduction <maximumf>, %228, %cst_127 [1] : vector<16x128xf32> to vector<16xf32>
      %230 = vector.shape_cast %229 : vector<16xf32> to vector<16x1xf32>
      %231 = vector.broadcast %230 : vector<16x1xf32> to vector<16x128xf32>
      %232 = arith.subf %228, %231 : vector<16x128xf32>
      %233 = math.exp %232 : vector<16x128xf32>
      %cst_128 = arith.constant dense<0.000000e+00> : vector<16xf32>
      %234 = vector.multi_reduction <add>, %233, %cst_128 [1] : vector<16x128xf32> to vector<16xf32>
      %235 = vector.shape_cast %234 : vector<16xf32> to vector<16x1xf32>
      %236 = math.log %235 : vector<16x1xf32>
      %237 = vector.broadcast %236 : vector<16x1xf32> to vector<16x128xf32>
      %238 = arith.subf %232, %237 : vector<16x128xf32>
      %cst_129 = arith.constant 16.666666 : f32
      %239 = vector.broadcast %cst_129 : f32 to vector<16x128xf32>
      %240 = arith.mulf %67, %239 : vector<16x128xf32>
      %cst_130 = arith.constant -1.000000e+30 : f32
      %241 = vector.broadcast %cst_130 : f32 to vector<16x128xf32>
      %242 = arith.select %186, %240, %241 : vector<16x128xi1>, vector<16x128xf32>
      %cst_131 = arith.constant dense<0xFF800000> : vector<16xf32>
      %243 = vector.multi_reduction <maximumf>, %242, %cst_131 [1] : vector<16x128xf32> to vector<16xf32>
      %244 = vector.shape_cast %243 : vector<16xf32> to vector<16x1xf32>
      %245 = vector.broadcast %244 : vector<16x1xf32> to vector<16x128xf32>
      %246 = arith.subf %242, %245 : vector<16x128xf32>
      %247 = math.exp %246 : vector<16x128xf32>
      %cst_132 = arith.constant dense<0.000000e+00> : vector<16xf32>
      %248 = vector.multi_reduction <add>, %247, %cst_132 [1] : vector<16x128xf32> to vector<16xf32>
      %249 = vector.shape_cast %248 : vector<16xf32> to vector<16x1xf32>
      %250 = vector.broadcast %249 : vector<16x1xf32> to vector<16x128xf32>
      %251 = arith.divf %247, %250 : vector<16x128xf32>
      %252 = arith.mulf %251, %238 : vector<16x128xf32>
      %cst_133 = arith.constant 0.000000e+00 : f32
      %253 = vector.broadcast %cst_133 : f32 to vector<16x128xf32>
      %254 = arith.select %186, %252, %253 : vector<16x128xi1>, vector<16x128xf32>
      %cst_134 = arith.constant dense<0.000000e+00> : vector<16xf32>
      %255 = vector.multi_reduction <add>, %254, %cst_134 [1] : vector<16x128xf32> to vector<16xf32>
      %256 = vector.shape_cast %255 : vector<16xf32> to vector<16x1xf32>
      %cst_135 = arith.constant 0.000000e+00 : f32
      %257 = vector.broadcast %cst_135 : f32 to vector<16x1xf32>
      %258 = arith.subf %257, %256 : vector<16x1xf32>
      %cst_136 = arith.constant dense<0.000000e+00> : vector<1xf32>
      %259 = vector.multi_reduction <add>, %258, %cst_136 [0] : vector<16x1xf32> to vector<1xf32>
      %260 = vector.shape_cast %259 : vector<1xf32> to vector<1x1xf32>
      %cst_137 = arith.constant 1.600000e+01 : f32
      %261 = vector.broadcast %cst_137 : f32 to vector<1x1xf32>
      %262 = arith.divf %260, %261 : vector<1x1xf32>
      %263 = arith.addf %224, %262 : vector<1x1xf32>
      %cst_138 = arith.constant 5.000000e-01 : f32
      %264 = vector.broadcast %cst_138 : f32 to vector<1x1xf32>
      %265 = arith.mulf %263, %264 : vector<1x1xf32>
      %c0_139 = arith.constant 0 : index
      %c0_140 = arith.constant 0 : index
      %266 = vector.load %arg19[%c0_139, %c0_140] : memref<1x1xf32, #tpu.memory_space<vmem>>, vector<1x1xf32>
      tpu.vector_store %arg19[%c0_139, %c0_140], %265 {strides = array<i32>} : memref<1x1xf32, #tpu.memory_space<vmem>>, vector<1x1xf32>,
    } else {
    }
    return
  }
  func.func @transform_0(%arg0: i32) -> (i32, i32, i32) {
    %c0_i32 = arith.constant 0 : i32
    %c0_i32_0 = arith.constant 0 : i32
    %c0_i32_1 = arith.constant 0 : i32
    return %arg0, %c0_i32, %c0_i32_0 : i32, i32, i32
  }
  func.func @transform_1(%arg0: i32) -> (i32, i32) {
    %c0_i32 = arith.constant 0 : i32
    %c0_i32_0 = arith.constant 0 : i32
    %c0_i32_1 = arith.constant 0 : i32
    return %c0_i32, %c0_i32_0 : i32, i32
  }
  func.func @transform_2(%arg0: i32) -> (i32, i32) {
    %c0_i32 = arith.constant 0 : i32
    %c0_i32_0 = arith.constant 0 : i32
    %c0_i32_1 = arith.constant 0 : i32
    return %c0_i32, %c0_i32_0 : i32, i32
  }
  func.func @transform_3(%arg0: i32) -> (i32, i32) {
    %c0_i32 = arith.constant 0 : i32
    %c0_i32_0 = arith.constant 0 : i32
    %c0_i32_1 = arith.constant 0 : i32
    return %c0_i32, %c0_i32_0 : i32, i32
  }
  func.func @transform_4(%arg0: i32) -> (i32, i32) {
    %c0_i32 = arith.constant 0 : i32
    %c0_i32_0 = arith.constant 0 : i32
    %c0_i32_1 = arith.constant 0 : i32
    return %c0_i32, %c0_i32_0 : i32, i32
  }
  func.func @transform_5(%arg0: i32) -> (i32, i32) {
    %c0_i32 = arith.constant 0 : i32
    %c0_i32_0 = arith.constant 0 : i32
    %c0_i32_1 = arith.constant 0 : i32
    return %c0_i32, %c0_i32_0 : i32, i32
  }
  func.func @transform_6(%arg0: i32) -> (i32, i32) {
    %c0_i32 = arith.constant 0 : i32
    %c0_i32_0 = arith.constant 0 : i32
    %c0_i32_1 = arith.constant 0 : i32
    return %c0_i32, %c0_i32_0 : i32, i32
  }
  func.func @transform_7(%arg0: i32) -> (i32, i32) {
    %c0_i32 = arith.constant 0 : i32
    %c0_i32_0 = arith.constant 0 : i32
    %c0_i32_1 = arith.constant 0 : i32
    return %c0_i32, %c0_i32_0 : i32, i32
  }
  func.func @transform_8(%arg0: i32) -> (i32, i32) {
    %c0_i32 = arith.constant 0 : i32
    %c0_i32_0 = arith.constant 0 : i32
    %c0_i32_1 = arith.constant 0 : i32
    return %c0_i32, %c0_i32_0 : i32, i32
  }
  func.func @transform_9(%arg0: i32) -> (i32, i32) {
    %c0_i32 = arith.constant 0 : i32
    %c0_i32_0 = arith.constant 0 : i32
    %c0_i32_1 = arith.constant 0 : i32
    return %c0_i32, %c0_i32_0 : i32, i32
  }
  func.func @transform_10(%arg0: i32) -> (i32, i32) {
    %c0_i32 = arith.constant 0 : i32
    %c0_i32_0 = arith.constant 0 : i32
    %c0_i32_1 = arith.constant 0 : i32
    return %c0_i32, %c0_i32_0 : i32, i32
  }
  func.func @transform_11(%arg0: i32) -> (i32, i32) {
    %c0_i32 = arith.constant 0 : i32
    %c0_i32_0 = arith.constant 0 : i32
    %c0_i32_1 = arith.constant 0 : i32
    return %c0_i32, %c0_i32_0 : i32, i32
  }
  func.func @transform_12(%arg0: i32) -> (i32, i32) {
    %c0_i32 = arith.constant 0 : i32
    %c0_i32_0 = arith.constant 0 : i32
    %c0_i32_1 = arith.constant 0 : i32
    return %c0_i32, %c0_i32_0 : i32, i32
  }
  func.func @transform_13(%arg0: i32) -> (i32, i32) {
    %c0_i32 = arith.constant 0 : i32
    %c0_i32_0 = arith.constant 0 : i32
    %c0_i32_1 = arith.constant 0 : i32
    return %c0_i32, %c0_i32_0 : i32, i32
  }
  func.func @transform_14(%arg0: i32) -> (i32, i32) {
    %c0_i32 = arith.constant 0 : i32
    %c0_i32_0 = arith.constant 0 : i32
    %c0_i32_1 = arith.constant 0 : i32
    return %c0_i32, %c0_i32_0 : i32, i32
  }
  func.func @transform_15(%arg0: i32) -> (i32, i32, i32) {
    %c0_i32 = arith.constant 0 : i32
    %c0_i32_0 = arith.constant 0 : i32
    %c0_i32_1 = arith.constant 0 : i32
    %c0_i32_2 = arith.constant 0 : i32
    return %c0_i32, %c0_i32_0, %c0_i32_1 : i32, i32, i32
  }
  func.func @transform_16(%arg0: i32) -> (i32, i32) {
    %c0_i32 = arith.constant 0 : i32
    %c0_i32_0 = arith.constant 0 : i32
    %c0_i32_1 = arith.constant 0 : i32
    return %c0_i32, %c0_i32_0 : i32, i32
  }
  func.func @transform_17(%arg0: i32) -> (i32, i32) {
    %c0_i32 = arith.constant 0 : i32
    %c0_i32_0 = arith.constant 0 : i32
    %c0_i32_1 = arith.constant 0 : i32
    return %c0_i32, %c0_i32_0 : i32, i32
  }
  func.func @transform_18(%arg0: i32) -> (i32, i32) {
    %c0_i32 = arith.constant 0 : i32
    %c0_i32_0 = arith.constant 0 : i32
    %c0_i32_1 = arith.constant 0 : i32
    return %c0_i32, %c0_i32_0 : i32, i32
  }
}

module attributes {stable_mosaic.version = 11 : i64} {
  func.func @fused_kernel(%arg0: i32, %arg1: memref<1x16x128xbf16, #tpu.memory_space<vmem>>, %arg2: memref<16x16xbf16, #tpu.memory_space<vmem>>, %arg3: memref<16x16xbf16, #tpu.memory_space<vmem>>, %arg4: memref<16x1xf32, #tpu.memory_space<vmem>>, %arg5: memref<16x1xf32, #tpu.memory_space<vmem>>, %arg6: memref<16x1xf32, #tpu.memory_space<vmem>>, %arg7: memref<128x512xbf16, #tpu.memory_space<vmem>>, %arg8: memref<512x128xbf16, #tpu.memory_space<vmem>>, %arg9: memref<128x128xbf16, #tpu.memory_space<vmem>>, %arg10: memref<128x128xbf16, #tpu.memory_space<vmem>>, %arg11: memref<1x1xf32, #tpu.memory_space<vmem>>, %arg12: memref<128x128xbf16, #tpu.memory_space<vmem>>, %arg13: memref<1x128xf32, #tpu.memory_space<vmem>>, %arg14: memref<16x128xf32, #tpu.memory_space<vmem>>, %arg15: memref<16x128xf32, #tpu.memory_space<vmem>>, %arg16: memref<3x16x128xf32, #tpu.memory_space<vmem>>, %arg17: memref<16x128xf32, #tpu.memory_space<vmem>>, %arg18: memref<16x128xf32, #tpu.memory_space<vmem>>, %arg19: memref<1x1xf32, #tpu.memory_space<vmem>>, %arg20: memref<3x16x128xf32, #tpu.memory_space<vmem>>, %arg21: memref<3x16x128xf32, #tpu.memory_space<vmem>>) attributes {dimension_semantics = [#tpu.dimension_semantics<arbitrary>], iteration_bounds = array<i64: 3>, scalar_prefetch = 0 : i64, scratch_operands = 2 : i64, tpu.core_type = #tpu.core_type<tc>, window_params = [{transform_indices = @transform_0, window_bounds = array<i64: 1, 16, 128>}, {pipeline_mode = #tpu.pipeline_mode<synchronous>, transform_indices = @transform_1, window_bounds = array<i64: 16, 16>}, {pipeline_mode = #tpu.pipeline_mode<synchronous>, transform_indices = @transform_2, window_bounds = array<i64: 16, 16>}, {pipeline_mode = #tpu.pipeline_mode<synchronous>, transform_indices = @transform_3, window_bounds = array<i64: 16, 1>}, {pipeline_mode = #tpu.pipeline_mode<synchronous>, transform_indices = @transform_4, window_bounds = array<i64: 16, 1>}, {pipeline_mode = #tpu.pipeline_mode<synchronous>, transform_indices = @transform_5, window_bounds = array<i64: 16, 1>}, {pipeline_mode = #tpu.pipeline_mode<synchronous>, transform_indices = @transform_6, window_bounds = array<i64: 128, 512>}, {pipeline_mode = #tpu.pipeline_mode<synchronous>, transform_indices = @transform_7, window_bounds = array<i64: 512, 128>}, {pipeline_mode = #tpu.pipeline_mode<synchronous>, transform_indices = @transform_8, window_bounds = array<i64: 128, 128>}, {pipeline_mode = #tpu.pipeline_mode<synchronous>, transform_indices = @transform_9, window_bounds = array<i64: 128, 128>}, {pipeline_mode = #tpu.pipeline_mode<synchronous>, transform_indices = @transform_10, window_bounds = array<i64: 1, 1>}, {pipeline_mode = #tpu.pipeline_mode<synchronous>, transform_indices = @transform_11, window_bounds = array<i64: 128, 128>}, {pipeline_mode = #tpu.pipeline_mode<synchronous>, transform_indices = @transform_12, window_bounds = array<i64: 1, 128>}, {pipeline_mode = #tpu.pipeline_mode<synchronous>, transform_indices = @transform_13, window_bounds = array<i64: 16, 128>}, {pipeline_mode = #tpu.pipeline_mode<synchronous>, transform_indices = @transform_14, window_bounds = array<i64: 16, 128>}, {pipeline_mode = #tpu.pipeline_mode<synchronous>, transform_indices = @transform_15, window_bounds = array<i64: 3, 16, 128>}, {pipeline_mode = #tpu.pipeline_mode<synchronous>, transform_indices = @transform_16, window_bounds = array<i64: 16, 128>}, {pipeline_mode = #tpu.pipeline_mode<synchronous>, transform_indices = @transform_17, window_bounds = array<i64: 16, 128>}, {pipeline_mode = #tpu.pipeline_mode<synchronous>, transform_indices = @transform_18, window_bounds = array<i64: 1, 1>}]} {
    %c0 = arith.constant 0 : index
    %c0_0 = arith.constant 0 : index
    %0 = vector.load %arg2[%c0, %c0_0] : memref<16x16xbf16, #tpu.memory_space<vmem>>, vector<16x16xbf16>
    %c0_1 = arith.constant 0 : index
    %c0_2 = arith.constant 0 : index
    %1 = vector.load %arg5[%c0_1, %c0_2] : memref<16x1xf32, #tpu.memory_space<vmem>>, vector<16x1xf32>
    %c0_3 = arith.constant 0 : index
    %c0_4 = arith.constant 0 : index
    %2 = vector.load %arg6[%c0_3, %c0_4] : memref<16x1xf32, #tpu.memory_space<vmem>>, vector<16x1xf32>
    %c0_5 = arith.constant 0 : index
    %c0_6 = arith.constant 0 : index
    %c0_7 = arith.constant 0 : index
    %3 = vector.load %arg1[%c0_5, %c0_6, %c0_7] : memref<1x16x128xbf16, #tpu.memory_space<vmem>>, vector<1x16x128xbf16>
    %4 = vector.shape_cast %3 : vector<1x16x128xbf16> to vector<16x128xbf16>
    %c0_8 = arith.constant 0 : index
    %c0_9 = arith.constant 0 : index
    %5 = vector.load %arg7[%c0_8, %c0_9] : memref<128x512xbf16, #tpu.memory_space<vmem>>, vector<128x512xbf16>
    %cst = arith.constant dense<0.000000e+00> : vector<16x512xf32>
    %6 = tpu.matmul %4, %5, %cst {dimension_numbers = #tpu.dot_dimension_numbers<[1], [0], [0], [1], [0, 0, 1, 1], [], []>} : vector<16x128xbf16>, vector<128x512xbf16>, vector<16x512xf32> -> vector<16x512xf32>
    %7 = arith.truncf %6 : vector<16x512xf32> to vector<16x512xbf16>
    %cst_10 = arith.constant dense<0.000000e+00> : vector<16x512xf32>
    %8 = tpu.matmul %0, %7, %cst_10 {dimension_numbers = #tpu.dot_dimension_numbers<[1], [0], [0], [1], [0, 0, 1, 1], [], []>} : vector<16x16xbf16>, vector<16x512xbf16>, vector<16x512xf32> -> vector<16x512xf32>
    %9 = vector.broadcast %1 : vector<16x1xf32> to vector<16x512xf32>
    %10 = arith.mulf %9, %6 : vector<16x512xf32>
    %11 = vector.broadcast %2 : vector<16x1xf32> to vector<16x512xf32>
    %12 = arith.mulf %11, %8 : vector<16x512xf32>
    %13 = arith.addf %10, %12 : vector<16x512xf32>
    %cst_11 = arith.constant 0.000000e+00 : f32
    %14 = vector.broadcast %cst_11 : f32 to vector<16x512xf32>
    %15 = arith.maximumf %13, %14 : vector<16x512xf32>
    %16 = arith.truncf %15 : vector<16x512xf32> to vector<16x512xbf16>
    %c0_12 = arith.constant 0 : index
    %c0_13 = arith.constant 0 : index
    %17 = vector.load %arg8[%c0_12, %c0_13] : memref<512x128xbf16, #tpu.memory_space<vmem>>, vector<512x128xbf16>
    %cst_14 = arith.constant dense<0.000000e+00> : vector<16x128xf32>
    %18 = tpu.matmul %16, %17, %cst_14 {dimension_numbers = #tpu.dot_dimension_numbers<[1], [0], [0], [1], [0, 0, 1, 1], [], []>} : vector<16x512xbf16>, vector<512x128xbf16>, vector<16x128xf32> -> vector<16x128xf32>
    %19 = arith.truncf %18 : vector<16x128xf32> to vector<16x128xbf16>
    %cst_15 = arith.constant dense<0.000000e+00> : vector<16x128xf32>
    %20 = tpu.matmul %0, %19, %cst_15 {dimension_numbers = #tpu.dot_dimension_numbers<[1], [0], [0], [1], [0, 0, 1, 1], [], []>} : vector<16x16xbf16>, vector<16x128xbf16>, vector<16x128xf32> -> vector<16x128xf32>
    %21 = vector.broadcast %1 : vector<16x1xf32> to vector<16x128xf32>
    %22 = arith.mulf %21, %18 : vector<16x128xf32>
    %23 = vector.broadcast %2 : vector<16x1xf32> to vector<16x128xf32>
    %24 = arith.mulf %23, %20 : vector<16x128xf32>
    %25 = arith.addf %22, %24 : vector<16x128xf32>
    %cst_16 = arith.constant 0.000000e+00 : f32
    %26 = vector.broadcast %cst_16 : f32 to vector<16x128xf32>
    %27 = arith.maximumf %25, %26 : vector<16x128xf32>
    %c0_17 = arith.constant 0 : index
    %c0_18 = arith.constant 0 : index
    %28 = vector.load %arg3[%c0_17, %c0_18] : memref<16x16xbf16, #tpu.memory_space<vmem>>, vector<16x16xbf16>
    %29 = arith.truncf %27 : vector<16x128xf32> to vector<16x128xbf16>
    %cst_19 = arith.constant dense<0.000000e+00> : vector<16x128xf32>
    %30 = tpu.matmul %28, %29, %cst_19 {dimension_numbers = #tpu.dot_dimension_numbers<[1], [0], [0], [1], [0, 0, 1, 1], [], []>} : vector<16x16xbf16>, vector<16x128xbf16>, vector<16x128xf32> -> vector<16x128xf32>
    %c0_20 = arith.constant 0 : index
    %c0_21 = arith.constant 0 : index
    %31 = vector.load %arg4[%c0_20, %c0_21] : memref<16x1xf32, #tpu.memory_space<vmem>>, vector<16x1xf32>
    %32 = vector.broadcast %31 : vector<16x1xf32> to vector<16x128xf32>
    %33 = arith.mulf %30, %32 : vector<16x128xf32>
    %34 = arith.mulf %33, %33 : vector<16x128xf32>
    %cst_22 = arith.constant dense<0.000000e+00> : vector<16xf32>
    %35 = vector.multi_reduction <add>, %34, %cst_22 [1] : vector<16x128xf32> to vector<16xf32>
    %36 = vector.shape_cast %35 : vector<16xf32> to vector<16x1xf32>
    %cst_23 = arith.constant 1.000000e-24 : f32
    %37 = vector.broadcast %cst_23 : f32 to vector<16x1xf32>
    %38 = arith.maximumf %36, %37 : vector<16x1xf32>
    %39 = math.rsqrt %38 : vector<16x1xf32>
    %40 = vector.broadcast %39 : vector<16x1xf32> to vector<16x128xf32>
    %41 = arith.mulf %33, %40 : vector<16x128xf32>
    %cst_24 = arith.constant 0.000000e+00 : f32
    %42 = vector.broadcast %cst_24 : f32 to vector<16x128xf32>
    %43 = arith.subf %42, %41 : vector<16x128xf32>
    %44 = math.exp %43 : vector<16x128xf32>
    %cst_25 = arith.constant 1.000000e+00 : f32
    %45 = vector.broadcast %cst_25 : f32 to vector<16x128xf32>
    %46 = arith.addf %45, %44 : vector<16x128xf32>
    %cst_26 = arith.constant 1.000000e+00 : f32
    %47 = vector.broadcast %cst_26 : f32 to vector<16x128xf32>
    %48 = arith.divf %47, %46 : vector<16x128xf32>
    %c0_i32 = arith.constant 0 : i32
    %49 = arith.cmpi eq, %arg0, %c0_i32 : i32
    %50 = arith.extui %49 : i1 to i32
    %c0_i32_27 = arith.constant 0 : i32
    %51 = arith.cmpi ne, %50, %c0_i32_27 : i32
    scf.if %51 {
      %c0_34 = arith.constant 0 : index
      %c0_35 = arith.constant 0 : index
      %c0_36 = arith.constant 0 : index
      %64 = vector.load %arg20[%c0_34, %c0_35, %c0_36] : memref<3x16x128xf32, #tpu.memory_space<vmem>>, vector<1x16x128xf32>
      %65 = vector.shape_cast %64 : vector<1x16x128xf32> to vector<16x128xf32>
      %66 = vector.shape_cast %25 : vector<16x128xf32> to vector<1x16x128xf32>
      tpu.vector_store %arg20[%c0_34, %c0_35, %c0_36], %66 {strides = array<i32>} : memref<3x16x128xf32, #tpu.memory_space<vmem>>, vector<1x16x128xf32>,
      %c0_37 = arith.constant 0 : index
      %c0_38 = arith.constant 0 : index
      %c0_39 = arith.constant 0 : index
      %67 = vector.load %arg21[%c0_37, %c0_38, %c0_39] : memref<3x16x128xf32, #tpu.memory_space<vmem>>, vector<1x16x128xf32>
      %68 = vector.shape_cast %67 : vector<1x16x128xf32> to vector<16x128xf32>
      %69 = vector.shape_cast %48 : vector<16x128xf32> to vector<1x16x128xf32>
      tpu.vector_store %arg21[%c0_37, %c0_38, %c0_39], %69 {strides = array<i32>} : memref<3x16x128xf32, #tpu.memory_space<vmem>>, vector<1x16x128xf32>,
    } else {
    }
    %c1_i32 = arith.constant 1 : i32
    %52 = arith.cmpi eq, %arg0, %c1_i32 : i32
    %53 = arith.extui %52 : i1 to i32
    %c0_i32_28 = arith.constant 0 : i32
    %54 = arith.cmpi ne, %53, %c0_i32_28 : i32
    scf.if %54 {
      %c1 = arith.constant 1 : index
      %c0_34 = arith.constant 0 : index
      %c0_35 = arith.constant 0 : index
      %64 = vector.load %arg20[%c1, %c0_34, %c0_35] : memref<3x16x128xf32, #tpu.memory_space<vmem>>, vector<1x16x128xf32>
      %65 = vector.shape_cast %64 : vector<1x16x128xf32> to vector<16x128xf32>
      %66 = vector.shape_cast %25 : vector<16x128xf32> to vector<1x16x128xf32>
      tpu.vector_store %arg20[%c1, %c0_34, %c0_35], %66 {strides = array<i32>} : memref<3x16x128xf32, #tpu.memory_space<vmem>>, vector<1x16x128xf32>,
      %c1_36 = arith.constant 1 : index
      %c0_37 = arith.constant 0 : index
      %c0_38 = arith.constant 0 : index
      %67 = vector.load %arg21[%c1_36, %c0_37, %c0_38] : memref<3x16x128xf32, #tpu.memory_space<vmem>>, vector<1x16x128xf32>
      %68 = vector.shape_cast %67 : vector<1x16x128xf32> to vector<16x128xf32>
      %69 = vector.shape_cast %48 : vector<16x128xf32> to vector<1x16x128xf32>
      tpu.vector_store %arg21[%c1_36, %c0_37, %c0_38], %69 {strides = array<i32>} : memref<3x16x128xf32, #tpu.memory_space<vmem>>, vector<1x16x128xf32>,
    } else {
    }
    %c2_i32 = arith.constant 2 : i32
    %55 = arith.cmpi eq, %arg0, %c2_i32 : i32
    %56 = arith.extui %55 : i1 to i32
    %c0_i32_29 = arith.constant 0 : i32
    %57 = arith.cmpi ne, %56, %c0_i32_29 : i32
    scf.if %57 {
      %c2 = arith.constant 2 : index
      %c0_34 = arith.constant 0 : index
      %c0_35 = arith.constant 0 : index
      %64 = vector.load %arg20[%c2, %c0_34, %c0_35] : memref<3x16x128xf32, #tpu.memory_space<vmem>>, vector<1x16x128xf32>
      %65 = vector.shape_cast %64 : vector<1x16x128xf32> to vector<16x128xf32>
      %66 = vector.shape_cast %25 : vector<16x128xf32> to vector<1x16x128xf32>
      tpu.vector_store %arg20[%c2, %c0_34, %c0_35], %66 {strides = array<i32>} : memref<3x16x128xf32, #tpu.memory_space<vmem>>, vector<1x16x128xf32>,
      %c2_36 = arith.constant 2 : index
      %c0_37 = arith.constant 0 : index
      %c0_38 = arith.constant 0 : index
      %67 = vector.load %arg21[%c2_36, %c0_37, %c0_38] : memref<3x16x128xf32, #tpu.memory_space<vmem>>, vector<1x16x128xf32>
      %68 = vector.shape_cast %67 : vector<1x16x128xf32> to vector<16x128xf32>
      %69 = vector.shape_cast %48 : vector<16x128xf32> to vector<1x16x128xf32>
      tpu.vector_store %arg21[%c2_36, %c0_37, %c0_38], %69 {strides = array<i32>} : memref<3x16x128xf32, #tpu.memory_space<vmem>>, vector<1x16x128xf32>,
    } else {
    }
    %c0_i32_30 = arith.constant 0 : i32
    %58 = arith.cmpi eq, %arg0, %c0_i32_30 : i32
    %59 = arith.extui %58 : i1 to i32
    %c0_i32_31 = arith.constant 0 : i32
    %60 = arith.cmpi ne, %59, %c0_i32_31 : i32
    scf.if %60 {
      %c0_34 = arith.constant 0 : index
      %c0_35 = arith.constant 0 : index
      %64 = vector.load %arg14[%c0_34, %c0_35] : memref<16x128xf32, #tpu.memory_space<vmem>>, vector<16x128xf32>
      tpu.vector_store %arg14[%c0_34, %c0_35], %25 {strides = array<i32>} : memref<16x128xf32, #tpu.memory_space<vmem>>, vector<16x128xf32>,
      %65 = arith.truncf %25 : vector<16x128xf32> to vector<16x128xbf16>
      %c0_36 = arith.constant 0 : index
      %c0_37 = arith.constant 0 : index
      %66 = vector.load %arg9[%c0_36, %c0_37] : memref<128x128xbf16, #tpu.memory_space<vmem>>, vector<128x128xbf16>
      %cst_38 = arith.constant dense<0.000000e+00> : vector<16x128xf32>
      %67 = tpu.matmul %65, %66, %cst_38 {dimension_numbers = #tpu.dot_dimension_numbers<[1], [0], [0], [1], [0, 0, 1, 1], [], []>} : vector<16x128xbf16>, vector<128x128xbf16>, vector<16x128xf32> -> vector<16x128xf32>
      %68 = arith.truncf %67 : vector<16x128xf32> to vector<16x128xbf16>
      %cst_39 = arith.constant dense<0.000000e+00> : vector<16x128xf32>
      %69 = tpu.matmul %0, %68, %cst_39 {dimension_numbers = #tpu.dot_dimension_numbers<[1], [0], [0], [1], [0, 0, 1, 1], [], []>} : vector<16x16xbf16>, vector<16x128xbf16>, vector<16x128xf32> -> vector<16x128xf32>
      %c0_40 = arith.constant 0 : index
      %c0_41 = arith.constant 0 : index
      %70 = vector.load %arg15[%c0_40, %c0_41] : memref<16x128xf32, #tpu.memory_space<vmem>>, vector<16x128xf32>
      tpu.vector_store %arg15[%c0_40, %c0_41], %69 {strides = array<i32>} : memref<16x128xf32, #tpu.memory_space<vmem>>, vector<16x128xf32>,
    } else {
    }
    %c2_i32_32 = arith.constant 2 : i32
    %61 = arith.cmpi eq, %arg0, %c2_i32_32 : i32
    %62 = arith.extui %61 : i1 to i32
    %c0_i32_33 = arith.constant 0 : i32
    %63 = arith.cmpi ne, %62, %c0_i32_33 : i32
    scf.if %63 {
      %c0_34 = arith.constant 0 : index
      %c0_35 = arith.constant 0 : index
      %c0_36 = arith.constant 0 : index
      %64 = vector.load %arg20[%c0_34, %c0_35, %c0_36] : memref<3x16x128xf32, #tpu.memory_space<vmem>>, vector<1x16x128xf32>
      %65 = vector.shape_cast %64 : vector<1x16x128xf32> to vector<16x128xf32>
      %c2 = arith.constant 2 : index
      %c0_37 = arith.constant 0 : index
      %c0_38 = arith.constant 0 : index
      %66 = vector.load %arg20[%c2, %c0_37, %c0_38] : memref<3x16x128xf32, #tpu.memory_space<vmem>>, vector<1x16x128xf32>
      %67 = vector.shape_cast %66 : vector<1x16x128xf32> to vector<16x128xf32>
      %cst_39 = arith.constant 0.000000e+00 : f32
      %68 = vector.broadcast %cst_39 : f32 to vector<16x128xf32>
      %69 = arith.maximumf %65, %68 : vector<16x128xf32>
      %c1 = arith.constant 1 : index
      %c0_40 = arith.constant 0 : index
      %c0_41 = arith.constant 0 : index
      %70 = vector.load %arg20[%c1, %c0_40, %c0_41] : memref<3x16x128xf32, #tpu.memory_space<vmem>>, vector<1x16x128xf32>
      %71 = vector.shape_cast %70 : vector<1x16x128xf32> to vector<16x128xf32>
      %cst_42 = arith.constant 0.000000e+00 : f32
      %72 = vector.broadcast %cst_42 : f32 to vector<16x128xf32>
      %73 = arith.maximumf %71, %72 : vector<16x128xf32>
      %cst_43 = arith.constant 0.000000e+00 : f32
      %74 = vector.broadcast %cst_43 : f32 to vector<16x128xf32>
      %75 = arith.maximumf %67, %74 : vector<16x128xf32>
      %76 = tpu.iota {dimensions = array<i32: 1>} : vector<16x128xi32>
      %c0_44 = arith.constant 0 : index
      %c0_45 = arith.constant 0 : index
      %c0_46 = arith.constant 0 : index
      %77 = vector.load %arg21[%c0_44, %c0_45, %c0_46] : memref<3x16x128xf32, #tpu.memory_space<vmem>>, vector<1x16x128xf32>
      %78 = vector.shape_cast %77 : vector<1x16x128xf32> to vector<16x128xf32>
      %79 = arith.truncf %78 : vector<16x128xf32> to vector<16x128xbf16>
      %c0_47 = arith.constant 0 : index
      %c0_48 = arith.constant 0 : index
      %80 = vector.load %arg10[%c0_47, %c0_48] : memref<128x128xbf16, #tpu.memory_space<vmem>>, vector<128x128xbf16>
      %cst_49 = arith.constant dense<0.000000e+00> : vector<16x128xf32>
      %81 = tpu.matmul %79, %80, %cst_49 {dimension_numbers = #tpu.dot_dimension_numbers<[1], [0], [0], [1], [0, 0, 1, 1], [], []>} : vector<16x128xbf16>, vector<128x128xbf16>, vector<16x128xf32> -> vector<16x128xf32>
      %82 = arith.mulf %69, %81 : vector<16x128xf32>
      %cst_50 = arith.constant dense<0.000000e+00> : vector<16xf32>
      %83 = vector.multi_reduction <add>, %82, %cst_50 [1] : vector<16x128xf32> to vector<16xf32>
      %84 = vector.shape_cast %83 : vector<16xf32> to vector<16x1xf32>
      %c0_51 = arith.constant 0 : index
      %c0_52 = arith.constant 0 : index
      %85 = vector.load %arg11[%c0_51, %c0_52] : memref<1x1xf32, #tpu.memory_space<vmem>>, vector<1x1xf32>
      %86 = vector.broadcast %85 : vector<1x1xf32> to vector<16x1xf32>
      %87 = arith.addf %84, %86 : vector<16x1xf32>
      %88 = arith.mulf %73, %81 : vector<16x128xf32>
      %cst_53 = arith.constant dense<0.000000e+00> : vector<16xf32>
      %89 = vector.multi_reduction <add>, %88, %cst_53 [1] : vector<16x128xf32> to vector<16xf32>
      %90 = vector.shape_cast %89 : vector<16xf32> to vector<16x1xf32>
      %c0_54 = arith.constant 0 : index
      %c0_55 = arith.constant 0 : index
      %91 = vector.load %arg11[%c0_54, %c0_55] : memref<1x1xf32, #tpu.memory_space<vmem>>, vector<1x1xf32>
      %92 = vector.broadcast %91 : vector<1x1xf32> to vector<16x1xf32>
      %93 = arith.addf %90, %92 : vector<16x1xf32>
      %c0_i32_56 = arith.constant 0 : i32
      %94 = vector.broadcast %c0_i32_56 : i32 to vector<16x128xi32>
      %95 = arith.cmpi eq, %76, %94 : vector<16x128xi32>
      %c1_i32_57 = arith.constant 1 : i32
      %96 = vector.broadcast %c1_i32_57 : i32 to vector<16x128xi32>
      %97 = arith.cmpi eq, %76, %96 : vector<16x128xi32>
      %cst_58 = arith.constant 0.000000e+00 : f32
      %98 = vector.shape_cast %93 : vector<16x1xf32> to vector<16x1xf32>
      %99 = vector.broadcast %98 : vector<16x1xf32> to vector<16x128xf32>
      %100 = vector.broadcast %cst_58 : f32 to vector<16x128xf32>
      %101 = arith.select %97, %99, %100 : vector<16x128xi1>, vector<16x128xf32>
      %102 = vector.shape_cast %87 : vector<16x1xf32> to vector<16x1xf32>
      %103 = vector.broadcast %102 : vector<16x1xf32> to vector<16x128xf32>
      %104 = arith.select %95, %103, %101 : vector<16x128xi1>, vector<16x128xf32>
      %c0_59 = arith.constant 0 : index
      %c0_60 = arith.constant 0 : index
      %c0_61 = arith.constant 0 : index
      %105 = vector.load %arg16[%c0_59, %c0_60, %c0_61] : memref<3x16x128xf32, #tpu.memory_space<vmem>>, vector<1x16x128xf32>
      %106 = vector.shape_cast %105 : vector<1x16x128xf32> to vector<16x128xf32>
      %107 = vector.shape_cast %104 : vector<16x128xf32> to vector<1x16x128xf32>
      tpu.vector_store %arg16[%c0_59, %c0_60, %c0_61], %107 {strides = array<i32>} : memref<3x16x128xf32, #tpu.memory_space<vmem>>, vector<1x16x128xf32>,
      %c1_62 = arith.constant 1 : index
      %c0_63 = arith.constant 0 : index
      %c0_64 = arith.constant 0 : index
      %108 = vector.load %arg21[%c1_62, %c0_63, %c0_64] : memref<3x16x128xf32, #tpu.memory_space<vmem>>, vector<1x16x128xf32>
      %109 = vector.shape_cast %108 : vector<1x16x128xf32> to vector<16x128xf32>
      %110 = arith.truncf %109 : vector<16x128xf32> to vector<16x128xbf16>
      %c0_65 = arith.constant 0 : index
      %c0_66 = arith.constant 0 : index
      %111 = vector.load %arg10[%c0_65, %c0_66] : memref<128x128xbf16, #tpu.memory_space<vmem>>, vector<128x128xbf16>
      %cst_67 = arith.constant dense<0.000000e+00> : vector<16x128xf32>
      %112 = tpu.matmul %110, %111, %cst_67 {dimension_numbers = #tpu.dot_dimension_numbers<[1], [0], [0], [1], [0, 0, 1, 1], [], []>} : vector<16x128xbf16>, vector<128x128xbf16>, vector<16x128xf32> -> vector<16x128xf32>
      %113 = arith.mulf %73, %112 : vector<16x128xf32>
      %cst_68 = arith.constant dense<0.000000e+00> : vector<16xf32>
      %114 = vector.multi_reduction <add>, %113, %cst_68 [1] : vector<16x128xf32> to vector<16xf32>
      %115 = vector.shape_cast %114 : vector<16xf32> to vector<16x1xf32>
      %c0_69 = arith.constant 0 : index
      %c0_70 = arith.constant 0 : index
      %116 = vector.load %arg11[%c0_69, %c0_70] : memref<1x1xf32, #tpu.memory_space<vmem>>, vector<1x1xf32>
      %117 = vector.broadcast %116 : vector<1x1xf32> to vector<16x1xf32>
      %118 = arith.addf %115, %117 : vector<16x1xf32>
      %119 = arith.mulf %69, %112 : vector<16x128xf32>
      %cst_71 = arith.constant dense<0.000000e+00> : vector<16xf32>
      %120 = vector.multi_reduction <add>, %119, %cst_71 [1] : vector<16x128xf32> to vector<16xf32>
      %121 = vector.shape_cast %120 : vector<16xf32> to vector<16x1xf32>
      %c0_72 = arith.constant 0 : index
      %c0_73 = arith.constant 0 : index
      %122 = vector.load %arg11[%c0_72, %c0_73] : memref<1x1xf32, #tpu.memory_space<vmem>>, vector<1x1xf32>
      %123 = vector.broadcast %122 : vector<1x1xf32> to vector<16x1xf32>
      %124 = arith.addf %121, %123 : vector<16x1xf32>
      %c0_i32_74 = arith.constant 0 : i32
      %125 = vector.broadcast %c0_i32_74 : i32 to vector<16x128xi32>
      %126 = arith.cmpi eq, %76, %125 : vector<16x128xi32>
      %c1_i32_75 = arith.constant 1 : i32
      %127 = vector.broadcast %c1_i32_75 : i32 to vector<16x128xi32>
      %128 = arith.cmpi eq, %76, %127 : vector<16x128xi32>
      %cst_76 = arith.constant 0.000000e+00 : f32
      %129 = vector.shape_cast %124 : vector<16x1xf32> to vector<16x1xf32>
      %130 = vector.broadcast %129 : vector<16x1xf32> to vector<16x128xf32>
      %131 = vector.broadcast %cst_76 : f32 to vector<16x128xf32>
      %132 = arith.select %128, %130, %131 : vector<16x128xi1>, vector<16x128xf32>
      %133 = vector.shape_cast %118 : vector<16x1xf32> to vector<16x1xf32>
      %134 = vector.broadcast %133 : vector<16x1xf32> to vector<16x128xf32>
      %135 = arith.select %126, %134, %132 : vector<16x128xi1>, vector<16x128xf32>
      %c1_77 = arith.constant 1 : index
      %c0_78 = arith.constant 0 : index
      %c0_79 = arith.constant 0 : index
      %136 = vector.load %arg16[%c1_77, %c0_78, %c0_79] : memref<3x16x128xf32, #tpu.memory_space<vmem>>, vector<1x16x128xf32>
      %137 = vector.shape_cast %136 : vector<1x16x128xf32> to vector<16x128xf32>
      %138 = vector.shape_cast %135 : vector<16x128xf32> to vector<1x16x128xf32>
      tpu.vector_store %arg16[%c1_77, %c0_78, %c0_79], %138 {strides = array<i32>} : memref<3x16x128xf32, #tpu.memory_space<vmem>>, vector<1x16x128xf32>,
      %c2_80 = arith.constant 2 : index
      %c0_81 = arith.constant 0 : index
      %c0_82 = arith.constant 0 : index
      %139 = vector.load %arg21[%c2_80, %c0_81, %c0_82] : memref<3x16x128xf32, #tpu.memory_space<vmem>>, vector<1x16x128xf32>
      %140 = vector.shape_cast %139 : vector<1x16x128xf32> to vector<16x128xf32>
      %141 = arith.truncf %140 : vector<16x128xf32> to vector<16x128xbf16>
      %c0_83 = arith.constant 0 : index
      %c0_84 = arith.constant 0 : index
      %142 = vector.load %arg10[%c0_83, %c0_84] : memref<128x128xbf16, #tpu.memory_space<vmem>>, vector<128x128xbf16>
      %cst_85 = arith.constant dense<0.000000e+00> : vector<16x128xf32>
      %143 = tpu.matmul %141, %142, %cst_85 {dimension_numbers = #tpu.dot_dimension_numbers<[1], [0], [0], [1], [0, 0, 1, 1], [], []>} : vector<16x128xbf16>, vector<128x128xbf16>, vector<16x128xf32> -> vector<16x128xf32>
      %144 = arith.mulf %75, %143 : vector<16x128xf32>
      %cst_86 = arith.constant dense<0.000000e+00> : vector<16xf32>
      %145 = vector.multi_reduction <add>, %144, %cst_86 [1] : vector<16x128xf32> to vector<16xf32>
      %146 = vector.shape_cast %145 : vector<16xf32> to vector<16x1xf32>
      %c0_87 = arith.constant 0 : index
      %c0_88 = arith.constant 0 : index
      %147 = vector.load %arg11[%c0_87, %c0_88] : memref<1x1xf32, #tpu.memory_space<vmem>>, vector<1x1xf32>
      %148 = vector.broadcast %147 : vector<1x1xf32> to vector<16x1xf32>
      %149 = arith.addf %146, %148 : vector<16x1xf32>
      %150 = arith.mulf %69, %143 : vector<16x128xf32>
      %cst_89 = arith.constant dense<0.000000e+00> : vector<16xf32>
      %151 = vector.multi_reduction <add>, %150, %cst_89 [1] : vector<16x128xf32> to vector<16xf32>
      %152 = vector.shape_cast %151 : vector<16xf32> to vector<16x1xf32>
      %c0_90 = arith.constant 0 : index
      %c0_91 = arith.constant 0 : index
      %153 = vector.load %arg11[%c0_90, %c0_91] : memref<1x1xf32, #tpu.memory_space<vmem>>, vector<1x1xf32>
      %154 = vector.broadcast %153 : vector<1x1xf32> to vector<16x1xf32>
      %155 = arith.addf %152, %154 : vector<16x1xf32>
      %c0_i32_92 = arith.constant 0 : i32
      %156 = vector.broadcast %c0_i32_92 : i32 to vector<16x128xi32>
      %157 = arith.cmpi eq, %76, %156 : vector<16x128xi32>
      %c1_i32_93 = arith.constant 1 : i32
      %158 = vector.broadcast %c1_i32_93 : i32 to vector<16x128xi32>
      %159 = arith.cmpi eq, %76, %158 : vector<16x128xi32>
      %cst_94 = arith.constant 0.000000e+00 : f32
      %160 = vector.shape_cast %155 : vector<16x1xf32> to vector<16x1xf32>
      %161 = vector.broadcast %160 : vector<16x1xf32> to vector<16x128xf32>
      %162 = vector.broadcast %cst_94 : f32 to vector<16x128xf32>
      %163 = arith.select %159, %161, %162 : vector<16x128xi1>, vector<16x128xf32>
      %164 = vector.shape_cast %149 : vector<16x1xf32> to vector<16x1xf32>
      %165 = vector.broadcast %164 : vector<16x1xf32> to vector<16x128xf32>
      %166 = arith.select %157, %165, %163 : vector<16x128xi1>, vector<16x128xf32>
      %c2_95 = arith.constant 2 : index
      %c0_96 = arith.constant 0 : index
      %c0_97 = arith.constant 0 : index
      %167 = vector.load %arg16[%c2_95, %c0_96, %c0_97] : memref<3x16x128xf32, #tpu.memory_space<vmem>>, vector<1x16x128xf32>
      %168 = vector.shape_cast %167 : vector<1x16x128xf32> to vector<16x128xf32>
      %169 = vector.shape_cast %166 : vector<16x128xf32> to vector<1x16x128xf32>
      tpu.vector_store %arg16[%c2_95, %c0_96, %c0_97], %169 {strides = array<i32>} : memref<3x16x128xf32, #tpu.memory_space<vmem>>, vector<1x16x128xf32>,
      %170 = arith.truncf %65 : vector<16x128xf32> to vector<16x128xbf16>
      %c0_98 = arith.constant 0 : index
      %c0_99 = arith.constant 0 : index
      %171 = vector.load %arg12[%c0_98, %c0_99] : memref<128x128xbf16, #tpu.memory_space<vmem>>, vector<128x128xbf16>
      %cst_100 = arith.constant dense<0.000000e+00> : vector<16x128xf32>
      %172 = tpu.matmul %170, %171, %cst_100 {dimension_numbers = #tpu.dot_dimension_numbers<[1], [0], [0], [1], [0, 0, 1, 1], [], []>} : vector<16x128xbf16>, vector<128x128xbf16>, vector<16x128xf32> -> vector<16x128xf32>
      %c0_101 = arith.constant 0 : index
      %c0_102 = arith.constant 0 : index
      %173 = vector.load %arg13[%c0_101, %c0_102] : memref<1x128xf32, #tpu.memory_space<vmem>>, vector<1x128xf32>
      %174 = vector.broadcast %173 : vector<1x128xf32> to vector<16x128xf32>
      %175 = arith.addf %172, %174 : vector<16x128xf32>
      %c0_103 = arith.constant 0 : index
      %c0_104 = arith.constant 0 : index
      %176 = vector.load %arg17[%c0_103, %c0_104] : memref<16x128xf32, #tpu.memory_space<vmem>>, vector<16x128xf32>
      tpu.vector_store %arg17[%c0_103, %c0_104], %175 {strides = array<i32>} : memref<16x128xf32, #tpu.memory_space<vmem>>, vector<16x128xf32>,
      %177 = arith.truncf %67 : vector<16x128xf32> to vector<16x128xbf16>
      %c0_105 = arith.constant 0 : index
      %c0_106 = arith.constant 0 : index
      %178 = vector.load %arg12[%c0_105, %c0_106] : memref<128x128xbf16, #tpu.memory_space<vmem>>, vector<128x128xbf16>
      %cst_107 = arith.constant dense<0.000000e+00> : vector<16x128xf32>
      %179 = tpu.matmul %177, %178, %cst_107 {dimension_numbers = #tpu.dot_dimension_numbers<[1], [0], [0], [1], [0, 0, 1, 1], [], []>} : vector<16x128xbf16>, vector<128x128xbf16>, vector<16x128xf32> -> vector<16x128xf32>
      %c0_108 = arith.constant 0 : index
      %c0_109 = arith.constant 0 : index
      %180 = vector.load %arg13[%c0_108, %c0_109] : memref<1x128xf32, #tpu.memory_space<vmem>>, vector<1x128xf32>
      %181 = vector.broadcast %180 : vector<1x128xf32> to vector<16x128xf32>
      %182 = arith.addf %179, %181 : vector<16x128xf32>
      %c0_110 = arith.constant 0 : index
      %c0_111 = arith.constant 0 : index
      %183 = vector.load %arg18[%c0_110, %c0_111] : memref<16x128xf32, #tpu.memory_space<vmem>>, vector<16x128xf32>
      tpu.vector_store %arg18[%c0_110, %c0_111], %182 {strides = array<i32>} : memref<16x128xf32, #tpu.memory_space<vmem>>, vector<16x128xf32>,
      %184 = tpu.iota {dimensions = array<i32: 1>} : vector<16x128xi32>
      %c32_i32 = arith.constant 32 : i32
      %185 = vector.broadcast %c32_i32 : i32 to vector<16x128xi32>
      %186 = arith.cmpi slt, %184, %185 : vector<16x128xi32>
      %cst_112 = arith.constant 1.11111116 : f32
      %187 = vector.broadcast %cst_112 : f32 to vector<16x128xf32>
      %188 = arith.mulf %67, %187 : vector<16x128xf32>
      %cst_113 = arith.constant -1.000000e+30 : f32
      %189 = vector.broadcast %cst_113 : f32 to vector<16x128xf32>
      %190 = arith.select %186, %188, %189 : vector<16x128xi1>, vector<16x128xf32>
      %cst_114 = arith.constant dense<0xFF800000> : vector<16xf32>
      %191 = vector.multi_reduction <maximumf>, %190, %cst_114 [1] : vector<16x128xf32> to vector<16xf32>
      %192 = vector.shape_cast %191 : vector<16xf32> to vector<16x1xf32>
      %193 = vector.broadcast %192 : vector<16x1xf32> to vector<16x128xf32>
      %194 = arith.subf %190, %193 : vector<16x128xf32>
      %195 = math.exp %194 : vector<16x128xf32>
      %cst_115 = arith.constant dense<0.000000e+00> : vector<16xf32>
      %196 = vector.multi_reduction <add>, %195, %cst_115 [1] : vector<16x128xf32> to vector<16xf32>
      %197 = vector.shape_cast %196 : vector<16xf32> to vector<16x1xf32>
      %198 = math.log %197 : vector<16x1xf32>
      %199 = vector.broadcast %198 : vector<16x1xf32> to vector<16x128xf32>
      %200 = arith.subf %194, %199 : vector<16x128xf32>
      %cst_116 = arith.constant 16.666666 : f32
      %201 = vector.broadcast %cst_116 : f32 to vector<16x128xf32>
      %202 = arith.mulf %65, %201 : vector<16x128xf32>
      %cst_117 = arith.constant -1.000000e+30 : f32
      %203 = vector.broadcast %cst_117 : f32 to vector<16x128xf32>
      %204 = arith.select %186, %202, %203 : vector<16x128xi1>, vector<16x128xf32>
      %cst_118 = arith.constant dense<0xFF800000> : vector<16xf32>
      %205 = vector.multi_reduction <maximumf>, %204, %cst_118 [1] : vector<16x128xf32> to vector<16xf32>
      %206 = vector.shape_cast %205 : vector<16xf32> to vector<16x1xf32>
      %207 = vector.broadcast %206 : vector<16x1xf32> to vector<16x128xf32>
      %208 = arith.subf %204, %207 : vector<16x128xf32>
      %209 = math.exp %208 : vector<16x128xf32>
      %cst_119 = arith.constant dense<0.000000e+00> : vector<16xf32>
      %210 = vector.multi_reduction <add>, %209, %cst_119 [1] : vector<16x128xf32> to vector<16xf32>
      %211 = vector.shape_cast %210 : vector<16xf32> to vector<16x1xf32>
      %212 = vector.broadcast %211 : vector<16x1xf32> to vector<16x128xf32>
      %213 = arith.divf %209, %212 : vector<16x128xf32>
      %214 = arith.mulf %213, %200 : vector<16x128xf32>
      %cst_120 = arith.constant 0.000000e+00 : f32
      %215 = vector.broadcast %cst_120 : f32 to vector<16x128xf32>
      %216 = arith.select %186, %214, %215 : vector<16x128xi1>, vector<16x128xf32>
      %cst_121 = arith.constant dense<0.000000e+00> : vector<16xf32>
      %217 = vector.multi_reduction <add>, %216, %cst_121 [1] : vector<16x128xf32> to vector<16xf32>
      %218 = vector.shape_cast %217 : vector<16xf32> to vector<16x1xf32>
      %cst_122 = arith.constant 0.000000e+00 : f32
      %219 = vector.broadcast %cst_122 : f32 to vector<16x1xf32>
      %220 = arith.subf %219, %218 : vector<16x1xf32>
      %cst_123 = arith.constant dense<0.000000e+00> : vector<1xf32>
      %221 = vector.multi_reduction <add>, %220, %cst_123 [0] : vector<16x1xf32> to vector<1xf32>
      %222 = vector.shape_cast %221 : vector<1xf32> to vector<1x1xf32>
      %cst_124 = arith.constant 1.600000e+01 : f32
      %223 = vector.broadcast %cst_124 : f32 to vector<1x1xf32>
      %224 = arith.divf %222, %223 : vector<1x1xf32>
      %cst_125 = arith.constant 1.11111116 : f32
      %225 = vector.broadcast %cst_125 : f32 to vector<16x128xf32>
      %226 = arith.mulf %65, %225 : vector<16x128xf32>
      %cst_126 = arith.constant -1.000000e+30 : f32
      %227 = vector.broadcast %cst_126 : f32 to vector<16x128xf32>
      %228 = arith.select %186, %226, %227 : vector<16x128xi1>, vector<16x128xf32>
      %cst_127 = arith.constant dense<0xFF800000> : vector<16xf32>
      %229 = vector.multi_reduction <maximumf>, %228, %cst_127 [1] : vector<16x128xf32> to vector<16xf32>
      %230 = vector.shape_cast %229 : vector<16xf32> to vector<16x1xf32>
      %231 = vector.broadcast %230 : vector<16x1xf32> to vector<16x128xf32>
      %232 = arith.subf %228, %231 : vector<16x128xf32>
      %233 = math.exp %232 : vector<16x128xf32>
      %cst_128 = arith.constant dense<0.000000e+00> : vector<16xf32>
      %234 = vector.multi_reduction <add>, %233, %cst_128 [1] : vector<16x128xf32> to vector<16xf32>
      %235 = vector.shape_cast %234 : vector<16xf32> to vector<16x1xf32>
      %236 = math.log %235 : vector<16x1xf32>
      %237 = vector.broadcast %236 : vector<16x1xf32> to vector<16x128xf32>
      %238 = arith.subf %232, %237 : vector<16x128xf32>
      %cst_129 = arith.constant 16.666666 : f32
      %239 = vector.broadcast %cst_129 : f32 to vector<16x128xf32>
      %240 = arith.mulf %67, %239 : vector<16x128xf32>
      %cst_130 = arith.constant -1.000000e+30 : f32
      %241 = vector.broadcast %cst_130 : f32 to vector<16x128xf32>
      %242 = arith.select %186, %240, %241 : vector<16x128xi1>, vector<16x128xf32>
      %cst_131 = arith.constant dense<0xFF800000> : vector<16xf32>
      %243 = vector.multi_reduction <maximumf>, %242, %cst_131 [1] : vector<16x128xf32> to vector<16xf32>
      %244 = vector.shape_cast %243 : vector<16xf32> to vector<16x1xf32>
      %245 = vector.broadcast %244 : vector<16x1xf32> to vector<16x128xf32>
      %246 = arith.subf %242, %245 : vector<16x128xf32>
      %247 = math.exp %246 : vector<16x128xf32>
      %cst_132 = arith.constant dense<0.000000e+00> : vector<16xf32>
      %248 = vector.multi_reduction <add>, %247, %cst_132 [1] : vector<16x128xf32> to vector<16xf32>
      %249 = vector.shape_cast %248 : vector<16xf32> to vector<16x1xf32>
      %250 = vector.broadcast %249 : vector<16x1xf32> to vector<16x128xf32>
      %251 = arith.divf %247, %250 : vector<16x128xf32>
      %252 = arith.mulf %251, %238 : vector<16x128xf32>
      %cst_133 = arith.constant 0.000000e+00 : f32
      %253 = vector.broadcast %cst_133 : f32 to vector<16x128xf32>
      %254 = arith.select %186, %252, %253 : vector<16x128xi1>, vector<16x128xf32>
      %cst_134 = arith.constant dense<0.000000e+00> : vector<16xf32>
      %255 = vector.multi_reduction <add>, %254, %cst_134 [1] : vector<16x128xf32> to vector<16xf32>
      %256 = vector.shape_cast %255 : vector<16xf32> to vector<16x1xf32>
      %cst_135 = arith.constant 0.000000e+00 : f32
      %257 = vector.broadcast %cst_135 : f32 to vector<16x1xf32>
      %258 = arith.subf %257, %256 : vector<16x1xf32>
      %cst_136 = arith.constant dense<0.000000e+00> : vector<1xf32>
      %259 = vector.multi_reduction <add>, %258, %cst_136 [0] : vector<16x1xf32> to vector<1xf32>
      %260 = vector.shape_cast %259 : vector<1xf32> to vector<1x1xf32>
      %cst_137 = arith.constant 1.600000e+01 : f32
      %261 = vector.broadcast %cst_137 : f32 to vector<1x1xf32>
      %262 = arith.divf %260, %261 : vector<1x1xf32>
      %263 = arith.addf %224, %262 : vector<1x1xf32>
      %cst_138 = arith.constant 5.000000e-01 : f32
      %264 = vector.broadcast %cst_138 : f32 to vector<1x1xf32>
      %265 = arith.mulf %263, %264 : vector<1x1xf32>
      %c0_139 = arith.constant 0 : index
      %c0_140 = arith.constant 0 : index
      %266 = vector.load %arg19[%c0_139, %c0_140] : memref<1x1xf32, #tpu.memory_space<vmem>>, vector<1x1xf32>
      tpu.vector_store %arg19[%c0_139, %c0_140], %265 {strides = array<i32>} : memref<1x1xf32, #tpu.memory_space<vmem>>, vector<1x1xf32>,
    } else {
    }
    return
  }
  func.func @transform_0(%arg0: i32) -> (i32, i32, i32) {
    %c0_i32 = arith.constant 0 : i32
    %c0_i32_0 = arith.constant 0 : i32
    %c0_i32_1 = arith.constant 0 : i32
    return %arg0, %c0_i32, %c0_i32_0 : i32, i32, i32
  }
  func.func @transform_1(%arg0: i32) -> (i32, i32) {
    %c0_i32 = arith.constant 0 : i32
    %c0_i32_0 = arith.constant 0 : i32
    %c0_i32_1 = arith.constant 0 : i32
    return %c0_i32, %c0_i32_0 : i32, i32
  }
  func.func @transform_2(%arg0: i32) -> (i32, i32) {
    %c0_i32 = arith.constant 0 : i32
    %c0_i32_0 = arith.constant 0 : i32
    %c0_i32_1 = arith.constant 0 : i32
    return %c0_i32, %c0_i32_0 : i32, i32
  }
  func.func @transform_3(%arg0: i32) -> (i32, i32) {
    %c0_i32 = arith.constant 0 : i32
    %c0_i32_0 = arith.constant 0 : i32
    %c0_i32_1 = arith.constant 0 : i32
    return %c0_i32, %c0_i32_0 : i32, i32
  }
  func.func @transform_4(%arg0: i32) -> (i32, i32) {
    %c0_i32 = arith.constant 0 : i32
    %c0_i32_0 = arith.constant 0 : i32
    %c0_i32_1 = arith.constant 0 : i32
    return %c0_i32, %c0_i32_0 : i32, i32
  }
  func.func @transform_5(%arg0: i32) -> (i32, i32) {
    %c0_i32 = arith.constant 0 : i32
    %c0_i32_0 = arith.constant 0 : i32
    %c0_i32_1 = arith.constant 0 : i32
    return %c0_i32, %c0_i32_0 : i32, i32
  }
  func.func @transform_6(%arg0: i32) -> (i32, i32) {
    %c0_i32 = arith.constant 0 : i32
    %c0_i32_0 = arith.constant 0 : i32
    %c0_i32_1 = arith.constant 0 : i32
    return %c0_i32, %c0_i32_0 : i32, i32
  }
  func.func @transform_7(%arg0: i32) -> (i32, i32) {
    %c0_i32 = arith.constant 0 : i32
    %c0_i32_0 = arith.constant 0 : i32
    %c0_i32_1 = arith.constant 0 : i32
    return %c0_i32, %c0_i32_0 : i32, i32
  }
  func.func @transform_8(%arg0: i32) -> (i32, i32) {
    %c0_i32 = arith.constant 0 : i32
    %c0_i32_0 = arith.constant 0 : i32
    %c0_i32_1 = arith.constant 0 : i32
    return %c0_i32, %c0_i32_0 : i32, i32
  }
  func.func @transform_9(%arg0: i32) -> (i32, i32) {
    %c0_i32 = arith.constant 0 : i32
    %c0_i32_0 = arith.constant 0 : i32
    %c0_i32_1 = arith.constant 0 : i32
    return %c0_i32, %c0_i32_0 : i32, i32
  }
  func.func @transform_10(%arg0: i32) -> (i32, i32) {
    %c0_i32 = arith.constant 0 : i32
    %c0_i32_0 = arith.constant 0 : i32
    %c0_i32_1 = arith.constant 0 : i32
    return %c0_i32, %c0_i32_0 : i32, i32
  }
  func.func @transform_11(%arg0: i32) -> (i32, i32) {
    %c0_i32 = arith.constant 0 : i32
    %c0_i32_0 = arith.constant 0 : i32
    %c0_i32_1 = arith.constant 0 : i32
    return %c0_i32, %c0_i32_0 : i32, i32
  }
  func.func @transform_12(%arg0: i32) -> (i32, i32) {
    %c0_i32 = arith.constant 0 : i32
    %c0_i32_0 = arith.constant 0 : i32
    %c0_i32_1 = arith.constant 0 : i32
    return %c0_i32, %c0_i32_0 : i32, i32
  }
  func.func @transform_13(%arg0: i32) -> (i32, i32) {
    %c0_i32 = arith.constant 0 : i32
    %c0_i32_0 = arith.constant 0 : i32
    %c0_i32_1 = arith.constant 0 : i32
    return %c0_i32, %c0_i32_0 : i32, i32
  }
  func.func @transform_14(%arg0: i32) -> (i32, i32) {
    %c0_i32 = arith.constant 0 : i32
    %c0_i32_0 = arith.constant 0 : i32
    %c0_i32_1 = arith.constant 0 : i32
    return %c0_i32, %c0_i32_0 : i32, i32
  }
  func.func @transform_15(%arg0: i32) -> (i32, i32, i32) {
    %c0_i32 = arith.constant 0 : i32
    %c0_i32_0 = arith.constant 0 : i32
    %c0_i32_1 = arith.constant 0 : i32
    %c0_i32_2 = arith.constant 0 : i32
    return %c0_i32, %c0_i32_0, %c0_i32_1 : i32, i32, i32
  }
  func.func @transform_16(%arg0: i32) -> (i32, i32) {
    %c0_i32 = arith.constant 0 : i32
    %c0_i32_0 = arith.constant 0 : i32
    %c0_i32_1 = arith.constant 0 : i32
    return %c0_i32, %c0_i32_0 : i32, i32
  }
  func.func @transform_17(%arg0: i32) -> (i32, i32) {
    %c0_i32 = arith.constant 0 : i32
    %c0_i32_0 = arith.constant 0 : i32
    %c0_i32_1 = arith.constant 0 : i32
    return %c0_i32, %c0_i32_0 : i32, i32
  }
  func.func @transform_18(%arg0: i32) -> (i32, i32) {
    %c0_i32 = arith.constant 0 : i32
    %c0_i32_0 = arith.constant 0 : i32
    %c0_i32_1 = arith.constant 0 : i32
    return %c0_i32, %c0_i32_0 : i32, i32
  }
}

</mosaic_0001>

<llo_original>
// kernel: tpu_custom_call.1
$region0: #{tpu_custom_call.1}
  #allocation0 [shape = 'u32[]', space=smem, size = 0x4, offset = 0x4, fixed_abs, tag = 'smem constant byte address 0x4 - core index']
  #allocation1 [shape = 'u32[72,128]{1,0:T(1,128)}', space=vmem, size = 0x9000, scoped, tag = 'internal scratch']
  #allocation2 [shape = 'f32[3,16,128]{2,1,0:T(8,128)}', space=vmem, size = 0x6000, scoped, tag = 'scratch operand']
  #allocation3 [shape = 'f32[3,16,128]{2,1,0:T(8,128)}', space=vmem, size = 0x6000, scoped, tag = 'scratch operand']
  #allocation4 [shape = 'f32[1,1]{1,0:T(1,128)S(1)}', space=vmem, size = 0x200, scoped, tag = 'scoped memory for tpu_custom_call.1']
  %s0 = inlined_call_operand.vmem [shape: bf16[3,16,128], index: 0, kind: input, shape index: {}]
  %s1 = inlined_call_operand.vmem [shape: bf16[16,16], index: 1, kind: input, shape index: {}]
  %s2 = inlined_call_operand.vmem [shape: bf16[16,16], index: 2, kind: input, shape index: {}]
  %s3 = inlined_call_operand.vmem [shape: f32[16,1], index: 3, kind: input, shape index: {}]
  %s4 = inlined_call_operand.vmem [shape: f32[16,1], index: 4, kind: input, shape index: {}]
  %s5 = inlined_call_operand.vmem [shape: f32[16,1], index: 5, kind: input, shape index: {}]
  %s6 = inlined_call_operand.hbm [shape: bf16[128,512], index: 6, kind: input, shape index: {}]
  %s7 = inlined_call_operand.hbm [shape: bf16[512,128], index: 7, kind: input, shape index: {}]
  %s8 = inlined_call_operand.hbm [shape: bf16[128,128], index: 8, kind: input, shape index: {}]
  %s9 = inlined_call_operand.hbm [shape: bf16[128,128], index: 9, kind: input, shape index: {}]
  %s10 = inlined_call_operand.<no memory space> [shape: f32[1,1], index: 10, kind: input, shape index: {}]
  %s11 = inlined_call_operand.hbm [shape: bf16[128,128], index: 11, kind: input, shape index: {}]
  %s12 = inlined_call_operand.vmem [shape: f32[1,128], index: 12, kind: input, shape index: {}]
  %s13 = inlined_call_operand.hbm [shape: f32[16,128], index: 13, kind: output, shape index: {0}]
  %s14 = inlined_call_operand.hbm [shape: f32[16,128], index: 14, kind: output, shape index: {1}]
  %s15 = inlined_call_operand.hbm [shape: f32[3,16,128], index: 15, kind: output, shape index: {2}]
  %s16 = inlined_call_operand.hbm [shape: f32[16,128], index: 16, kind: output, shape index: {3}]
  %s17 = inlined_call_operand.hbm [shape: f32[16,128], index: 17, kind: output, shape index: {4}]
  %s18 = inlined_call_operand.hbm [shape: f32[1,1], index: 18, kind: output, shape index: {5}]
  %19 = xla_tuple %s13, %s14, %s15, %s16, %s17, %s18
  %s20 = sld [smem:[#allocation0]]
  $region165: #{tpu_custom_call.1} parent=0
    _
  %s22 = ssub.s32 1, %s20
  %s23 = scalar_select 0, %s22, %s20
  %v24 = vstv %s10
  %25 = vst [vmem:[#allocation4] sm:$0x1] %v24
  $region1: #{tpu_custom_call.1} parent=0
    #allocation5 [shape = 'u8[131072]{0}', space=vmem, size = 0x20000, scoped, tag = 'input window, operand 6, single buffered']
    #allocation6 [shape = 's32[2]{0}', space=sflag, size = 0x8, scoped, tag = 'scoped memory for tpu_custom_call.1']
    #allocation7 [shape = 's32[2]{0}', space=sflag, size = 0x8, scoped, tag = 'scoped memory for tpu_custom_call.1']
    #allocation8 [shape = 'u8[131072]{0}', space=vmem, size = 0x20000, scoped, tag = 'input window, operand 7, single buffered']
    #allocation9 [shape = 's32[1]{0}', space=sflag, size = 0x4, scoped, tag = 'scoped memory for tpu_custom_call.1']
    #allocation10 [shape = 'u8[32768]{0}', space=vmem, size = 0x8000, scoped, tag = 'input window, operand 8, single buffered']
    #allocation11 [shape = 'u8[32768]{0}', space=vmem, size = 0x8000, scoped, tag = 'input window, operand 9, single buffered']
    #allocation12 [shape = 's32[1]{0}', space=sflag, size = 0x4, scoped, tag = 'scoped memory for tpu_custom_call.1']
    #allocation13 [shape = 'u8[32768]{0}', space=vmem, size = 0x8000, scoped, tag = 'input window, operand 11, single buffered']
    #allocation14 [shape = 'u8[8192]{0}', space=vmem, size = 0x2000, scoped, tag = 'output window, operand 0, single buffered']
    #allocation15 [shape = 'u8[8192]{0}', space=vmem, size = 0x2000, scoped, tag = 'output window, operand 1, single buffered']
    #allocation16 [shape = 's32[1]{0}', space=sflag, size = 0x4, scoped, tag = 'scoped memory for tpu_custom_call.1']
    #allocation17 [shape = 'u8[24576]{0}', space=vmem, size = 0x6000, scoped, tag = 'output window, operand 2, single buffered']
    #allocation18 [shape = 'u8[8192]{0}', space=vmem, size = 0x2000, scoped, tag = 'output window, operand 3, single buffered']
    #allocation19 [shape = 's32[1]{0}', space=sflag, size = 0x4, scoped, tag = 'scoped memory for tpu_custom_call.1']
    #allocation20 [shape = 'u8[8192]{0}', space=vmem, size = 0x2000, scoped, tag = 'output window, operand 4, single buffered']
    #allocation21 [shape = 'u8[512]{0}', space=vmem, size = 0x400, scoped, tag = 'output window, operand 5, single buffered']
    #allocation22 [shape = 's32[1]{0}', space=sflag, size = 0x4, scoped, tag = 'scoped memory for tpu_custom_call.1']
    %26 = vsyncpa [#allocation6], 0
    %27 = vsyncpa [#allocation9], 0
    %28 = vsyncpa [#allocation12], 0
    %29 = vsyncpa [#allocation7], 0
    %30 = vsyncpa [#allocation16], 0
    %31 = vsyncpa [#allocation19], 0
    %32 = vsyncpa [#allocation22], 0
    loop: start=0, step=1, limit=5
    $region2: #{tpu_custom_call.1} parent=1 // loop_pre_header
      _
    $region3: #{tpu_custom_call.1} parent=1 // loop_header
      %s34 = sphi 0, %s38
      %p35 = scmp.ge.s32.totalorder %s34, 5
      %s44 = sphi 0, %s46
      %s47 = sphi 0, %s44
      %s48 = sphi 0, %s47
      %s64 = sphi 0, %s48
      %s68 = sphi 0, %s68
      %s70 = sphi 0, %s68
      %s71 = sphi 0, %s70
      %s85 = sphi 0, %s71
      %s89 = sphi 0, %s89
      %s91 = sphi 0, %s89
      %s92 = sphi 0, %s91
      %s106 = sphi 0, %s92
      %s110 = sphi 0, %s110
      %s112 = sphi 0, %s110
      %s113 = sphi 0, %s112
      %s127 = sphi 0, %s113
      %s131 = sphi 0, %s131
      %s133 = sphi 0, %s131
      %s134 = sphi 0, %s133
      %s148 = sphi 0, %s134
      %s152 = sphi 0, %s152
      %s154 = sphi 0, %s152
      %s155 = sphi 0, %s154
      %s169 = sphi 0, %s155
      %s173 = sphi 0, %s173
      %s175 = sphi 0, %s173
      %s176 = sphi 0, %s175
      %s190 = sphi 0, %s176
      %s194 = sphi 0, %s194
      %s196 = sphi 0, %s194
      %s197 = sphi 0, %s196
      %s211 = sphi 0, %s197
      %s215 = sphi 0, %s215
      %s217 = sphi 0, %s215
      %s218 = sphi 0, %s217
      %s232 = sphi 0, %s218
      %s236 = sphi 0, %s236
      %s238 = sphi 0, %s236
      %s239 = sphi 0, %s238
      %s253 = sphi 0, %s239
      %s257 = sphi 0, %s257
      %s259 = sphi 0, %s257
      %s260 = sphi 0, %s259
      %s274 = sphi 0, %s260
      %s278 = sphi 0, %s278
      %s280 = sphi 0, %s278
      %s281 = sphi 0, %s280
      %s295 = sphi 0, %s281
      %s299 = sphi 0, %s299
      %s301 = sphi 0, %s299
      %s302 = sphi 0, %s301
      %s316 = sphi 0, %s302
      %s320 = sphi 0, %s320
      %s322 = sphi 0, %s320
      %s323 = sphi 0, %s322
      %s337 = sphi 0, %s323
      %s341 = sphi 0, %s341
      %s343 = sphi 0, %s341
      %s344 = sphi 0, %s343
      %s358 = sphi 0, %s344
      %s362 = sphi 0, %s362
      %s364 = sphi 0, %s362
      %s365 = sphi 0, %s364
      %s379 = sphi 0, %s365
      %s383 = sphi 0, %s383
      %s385 = sphi 0, %s383
      %s386 = sphi 0, %s385
      %s400 = sphi 0, %s386
      %s404 = sphi 0, %s404
      %s406 = sphi 0, %s404
      %s407 = sphi 0, %s406
      %s421 = sphi 0, %s407
      %s425 = sphi 0, %s425
      %s427 = sphi 0, %s425
      %s428 = sphi 0, %s427
      %s442 = sphi 0, %s428
    $region4: #{tpu_custom_call.1} parent=1 // loop_header_branch
      %37 = sbr.rel (%p35) target = $region8
    $region5: #{tpu_custom_call.1} parent=1 // loop_body
      %s39 = ssub.s32 %s34, 1
      %s40 = ssub.s32 %s34, 2
      %s41 = sadd.s32 %s34, 1
      %s42 = ssub.s32 %s34, %s41
      %p43 = scmp.eq.s32.totalorder %s42, 0
      %s45 = sadd.s32 %s44, 1
      %s46 = scalar_select %p43, %s44, %s45
      %p49 = pneg %p43
      %p50 = scmp.eq.s32.totalorder %s34, 2
      %p51 = por %p49, %p50
      %p52 = scmp.ne.s32.totalorder %s44, %s47
      %p53 = scmp.eq.s32.totalorder %s34, 0
      %p54 = por %p52, %p53
      %p55 = scmp.ne.s32.totalorder %s44, %s47
      %p56 = scmp.eq.s32.totalorder %s39, 2
      %p57 = por %p55, %p56
      %p58 = scmp.ne.s32.totalorder %s47, %s48
      %p59 = scmp.eq.s32.totalorder %s39, 0
      %p60 = por %p58, %p59
      %p61 = scmp.ne.s32.totalorder %s47, %s48
      %p62 = scmp.eq.s32.totalorder %s40, 2
      %p63 = por %p61, %p62
      %p65 = scmp.ne.s32.totalorder %s48, %s64
      %p66 = scmp.eq.s32.totalorder %s40, 0
      %p67 = por %p65, %p66
      %s69 = sadd.s32 %s68, 1
      %p72 = scmp.eq.s32.totalorder %s34, 2
      %p73 = scmp.ne.s32.totalorder %s68, %s70
      %p74 = scmp.eq.s32.totalorder %s34, 0
      %p75 = por %p73, %p74
      %p76 = scmp.ne.s32.totalorder %s68, %s70
      %p77 = scmp.eq.s32.totalorder %s39, 2
      %p78 = por %p76, %p77
      %p79 = scmp.ne.s32.totalorder %s70, %s71
      %p80 = scmp.eq.s32.totalorder %s39, 0
      %p81 = por %p79, %p80
      %p82 = scmp.ne.s32.totalorder %s70, %s71
      %p83 = scmp.eq.s32.totalorder %s40, 2
      %p84 = por %p82, %p83
      %p86 = scmp.ne.s32.totalorder %s71, %s85
      %p87 = scmp.eq.s32.totalorder %s40, 0
      %p88 = por %p86, %p87
      %s90 = sadd.s32 %s89, 1
      %p93 = scmp.eq.s32.totalorder %s34, 2
      %p94 = scmp.ne.s32.totalorder %s89, %s91
      %p95 = scmp.eq.s32.totalorder %s34, 0
      %p96 = por %p94, %p95
      %p97 = scmp.ne.s32.totalorder %s89, %s91
      %p98 = scmp.eq.s32.totalorder %s39, 2
      %p99 = por %p97, %p98
      %p100 = scmp.ne.s32.totalorder %s91, %s92
      %p101 = scmp.eq.s32.totalorder %s39, 0
      %p102 = por %p100, %p101
      %p103 = scmp.ne.s32.totalorder %s91, %s92
      %p104 = scmp.eq.s32.totalorder %s40, 2
      %p105 = por %p103, %p104
      %p107 = scmp.ne.s32.totalorder %s92, %s106
      %p108 = scmp.eq.s32.totalorder %s40, 0
      %p109 = por %p107, %p108
      %s111 = sadd.s32 %s110, 1
      %p114 = scmp.eq.s32.totalorder %s34, 2
      %p115 = scmp.ne.s32.totalorder %s110, %s112
      %p116 = scmp.eq.s32.totalorder %s34, 0
      %p117 = por %p115, %p116
      %p118 = scmp.ne.s32.totalorder %s110, %s112
      %p119 = scmp.eq.s32.totalorder %s39, 2
      %p120 = por %p118, %p119
      %p121 = scmp.ne.s32.totalorder %s112, %s113
      %p122 = scmp.eq.s32.totalorder %s39, 0
      %p123 = por %p121, %p122
      %p124 = scmp.ne.s32.totalorder %s112, %s113
      %p125 = scmp.eq.s32.totalorder %s40, 2
      %p126 = por %p124, %p125
      %p128 = scmp.ne.s32.totalorder %s113, %s127
      %p129 = scmp.eq.s32.totalorder %s40, 0
      %p130 = por %p128, %p129
      %s132 = sadd.s32 %s131, 1
      %p135 = scmp.eq.s32.totalorder %s34, 2
      %p136 = scmp.ne.s32.totalorder %s131, %s133
      %p137 = scmp.eq.s32.totalorder %s34, 0
      %p138 = por %p136, %p137
      %p139 = scmp.ne.s32.totalorder %s131, %s133
      %p140 = scmp.eq.s32.totalorder %s39, 2
      %p141 = por %p139, %p140
      %p142 = scmp.ne.s32.totalorder %s133, %s134
      %p143 = scmp.eq.s32.totalorder %s39, 0
      %p144 = por %p142, %p143
      %p145 = scmp.ne.s32.totalorder %s133, %s134
      %p146 = scmp.eq.s32.totalorder %s40, 2
      %p147 = por %p145, %p146
      %p149 = scmp.ne.s32.totalorder %s134, %s148
      %p150 = scmp.eq.s32.totalorder %s40, 0
      %p151 = por %p149, %p150
      %s153 = sadd.s32 %s152, 1
      %p156 = scmp.eq.s32.totalorder %s34, 2
      %p157 = scmp.ne.s32.totalorder %s152, %s154
      %p158 = scmp.eq.s32.totalorder %s34, 0
      %p159 = por %p157, %p158
      %p160 = scmp.ne.s32.totalorder %s152, %s154
      %p161 = scmp.eq.s32.totalorder %s39, 2
      %p162 = por %p160, %p161
      %p163 = scmp.ne.s32.totalorder %s154, %s155
      %p164 = scmp.eq.s32.totalorder %s39, 0
      %p165 = por %p163, %p164
      %p166 = scmp.ne.s32.totalorder %s154, %s155
      %p167 = scmp.eq.s32.totalorder %s40, 2
      %p168 = por %p166, %p167
      %p170 = scmp.ne.s32.totalorder %s155, %s169
      %p171 = scmp.eq.s32.totalorder %s40, 0
      %p172 = por %p170, %p171
      %s174 = sadd.s32 %s173, 1
      %p177 = scmp.eq.s32.totalorder %s34, 2
      %p178 = scmp.ne.s32.totalorder %s173, %s175
      %p179 = scmp.eq.s32.totalorder %s34, 0
      %p180 = por %p178, %p179
      %p181 = scmp.ne.s32.totalorder %s173, %s175
      %p182 = scmp.eq.s32.totalorder %s39, 2
      %p183 = por %p181, %p182
      %p184 = scmp.ne.s32.totalorder %s175, %s176
      %p185 = scmp.eq.s32.totalorder %s39, 0
      %p186 = por %p184, %p185
      %p187 = scmp.ne.s32.totalorder %s175, %s176
      %p188 = scmp.eq.s32.totalorder %s40, 2
      %p189 = por %p187, %p188
      %p191 = scmp.ne.s32.totalorder %s176, %s190
      %p192 = scmp.eq.s32.totalorder %s40, 0
      %p193 = por %p191, %p192
      %s195 = sadd.s32 %s194, 1
      %p198 = scmp.eq.s32.totalorder %s34, 2
      %p199 = scmp.ne.s32.totalorder %s194, %s196
      %p200 = scmp.eq.s32.totalorder %s34, 0
      %p201 = por %p199, %p200
      %p202 = scmp.ne.s32.totalorder %s194, %s196
      %p203 = scmp.eq.s32.totalorder %s39, 2
      %p204 = por %p202, %p203
      %p205 = scmp.ne.s32.totalorder %s196, %s197
      %p206 = scmp.eq.s32.totalorder %s39, 0
      %p207 = por %p205, %p206
      %p208 = scmp.ne.s32.totalorder %s196, %s197
      %p209 = scmp.eq.s32.totalorder %s40, 2
      %p210 = por %p208, %p209
      %p212 = scmp.ne.s32.totalorder %s197, %s211
      %p213 = scmp.eq.s32.totalorder %s40, 0
      %p214 = por %p212, %p213
      %s216 = sadd.s32 %s215, 1
      %p219 = scmp.eq.s32.totalorder %s34, 2
      %p220 = scmp.ne.s32.totalorder %s215, %s217
      %p221 = scmp.eq.s32.totalorder %s34, 0
      %p222 = por %p220, %p221
      %p223 = scmp.ne.s32.totalorder %s215, %s217
      %p224 = scmp.eq.s32.totalorder %s39, 2
      %p225 = por %p223, %p224
      %p226 = scmp.ne.s32.totalorder %s217, %s218
      %p227 = scmp.eq.s32.totalorder %s39, 0
      %p228 = por %p226, %p227
      %p229 = scmp.ne.s32.totalorder %s217, %s218
      %p230 = scmp.eq.s32.totalorder %s40, 2
      %p231 = por %p229, %p230
      %p233 = scmp.ne.s32.totalorder %s218, %s232
      %p234 = scmp.eq.s32.totalorder %s40, 0
      %p235 = por %p233, %p234
      %s237 = sadd.s32 %s236, 1
      %p240 = scmp.eq.s32.totalorder %s34, 2
      %p241 = scmp.ne.s32.totalorder %s236, %s238
      %p242 = scmp.eq.s32.totalorder %s34, 0
      %p243 = por %p241, %p242
      %p244 = scmp.ne.s32.totalorder %s236, %s238
      %p245 = scmp.eq.s32.totalorder %s39, 2
      %p246 = por %p244, %p245
      %p247 = scmp.ne.s32.totalorder %s238, %s239
      %p248 = scmp.eq.s32.totalorder %s39, 0
      %p249 = por %p247, %p248
      %p250 = scmp.ne.s32.totalorder %s238, %s239
      %p251 = scmp.eq.s32.totalorder %s40, 2
      %p252 = por %p250, %p251
      %p254 = scmp.ne.s32.totalorder %s239, %s253
      %p255 = scmp.eq.s32.totalorder %s40, 0
      %p256 = por %p254, %p255
      %s258 = sadd.s32 %s257, 1
      %p261 = scmp.eq.s32.totalorder %s34, 2
      %p262 = scmp.ne.s32.totalorder %s257, %s259
      %p263 = scmp.eq.s32.totalorder %s34, 0
      %p264 = por %p262, %p263
      %p265 = scmp.ne.s32.totalorder %s257, %s259
      %p266 = scmp.eq.s32.totalorder %s39, 2
      %p267 = por %p265, %p266
      %p268 = scmp.ne.s32.totalorder %s259, %s260
      %p269 = scmp.eq.s32.totalorder %s39, 0
      %p270 = por %p268, %p269
      %p271 = scmp.ne.s32.totalorder %s259, %s260
      %p272 = scmp.eq.s32.totalorder %s40, 2
      %p273 = por %p271, %p272
      %p275 = scmp.ne.s32.totalorder %s260, %s274
      %p276 = scmp.eq.s32.totalorder %s40, 0
      %p277 = por %p275, %p276
      %s279 = sadd.s32 %s278, 1
      %p282 = scmp.eq.s32.totalorder %s34, 2
      %p283 = scmp.ne.s32.totalorder %s278, %s280
      %p284 = scmp.eq.s32.totalorder %s34, 0
      %p285 = por %p283, %p284
      %p286 = scmp.ne.s32.totalorder %s278, %s280
      %p287 = scmp.eq.s32.totalorder %s39, 2
      %p288 = por %p286, %p287
      %p289 = scmp.ne.s32.totalorder %s280, %s281
      %p290 = scmp.eq.s32.totalorder %s39, 0
      %p291 = por %p289, %p290
      %p292 = scmp.ne.s32.totalorder %s280, %s281
      %p293 = scmp.eq.s32.totalorder %s40, 2
      %p294 = por %p292, %p293
      %p296 = scmp.ne.s32.totalorder %s281, %s295
      %p297 = scmp.eq.s32.totalorder %s40, 0
      %p298 = por %p296, %p297
      %s300 = sadd.s32 %s299, 1
      %p303 = scmp.eq.s32.totalorder %s34, 2
      %p304 = scmp.ne.s32.totalorder %s299, %s301
      %p305 = scmp.eq.s32.totalorder %s34, 0
      %p306 = por %p304, %p305
      %p307 = scmp.ne.s32.totalorder %s299, %s301
      %p308 = scmp.eq.s32.totalorder %s39, 2
      %p309 = por %p307, %p308
      %p310 = scmp.ne.s32.totalorder %s301, %s302
      %p311 = scmp.eq.s32.totalorder %s39, 0
      %p312 = por %p310, %p311
      %p313 = scmp.ne.s32.totalorder %s301, %s302
      %p314 = scmp.eq.s32.totalorder %s40, 2
      %p315 = por %p313, %p314
      %p317 = scmp.ne.s32.totalorder %s302, %s316
      %p318 = scmp.eq.s32.totalorder %s40, 0
      %p319 = por %p317, %p318
      %s321 = sadd.s32 %s320, 1
      %p324 = scmp.eq.s32.totalorder %s34, 2
      %p325 = scmp.ne.s32.totalorder %s320, %s322
      %p326 = scmp.eq.s32.totalorder %s34, 0
      %p327 = por %p325, %p326
      %p328 = scmp.ne.s32.totalorder %s320, %s322
      %p329 = scmp.eq.s32.totalorder %s39, 2
      %p330 = por %p328, %p329
      %p331 = scmp.ne.s32.totalorder %s322, %s323
      %p332 = scmp.eq.s32.totalorder %s39, 0
      %p333 = por %p331, %p332
      %p334 = scmp.ne.s32.totalorder %s322, %s323
      %p335 = scmp.eq.s32.totalorder %s40, 2
      %p336 = por %p334, %p335
      %p338 = scmp.ne.s32.totalorder %s323, %s337
      %p339 = scmp.eq.s32.totalorder %s40, 0
      %p340 = por %p338, %p339
      %s342 = sadd.s32 %s341, 1
      %p345 = scmp.eq.s32.totalorder %s34, 2
      %p346 = scmp.ne.s32.totalorder %s341, %s343
      %p347 = scmp.eq.s32.totalorder %s34, 0
      %p348 = por %p346, %p347
      %p349 = scmp.ne.s32.totalorder %s341, %s343
      %p350 = scmp.eq.s32.totalorder %s39, 2
      %p351 = por %p349, %p350
      %p352 = scmp.ne.s32.totalorder %s343, %s344
      %p353 = scmp.eq.s32.totalorder %s39, 0
      %p354 = por %p352, %p353
      %p355 = scmp.ne.s32.totalorder %s343, %s344
      %p356 = scmp.eq.s32.totalorder %s40, 2
      %p357 = por %p355, %p356
      %p359 = scmp.ne.s32.totalorder %s344, %s358
      %p360 = scmp.eq.s32.totalorder %s40, 0
      %p361 = por %p359, %p360
      %s363 = sadd.s32 %s362, 1
      %p366 = scmp.eq.s32.totalorder %s34, 2
      %p367 = scmp.ne.s32.totalorder %s362, %s364
      %p368 = scmp.eq.s32.totalorder %s34, 0
      %p369 = por %p367, %p368
      %p370 = scmp.ne.s32.totalorder %s362, %s364
      %p371 = scmp.eq.s32.totalorder %s39, 2
      %p372 = por %p370, %p371
      %p373 = scmp.ne.s32.totalorder %s364, %s365
      %p374 = scmp.eq.s32.totalorder %s39, 0
      %p375 = por %p373, %p374
      %p376 = scmp.ne.s32.totalorder %s364, %s365
      %p377 = scmp.eq.s32.totalorder %s40, 2
      %p378 = por %p376, %p377
      %p380 = scmp.ne.s32.totalorder %s365, %s379
      %p381 = scmp.eq.s32.totalorder %s40, 0
      %p382 = por %p380, %p381
      %s384 = sadd.s32 %s383, 1
      %p387 = scmp.eq.s32.totalorder %s34, 2
      %p388 = scmp.ne.s32.totalorder %s383, %s385
      %p389 = scmp.eq.s32.totalorder %s34, 0
      %p390 = por %p388, %p389
      %p391 = scmp.ne.s32.totalorder %s383, %s385
      %p392 = scmp.eq.s32.totalorder %s39, 2
      %p393 = por %p391, %p392
      %p394 = scmp.ne.s32.totalorder %s385, %s386
      %p395 = scmp.eq.s32.totalorder %s39, 0
      %p396 = por %p394, %p395
      %p397 = scmp.ne.s32.totalorder %s385, %s386
      %p398 = scmp.eq.s32.totalorder %s40, 2
      %p399 = por %p397, %p398
      %p401 = scmp.ne.s32.totalorder %s386, %s400
      %p402 = scmp.eq.s32.totalorder %s40, 0
      %p403 = por %p401, %p402
      %s405 = sadd.s32 %s404, 1
      %p408 = scmp.eq.s32.totalorder %s34, 2
      %p409 = scmp.ne.s32.totalorder %s404, %s406
      %p410 = scmp.eq.s32.totalorder %s34, 0
      %p411 = por %p409, %p410
      %p412 = scmp.ne.s32.totalorder %s404, %s406
      %p413 = scmp.eq.s32.totalorder %s39, 2
      %p414 = por %p412, %p413
      %p415 = scmp.ne.s32.totalorder %s406, %s407
      %p416 = scmp.eq.s32.totalorder %s39, 0
      %p417 = por %p415, %p416
      %p418 = scmp.ne.s32.totalorder %s406, %s407
      %p419 = scmp.eq.s32.totalorder %s40, 2
      %p420 = por %p418, %p419
      %p422 = scmp.ne.s32.totalorder %s407, %s421
      %p423 = scmp.eq.s32.totalorder %s40, 0
      %p424 = por %p422, %p423
      %s426 = sadd.s32 %s425, 1
      %p429 = scmp.eq.s32.totalorder %s34, 2
      %p430 = scmp.ne.s32.totalorder %s425, %s427
      %p431 = scmp.eq.s32.totalorder %s34, 0
      %p432 = por %p430, %p431
      %p433 = scmp.ne.s32.totalorder %s425, %s427
      %p434 = scmp.eq.s32.totalorder %s39, 2
      %p435 = por %p433, %p434
      %p436 = scmp.ne.s32.totalorder %s427, %s428
      %p437 = scmp.eq.s32.totalorder %s39, 0
      %p438 = por %p436, %p437
      %p439 = scmp.ne.s32.totalorder %s427, %s428
      %p440 = scmp.eq.s32.totalorder %s40, 2
      %p441 = por %p439, %p440
      %p443 = scmp.ne.s32.totalorder %s428, %s442
      %p444 = scmp.eq.s32.totalorder %s40, 0
      %p445 = por %p443, %p444
      %p446 = scmp.le.s32.totalorder 1, %s34
      %p447 = scmp.lt.s32.totalorder %s34, 4
      %p448 = pnand %p446, %p447
      %p449 = pneg %p448
      // Predicated region
      $region9: #{tpu_custom_call.1} parent=5 // pred_check
        _
      $region10: #{tpu_custom_call.1} parent=5 // pred_check_branch
        %451 = sbr.rel (%p448) target = $region12
      $region11: #{tpu_custom_call.1} parent=5 // pred_region
        %s452 = ssub.s32 %s34, 1
        // Predicated region
        $region13: #{tpu_custom_call.1} parent=11 // pred_check
          %p453 = pneg %p81
        $region14: #{tpu_custom_call.1} parent=11 // pred_check_branch
          %455 = sbr.rel (%p453) target = $region16
        $region15: #{tpu_custom_call.1} parent=11 // pred_region
          _
        $region16: #{tpu_custom_call.1} parent=11 // pred_fallthru
          _
        // Predicated region
        $region17: #{tpu_custom_call.1} parent=11 // pred_check
          %p456 = pneg %p102
        $region18: #{tpu_custom_call.1} parent=11 // pred_check_branch
          %458 = sbr.rel (%p456) target = $region20
        $region19: #{tpu_custom_call.1} parent=11 // pred_region
          _
        $region20: #{tpu_custom_call.1} parent=11 // pred_fallthru
          _
        // Predicated region
        $region21: #{tpu_custom_call.1} parent=11 // pred_check
          %p459 = pneg %p123
        $region22: #{tpu_custom_call.1} parent=11 // pred_check_branch
          %461 = sbr.rel (%p459) target = $region24
        $region23: #{tpu_custom_call.1} parent=11 // pred_region
          _
        $region24: #{tpu_custom_call.1} parent=11 // pred_fallthru
          _
        // Predicated region
        $region25: #{tpu_custom_call.1} parent=11 // pred_check
          %p462 = pneg %p144
        $region26: #{tpu_custom_call.1} parent=11 // pred_check_branch
          %464 = sbr.rel (%p462) target = $region28
        $region27: #{tpu_custom_call.1} parent=11 // pred_region
          _
        $region28: #{tpu_custom_call.1} parent=11 // pred_fallthru
          _
        // Predicated region
        $region29: #{tpu_custom_call.1} parent=11 // pred_check
          %p465 = pneg %p165
        $region30: #{tpu_custom_call.1} parent=11 // pred_check_branch
          %467 = sbr.rel (%p465) target = $region32
        $region31: #{tpu_custom_call.1} parent=11 // pred_region
          _
        $region32: #{tpu_custom_call.1} parent=11 // pred_fallthru
          _
        // Predicated region
        $region33: #{tpu_custom_call.1} parent=11 // pred_check
          %p468 = pneg %p186
        $region34: #{tpu_custom_call.1} parent=11 // pred_check_branch
          %470 = sbr.rel (%p468) target = $region36
        $region35: #{tpu_custom_call.1} parent=11 // pred_region
          %472 = vsyncadd [#allocation6], 0
          %s473 = sshll.u32 %s6, 4
          %s474 = int_to_ptr.hbm [resolvable:$true] %s473
          %s475 = sshll.u32 [#allocation5], 4
          %s476 = int_to_ptr.vmem [resolvable:$true] %s475
          %481 = dma.hbm_to_vmem [thread:$0]  %s474, 4096, %s476, [#allocation6], 256, 256, 16
        $region36: #{tpu_custom_call.1} parent=11 // pred_fallthru
          _
        // Predicated region
        $region37: #{tpu_custom_call.1} parent=11 // pred_check
          %p482 = pneg %p207
        $region38: #{tpu_custom_call.1} parent=11 // pred_check_branch
          %484 = sbr.rel (%p482) target = $region40
        $region39: #{tpu_custom_call.1} parent=11 // pred_region
          %486 = vsyncadd [#allocation9], 0
          %s487 = sshll.u32 %s7, 4
          %s488 = int_to_ptr.hbm [resolvable:$true] %s487
          %s489 = sshll.u32 [#allocation8], 4
          %s490 = int_to_ptr.vmem [resolvable:$true] %s489
          %495 = dma.hbm_to_vmem [thread:$0]  %s488, 4096, %s490, [#allocation9], 64, 64, 4
        $region40: #{tpu_custom_call.1} parent=11 // pred_fallthru
          _
        // Predicated region
        $region41: #{tpu_custom_call.1} parent=11 // pred_check
          %p496 = pneg %p228
        $region42: #{tpu_custom_call.1} parent=11 // pred_check_branch
          %498 = sbr.rel (%p496) target = $region44
        $region43: #{tpu_custom_call.1} parent=11 // pred_region
          %500 = vsyncadd [#allocation9], 0
          %s501 = sshll.u32 %s8, 4
          %s502 = int_to_ptr.hbm [resolvable:$true] %s501
          %s503 = sshll.u32 [#allocation10], 4
          %s504 = int_to_ptr.vmem [resolvable:$true] %s503
          %509 = dma.hbm_to_vmem [thread:$0]  %s502, 1024, %s504, [#allocation9], 64, 64, 4
        $region44: #{tpu_custom_call.1} parent=11 // pred_fallthru
          _
        // Predicated region
        $region45: #{tpu_custom_call.1} parent=11 // pred_check
          %p510 = pneg %p249
        $region46: #{tpu_custom_call.1} parent=11 // pred_check_branch
          %512 = sbr.rel (%p510) target = $region48
        $region47: #{tpu_custom_call.1} parent=11 // pred_region
          %514 = vsyncadd [#allocation12], 0
          %s515 = sshll.u32 %s9, 4
          %s516 = int_to_ptr.hbm [resolvable:$true] %s515
          %s517 = sshll.u32 [#allocation11], 4
          %s518 = int_to_ptr.vmem [resolvable:$true] %s517
          %523 = dma.hbm_to_vmem [thread:$0]  %s516, 1024, %s518, [#allocation12], 64, 64, 4
        $region48: #{tpu_custom_call.1} parent=11 // pred_fallthru
          _
        // Predicated region
        $region49: #{tpu_custom_call.1} parent=11 // pred_check
          %p524 = pneg %p270
        $region50: #{tpu_custom_call.1} parent=11 // pred_check_branch
          %526 = sbr.rel (%p524) target = $region52
        $region51: #{tpu_custom_call.1} parent=11 // pred_region
          _
        $region52: #{tpu_custom_call.1} parent=11 // pred_fallthru
          _
        // Predicated region
        $region53: #{tpu_custom_call.1} parent=11 // pred_check
          %p527 = pneg %p291
        $region54: #{tpu_custom_call.1} parent=11 // pred_check_branch
          %529 = sbr.rel (%p527) target = $region56
        $region55: #{tpu_custom_call.1} parent=11 // pred_region
          %531 = vsyncadd [#allocation12], 0
          %s532 = sshll.u32 %s11, 4
          %s533 = int_to_ptr.hbm [resolvable:$true] %s532
          %s534 = sshll.u32 [#allocation13], 4
          %s535 = int_to_ptr.vmem [resolvable:$true] %s534
          %540 = dma.hbm_to_vmem [thread:$0]  %s533, 1024, %s535, [#allocation12], 64, 64, 4
        $region56: #{tpu_custom_call.1} parent=11 // pred_fallthru
          _
        // Predicated region
        $region57: #{tpu_custom_call.1} parent=11 // pred_check
          %p541 = pneg %p312
        $region58: #{tpu_custom_call.1} parent=11 // pred_check_branch
          %543 = sbr.rel (%p541) target = $region60
        $region59: #{tpu_custom_call.1} parent=11 // pred_region
          _
        $region60: #{tpu_custom_call.1} parent=11 // pred_fallthru
          _
      $region12: #{tpu_custom_call.1} parent=5 // pred_fallthru
        _
      %p544 = scmp.lt.s32.totalorder %s34, 3
      // Predicated region
      $region61: #{tpu_custom_call.1} parent=5 // pred_check
        %p545 = pneg %p544
      $region62: #{tpu_custom_call.1} parent=5 // pred_check_branch
        %547 = sbr.rel (%p545) target = $region64
      $region63: #{tpu_custom_call.1} parent=5 // pred_region
        // Predicated region
        $region65: #{tpu_custom_call.1} parent=63 // pred_check
          %p548 = pneg %p54
        $region66: #{tpu_custom_call.1} parent=63 // pred_check_branch
          %550 = sbr.rel (%p548) target = $region68
        $region67: #{tpu_custom_call.1} parent=63 // pred_region
          %p551 = scmp.lt.s32.totalorder %s34, 2
          %s552 = scalar_select %p551, %s34, 2
          %s553 = smul.addr %s552, 2
          %s554 = smul.addr %s553, 4
          %s555 = scalar_lea.vmem %s0, %s554
        $region68: #{tpu_custom_call.1} parent=63 // pred_fallthru
          _
      $region64: #{tpu_custom_call.1} parent=5 // pred_fallthru
        _
      %p556 = scmp.le.s32.totalorder 1, %s34
      %p557 = scmp.lt.s32.totalorder %s34, 4
      %p558 = pnand %p556, %p557
      %p559 = pneg %p558
      // Predicated region
      $region69: #{tpu_custom_call.1} parent=5 // pred_check
        _
      $region70: #{tpu_custom_call.1} parent=5 // pred_check_branch
        %561 = sbr.rel (%p558) target = $region72
      $region71: #{tpu_custom_call.1} parent=5 // pred_region
        %s562 = ssub.s32 %s34, 1
        // Predicated region
        $region73: #{tpu_custom_call.1} parent=71 // pred_check
          %p563 = pneg %p186
        $region74: #{tpu_custom_call.1} parent=71 // pred_check_branch
          %565 = sbr.rel (%p563) target = $region76
        $region75: #{tpu_custom_call.1} parent=71 // pred_region
          %567 = dma.done [#allocation6], 4096
        $region76: #{tpu_custom_call.1} parent=71 // pred_fallthru
          _
        // Predicated region
        $region77: #{tpu_custom_call.1} parent=71 // pred_check
          %p568 = pneg %p207
        $region78: #{tpu_custom_call.1} parent=71 // pred_check_branch
          %570 = sbr.rel (%p568) target = $region80
        $region79: #{tpu_custom_call.1} parent=71 // pred_region
          %572 = dma.done [#allocation9], 4096
        $region80: #{tpu_custom_call.1} parent=71 // pred_fallthru
          _
        // Predicated region
        $region81: #{tpu_custom_call.1} parent=71 // pred_check
          %p573 = pneg %p228
        $region82: #{tpu_custom_call.1} parent=71 // pred_check_branch
          %575 = sbr.rel (%p573) target = $region84
        $region83: #{tpu_custom_call.1} parent=71 // pred_region
          %577 = dma.done [#allocation9], 1024
        $region84: #{tpu_custom_call.1} parent=71 // pred_fallthru
          _
        // Predicated region
        $region85: #{tpu_custom_call.1} parent=71 // pred_check
          %p578 = pneg %p249
        $region86: #{tpu_custom_call.1} parent=71 // pred_check_branch
          %580 = sbr.rel (%p578) target = $region88
        $region87: #{tpu_custom_call.1} parent=71 // pred_region
          %582 = dma.done [#allocation12], 1024
        $region88: #{tpu_custom_call.1} parent=71 // pred_fallthru
          _
        // Predicated region
        $region89: #{tpu_custom_call.1} parent=71 // pred_check
          %p583 = pneg %p291
        $region90: #{tpu_custom_call.1} parent=71 // pred_check_branch
          %585 = sbr.rel (%p583) target = $region92
        $region91: #{tpu_custom_call.1} parent=71 // pred_region
          %587 = dma.done [#allocation12], 1024
        $region92: #{tpu_custom_call.1} parent=71 // pred_fallthru
          _
        %p588 = scmp.lt.s32.totalorder %s39, 2
        %s589 = scalar_select %p588, %s39, 2
        %s590 = smul.addr %s589, 2
        %s591 = smul.addr %s590, 4
        %s592 = scalar_lea.vmem %s0, %s591
        %p593 = pneg %p60
        %p594 = pneg %p57
        %p595 = pneg %p81
        %p596 = pneg %p78
        %p597 = pneg %p102
        %p598 = pneg %p99
        %p599 = pneg %p123
        %p600 = pneg %p120
        %p601 = pneg %p144
        %p602 = pneg %p141
        %p603 = pneg %p165
        %p604 = pneg %p162
        %p605 = pneg %p186
        %p606 = pneg %p183
        %p607 = pneg %p207
        %p608 = pneg %p204
        %p609 = pneg %p228
        %p610 = pneg %p225
        %p611 = pneg %p249
        %p612 = pneg %p246
        %p613 = pneg %p270
        %p614 = pneg %p267
        %p615 = pneg %p291
        %p616 = pneg %p288
        %p617 = pneg %p312
        %p618 = pneg %p309
        %p619 = pneg %p333
        %p620 = pneg %p330
        %p621 = pneg %p354
        %p622 = pneg %p351
        %p623 = pneg %p375
        %p624 = pneg %p372
        %p625 = pneg %p396
        %p626 = pneg %p393
        %p627 = pneg %p417
        %p628 = pneg %p414
        %p629 = pneg %p438
        %p630 = pneg %p435
        %p631 = scmp.lt.s32.totalorder %s39, 2
        %s632 = scalar_select %p631, %s39, 2
        %s633 = smul.addr %s632, 2
        %s634 = smul.addr %s633, 4
        %s635 = scalar_lea.vmem %s0, %s634
        %v637 = vld [vmem:[%s1] sm:$0xf]
        %v638 = vld [vmem:[%s1 + $0x4] sm:$0xf]
        %v639 = vld [vmem:[%s4] sm:$0xff]
        %v640 = vld [vmem:[%s4 + $0x8] sm:$0xff]
        %v641 = vld [vmem:[%s5] sm:$0xff]
        %v642 = vld [vmem:[%s5 + $0x8] sm:$0xff]
        %v643 = vld [vmem:[%s635] sm:$0xf]
        %v644 = vld [vmem:[%s635 + $0x4] sm:$0xf]
        %v645 = vld [vmem:[#allocation5] sm:$0xff]
        %v646 = vld [vmem:[#allocation5 + $0x8] sm:$0xff]
        %v647 = vld [vmem:[#allocation5 + $0x10] sm:$0xff]
        %v648 = vld [vmem:[#allocation5 + $0x18] sm:$0xff]
        %v649 = vld [vmem:[#allocation5 + $0x20] sm:$0xff]
        %v650 = vld [vmem:[#allocation5 + $0x28] sm:$0xff]
        %v651 = vld [vmem:[#allocation5 + $0x30] sm:$0xff]
        %v652 = vld [vmem:[#allocation5 + $0x38] sm:$0xff]
        %v653 = vld [vmem:[#allocation5 + $0x40] sm:$0xff]
        %v654 = vld [vmem:[#allocation5 + $0x48] sm:$0xff]
        %v655 = vld [vmem:[#allocation5 + $0x50] sm:$0xff]
        %v656 = vld [vmem:[#allocation5 + $0x58] sm:$0xff]
        %v657 = vld [vmem:[#allocation5 + $0x60] sm:$0xff]
        %v658 = vld [vmem:[#allocation5 + $0x68] sm:$0xff]
        %v659 = vld [vmem:[#allocation5 + $0x70] sm:$0xff]
        %v660 = vld [vmem:[#allocation5 + $0x78] sm:$0xff]
        %v661 = vld [vmem:[#allocation5 + $0x80] sm:$0xff]
        %v662 = vld [vmem:[#allocation5 + $0x88] sm:$0xff]
        %v663 = vld [vmem:[#allocation5 + $0x90] sm:$0xff]
        %v664 = vld [vmem:[#allocation5 + $0x98] sm:$0xff]
        %v665 = vld [vmem:[#allocation5 + $0xa0] sm:$0xff]
        %v666 = vld [vmem:[#allocation5 + $0xa8] sm:$0xff]
        %v667 = vld [vmem:[#allocation5 + $0xb0] sm:$0xff]
        %v668 = vld [vmem:[#allocation5 + $0xb8] sm:$0xff]
        %v669 = vld [vmem:[#allocation5 + $0xc0] sm:$0xff]
        %v670 = vld [vmem:[#allocation5 + $0xc8] sm:$0xff]
        %v671 = vld [vmem:[#allocation5 + $0xd0] sm:$0xff]
        %v672 = vld [vmem:[#allocation5 + $0xd8] sm:$0xff]
        %v673 = vld [vmem:[#allocation5 + $0xe0] sm:$0xff]
        %v674 = vld [vmem:[#allocation5 + $0xe8] sm:$0xff]
        %v675 = vld [vmem:[#allocation5 + $0xf0] sm:$0xff]
        %v676 = vld [vmem:[#allocation5 + $0xf8] sm:$0xff]
        %v679 = vunpack.c.l.b16 %v643
        %v680 = vunpack.c.l.b16 %v644
        %v681 = vpack.c.b16 %v680, %v679
        %v715 = vunpack.c.l.b16 %v645
        %v716 = vunpack.c.h.b16 %v645
        %v717 = vunpack.c.l.b16 %v646
        %v718 = vunpack.c.h.b16 %v646
        %v719 = vunpack.c.l.b16 %v647
        %v720 = vunpack.c.h.b16 %v647
        %v721 = vunpack.c.l.b16 %v648
        %v722 = vunpack.c.h.b16 %v648
        %v723 = vunpack.c.l.b16 %v649
        %v724 = vunpack.c.h.b16 %v649
        %v725 = vunpack.c.l.b16 %v650
        %v726 = vunpack.c.h.b16 %v650
        %v727 = vunpack.c.l.b16 %v651
        %v728 = vunpack.c.h.b16 %v651
        %v729 = vunpack.c.l.b16 %v652
        %v730 = vunpack.c.h.b16 %v652
        %v731 = vunpack.c.l.b16 %v653
        %v732 = vunpack.c.h.b16 %v653
        %v733 = vunpack.c.l.b16 %v654
        %v734 = vunpack.c.h.b16 %v654
        %v735 = vunpack.c.l.b16 %v655
        %v736 = vunpack.c.h.b16 %v655
        %v737 = vunpack.c.l.b16 %v656
        %v738 = vunpack.c.h.b16 %v656
        %v739 = vunpack.c.l.b16 %v657
        %v740 = vunpack.c.h.b16 %v657
        %v741 = vunpack.c.l.b16 %v658
        %v742 = vunpack.c.h.b16 %v658
        %v743 = vunpack.c.l.b16 %v659
        %v744 = vunpack.c.h.b16 %v659
        %v745 = vunpack.c.l.b16 %v660
        %v746 = vunpack.c.h.b16 %v660
        %v747 = vunpack.c.l.b16 %v661
        %v748 = vunpack.c.h.b16 %v661
        %v749 = vunpack.c.l.b16 %v662
        %v750 = vunpack.c.h.b16 %v662
        %v751 = vunpack.c.l.b16 %v663
        %v752 = vunpack.c.h.b16 %v663
        %v753 = vunpack.c.l.b16 %v664
        %v754 = vunpack.c.h.b16 %v664
        %v755 = vunpack.c.l.b16 %v665
        %v756 = vunpack.c.h.b16 %v665
        %v757 = vunpack.c.l.b16 %v666
        %v758 = vunpack.c.h.b16 %v666
        %v759 = vunpack.c.l.b16 %v667
        %v760 = vunpack.c.h.b16 %v667
        %v761 = vunpack.c.l.b16 %v668
        %v762 = vunpack.c.h.b16 %v668
        %v763 = vunpack.c.l.b16 %v669
        %v764 = vunpack.c.h.b16 %v669
        %v765 = vunpack.c.l.b16 %v670
        %v766 = vunpack.c.h.b16 %v670
        %v767 = vunpack.c.l.b16 %v671
        %v768 = vunpack.c.h.b16 %v671
        %v769 = vunpack.c.l.b16 %v672
        %v770 = vunpack.c.h.b16 %v672
        %v771 = vunpack.c.l.b16 %v673
        %v772 = vunpack.c.h.b16 %v673
        %v773 = vunpack.c.l.b16 %v674
        %v774 = vunpack.c.h.b16 %v674
        %v775 = vunpack.c.l.b16 %v675
        %v776 = vunpack.c.h.b16 %v675
        %v777 = vunpack.c.l.b16 %v676
        %v778 = vunpack.c.h.b16 %v676
        %v779 = vpack.c.b16 %v719, %v715
        %v780 = vpack.c.b16 %v720, %v716
        %v781 = vpack.c.b16 %v721, %v717
        %v782 = vpack.c.b16 %v722, %v718
        %v783 = vpack.c.b16 %v727, %v723
        %v784 = vpack.c.b16 %v728, %v724
        %v785 = vpack.c.b16 %v729, %v725
        %v786 = vpack.c.b16 %v730, %v726
        %v787 = vpack.c.b16 %v735, %v731
        %v788 = vpack.c.b16 %v736, %v732
        %v789 = vpack.c.b16 %v737, %v733
        %v790 = vpack.c.b16 %v738, %v734
        %v791 = vpack.c.b16 %v743, %v739
        %v792 = vpack.c.b16 %v744, %v740
        %v793 = vpack.c.b16 %v745, %v741
        %v794 = vpack.c.b16 %v746, %v742
        %v795 = vpack.c.b16 %v751, %v747
        %v796 = vpack.c.b16 %v752, %v748
        %v797 = vpack.c.b16 %v753, %v749
        %v798 = vpack.c.b16 %v754, %v750
        %v799 = vpack.c.b16 %v759, %v755
        %v800 = vpack.c.b16 %v760, %v756
        %v801 = vpack.c.b16 %v761, %v757
        %v802 = vpack.c.b16 %v762, %v758
        %v803 = vpack.c.b16 %v767, %v763
        %v804 = vpack.c.b16 %v768, %v764
        %v805 = vpack.c.b16 %v769, %v765
        %v806 = vpack.c.b16 %v770, %v766
        %v807 = vpack.c.b16 %v775, %v771
        %v808 = vpack.c.b16 %v776, %v772
        %v809 = vpack.c.b16 %v777, %v773
        %v810 = vpack.c.b16 %v778, %v774
        %843 = vmatpush.bf16.msra.mxu0 %v807
        %844 = vmatpush.bf16.msra.mxu0 %v803
        %845 = vmatpush.bf16.msra.mxu0 %v799
        %846 = vmatpush.bf16.msra.mxu0 %v795
        %847 = vmatpush.bf16.msra.mxu0 %v791
        %848 = vmatpush.bf16.msra.mxu0 %v787
        %849 = vmatpush.bf16.msra.mxu0 %v783
        %850 = vmatpush.bf16.msra.mxu0 %v779
        %851 = vmatmul.bf16.gmra.mxu0 %v681
        %v852 = vpop.f32.mrf.mxu0
        %v853 = vadd.f32 0.0, %v852
        %v854 = vpop.f32.mrf.mxu0
        %v855 = vadd.f32 0.0, %v854
        %856 = vdwg.mxu0
        %857 = vmatpush.bf16.msra.mxu0 %v808
        %858 = vmatpush.bf16.msra.mxu0 %v804
        %859 = vmatpush.bf16.msra.mxu0 %v800
        %860 = vmatpush.bf16.msra.mxu0 %v796
        %861 = vmatpush.bf16.msra.mxu0 %v792
        %862 = vmatpush.bf16.msra.mxu0 %v788
        %863 = vmatpush.bf16.msra.mxu0 %v784
        %864 = vmatpush.bf16.msra.mxu0 %v780
        %865 = vmatmul.bf16.gmra.mxu0 %v681
        %v866 = vpop.f32.mrf.mxu0
        %v867 = vadd.f32 0.0, %v866
        %v868 = vpop.f32.mrf.mxu0
        %v869 = vadd.f32 0.0, %v868
        %870 = vdwg.mxu0
        %871 = vmatpush.bf16.msra.mxu0 %v809
        %872 = vmatpush.bf16.msra.mxu0 %v805
        %873 = vmatpush.bf16.msra.mxu0 %v801
        %874 = vmatpush.bf16.msra.mxu0 %v797
        %875 = vmatpush.bf16.msra.mxu0 %v793
        %876 = vmatpush.bf16.msra.mxu0 %v789
        %877 = vmatpush.bf16.msra.mxu0 %v785
        %878 = vmatpush.bf16.msra.mxu0 %v781
        %879 = vmatmul.bf16.gmra.mxu0 %v681
        %v880 = vpop.f32.mrf.mxu0
        %v881 = vadd.f32 0.0, %v880
        %v882 = vpop.f32.mrf.mxu0
        %v883 = vadd.f32 0.0, %v882
        %884 = vdwg.mxu0
        %885 = vmatpush.bf16.msra.mxu0 %v810
        %886 = vmatpush.bf16.msra.mxu0 %v806
        %887 = vmatpush.bf16.msra.mxu0 %v802
        %888 = vmatpush.bf16.msra.mxu0 %v798
        %889 = vmatpush.bf16.msra.mxu0 %v794
        %890 = vmatpush.bf16.msra.mxu0 %v790
        %891 = vmatpush.bf16.msra.mxu0 %v786
        %892 = vmatpush.bf16.msra.mxu0 %v782
        %893 = vmatmul.bf16.gmra.mxu0 %v681
        %v894 = vpop.f32.mrf.mxu0
        %v895 = vadd.f32 0.0, %v894
        %v896 = vpop.f32.mrf.mxu0
        %v897 = vadd.f32 0.0, %v896
        %898 = vdwg.mxu0
        %v899 = vpack.c.bf16 %v855, %v853
        %v900 = vpack.c.bf16 %v869, %v867
        %v901 = vpack.c.bf16 %v883, %v881
        %v902 = vpack.c.bf16 %v897, %v895
        %v905 = vunpack.c.l.b16 %v637
        %v906 = vunpack.c.l.b16 %v638
        %v907 = vpack.c.b16 %v906, %v905
        %vm908 = vcmask 130048
        %v910 = vsel %vm908, %v907, 0
        %912 = vmatpush.bf16.msra.mxu0 0
        %913 = vmatpush.bf16.msra.mxu0 0
        %914 = vmatpush.bf16.msra.mxu0 0
        %915 = vmatpush.bf16.msra.mxu0 0
        %916 = vmatpush.bf16.msra.mxu0 0
        %917 = vmatpush.bf16.msra.mxu0 0
        %918 = vmatpush.bf16.msra.mxu0 0
        %919 = vmatpush.bf16.msra.mxu0 %v899
        %920 = vmatmul.bf16.gmra.mxu0 %v910
        %v921 = vpop.f32.mrf.mxu0
        %v922 = vadd.f32 0.0, %v921
        %v923 = vpop.f32.mrf.mxu0
        %v924 = vadd.f32 0.0, %v923
        %925 = vdwg.mxu0
        %926 = vmatpush.bf16.msra.mxu0 0
        %927 = vmatpush.bf16.msra.mxu0 0
        %928 = vmatpush.bf16.msra.mxu0 0
        %929 = vmatpush.bf16.msra.mxu0 0
        %930 = vmatpush.bf16.msra.mxu0 0
        %931 = vmatpush.bf16.msra.mxu0 0
        %932 = vmatpush.bf16.msra.mxu0 0
        %933 = vmatpush.bf16.msra.mxu0 %v900
        %934 = vmatmul.bf16.gmra.mxu0 %v910
        %v935 = vpop.f32.mrf.mxu0
        %v936 = vadd.f32 0.0, %v935
        %v937 = vpop.f32.mrf.mxu0
        %v938 = vadd.f32 0.0, %v937
        %939 = vdwg.mxu0
        %940 = vmatpush.bf16.msra.mxu0 0
        %941 = vmatpush.bf16.msra.mxu0 0
        %942 = vmatpush.bf16.msra.mxu0 0
        %943 = vmatpush.bf16.msra.mxu0 0
        %944 = vmatpush.bf16.msra.mxu0 0
        %945 = vmatpush.bf16.msra.mxu0 0
        %946 = vmatpush.bf16.msra.mxu0 0
        %947 = vmatpush.bf16.msra.mxu0 %v901
        %948 = vmatmul.bf16.gmra.mxu0 %v910
        %v949 = vpop.f32.mrf.mxu0
        %v950 = vadd.f32 0.0, %v949
        %v951 = vpop.f32.mrf.mxu0
        %v952 = vadd.f32 0.0, %v951
        %953 = vdwg.mxu0
        %954 = vmatpush.bf16.msra.mxu0 0
        %955 = vmatpush.bf16.msra.mxu0 0
        %956 = vmatpush.bf16.msra.mxu0 0
        %957 = vmatpush.bf16.msra.mxu0 0
        %958 = vmatpush.bf16.msra.mxu0 0
        %959 = vmatpush.bf16.msra.mxu0 0
        %960 = vmatpush.bf16.msra.mxu0 0
        %961 = vmatpush.bf16.msra.mxu0 %v902
        %962 = vmatmul.bf16.gmra.mxu0 %v910
        %v963 = vpop.f32.mrf.mxu0
        %v964 = vadd.f32 0.0, %v963
        %v965 = vpop.f32.mrf.mxu0
        %v966 = vadd.f32 0.0, %v965
        %967 = vdwg.mxu0
        %969 = vset.pattern.permute.xlu0 0
        %970 = vperm.xlu0 %969, %v639
        %v971 = vpop.permute.xlu0 %970
        %974 = vset.pattern.permute.xlu0 0
        %975 = vperm.xlu0 %974, %v640
        %v976 = vpop.permute.xlu0 %975
        %v978 = vmul.f32 %v971, %v853
        %v979 = vmul.f32 %v971, %v867
        %v980 = vmul.f32 %v971, %v881
        %v981 = vmul.f32 %v971, %v895
        %v982 = vmul.f32 %v976, %v855
        %v983 = vmul.f32 %v976, %v869
        %v984 = vmul.f32 %v976, %v883
        %v985 = vmul.f32 %v976, %v897
        %987 = vset.pattern.permute.xlu0 0
        %988 = vperm.xlu0 %987, %v641
        %v989 = vpop.permute.xlu0 %988
        %992 = vset.pattern.permute.xlu0 0
        %993 = vperm.xlu0 %992, %v642
        %v994 = vpop.permute.xlu0 %993
        %v996 = vmul.f32 %v989, %v922
        %v997 = vmul.f32 %v989, %v936
        %v998 = vmul.f32 %v989, %v950
        %v999 = vmul.f32 %v989, %v964
        %v1000 = vmul.f32 %v994, %v924
        %v1001 = vmul.f32 %v994, %v938
        %v1002 = vmul.f32 %v994, %v952
        %v1003 = vmul.f32 %v994, %v966
        %v1004 = vadd.f32 %v978, %v996
        %v1005 = vadd.f32 %v979, %v997
        %v1006 = vadd.f32 %v980, %v998
        %v1007 = vadd.f32 %v981, %v999
        %v1008 = vadd.f32 %v982, %v1000
        %v1009 = vadd.f32 %v983, %v1001
        %v1010 = vadd.f32 %v984, %v1002
        %v1011 = vadd.f32 %v985, %v1003
        %v1012 = vmax.f32 %v1004, 0.0
        %v1013 = vmax.f32 %v1005, 0.0
        %v1014 = vmax.f32 %v1006, 0.0
        %v1015 = vmax.f32 %v1007, 0.0
        %v1016 = vmax.f32 %v1008, 0.0
        %v1017 = vmax.f32 %v1009, 0.0
        %v1018 = vmax.f32 %v1010, 0.0
        %v1019 = vmax.f32 %v1011, 0.0
        %v1020 = vpack.c.bf16 %v1016, %v1012
        %v1021 = vpack.c.bf16 %v1017, %v1013
        %v1022 = vpack.c.bf16 %v1018, %v1014
        %v1023 = vpack.c.bf16 %v1019, %v1015
        %v1024 = vld [vmem:[#allocation8] sm:$0xf]
        %v1025 = vld [vmem:[#allocation8 + $0x4] sm:$0xf]
        %v1026 = vld [vmem:[#allocation8 + $0x8] sm:$0xf]
        %v1027 = vld [vmem:[#allocation8 + $0xc] sm:$0xf]
        %v1028 = vld [vmem:[#allocation8 + $0x10] sm:$0xf]
        %v1029 = vld [vmem:[#allocation8 + $0x14] sm:$0xf]
        %v1030 = vld [vmem:[#allocation8 + $0x18] sm:$0xf]
        %v1031 = vld [vmem:[#allocation8 + $0x1c] sm:$0xf]
        %v1032 = vld [vmem:[#allocation8 + $0x20] sm:$0xf]
        %v1033 = vld [vmem:[#allocation8 + $0x24] sm:$0xf]
        %v1034 = vld [vmem:[#allocation8 + $0x28] sm:$0xf]
        %v1035 = vld [vmem:[#allocation8 + $0x2c] sm:$0xf]
        %v1036 = vld [vmem:[#allocation8 + $0x30] sm:$0xf]
        %v1037 = vld [vmem:[#allocation8 + $0x34] sm:$0xf]
        %v1038 = vld [vmem:[#allocation8 + $0x38] sm:$0xf]
        %v1039 = vld [vmem:[#allocation8 + $0x3c] sm:$0xf]
        %v1040 = vld [vmem:[#allocation8 + $0x40] sm:$0xf]
        %v1041 = vld [vmem:[#allocation8 + $0x44] sm:$0xf]
        %v1042 = vld [vmem:[#allocation8 + $0x48] sm:$0xf]
        %v1043 = vld [vmem:[#allocation8 + $0x4c] sm:$0xf]
        %v1044 = vld [vmem:[#allocation8 + $0x50] sm:$0xf]
        %v1045 = vld [vmem:[#allocation8 + $0x54] sm:$0xf]
        %v1046 = vld [vmem:[#allocation8 + $0x58] sm:$0xf]
        %v1047 = vld [vmem:[#allocation8 + $0x5c] sm:$0xf]
        %v1048 = vld [vmem:[#allocation8 + $0x60] sm:$0xf]
        %v1049 = vld [vmem:[#allocation8 + $0x64] sm:$0xf]
        %v1050 = vld [vmem:[#allocation8 + $0x68] sm:$0xf]
        %v1051 = vld [vmem:[#allocation8 + $0x6c] sm:$0xf]
        %v1052 = vld [vmem:[#allocation8 + $0x70] sm:$0xf]
        %v1053 = vld [vmem:[#allocation8 + $0x74] sm:$0xf]
        %v1054 = vld [vmem:[#allocation8 + $0x78] sm:$0xf]
        %v1055 = vld [vmem:[#allocation8 + $0x7c] sm:$0xf]
        %v1056 = vld [vmem:[#allocation8 + $0x80] sm:$0xf]
        %v1057 = vld [vmem:[#allocation8 + $0x84] sm:$0xf]
        %v1058 = vld [vmem:[#allocation8 + $0x88] sm:$0xf]
        %v1059 = vld [vmem:[#allocation8 + $0x8c] sm:$0xf]
        %v1060 = vld [vmem:[#allocation8 + $0x90] sm:$0xf]
        %v1061 = vld [vmem:[#allocation8 + $0x94] sm:$0xf]
        %v1062 = vld [vmem:[#allocation8 + $0x98] sm:$0xf]
        %v1063 = vld [vmem:[#allocation8 + $0x9c] sm:$0xf]
        %v1064 = vld [vmem:[#allocation8 + $0xa0] sm:$0xf]
        %v1065 = vld [vmem:[#allocation8 + $0xa4] sm:$0xf]
        %v1066 = vld [vmem:[#allocation8 + $0xa8] sm:$0xf]
        %v1067 = vld [vmem:[#allocation8 + $0xac] sm:$0xf]
        %v1068 = vld [vmem:[#allocation8 + $0xb0] sm:$0xf]
        %v1069 = vld [vmem:[#allocation8 + $0xb4] sm:$0xf]
        %v1070 = vld [vmem:[#allocation8 + $0xb8] sm:$0xf]
        %v1071 = vld [vmem:[#allocation8 + $0xbc] sm:$0xf]
        %v1072 = vld [vmem:[#allocation8 + $0xc0] sm:$0xf]
        %v1073 = vld [vmem:[#allocation8 + $0xc4] sm:$0xf]
        %v1074 = vld [vmem:[#allocation8 + $0xc8] sm:$0xf]
        %v1075 = vld [vmem:[#allocation8 + $0xcc] sm:$0xf]
        %v1076 = vld [vmem:[#allocation8 + $0xd0] sm:$0xf]
        %v1077 = vld [vmem:[#allocation8 + $0xd4] sm:$0xf]
        %v1078 = vld [vmem:[#allocation8 + $0xd8] sm:$0xf]
        %v1079 = vld [vmem:[#allocation8 + $0xdc] sm:$0xf]
        %v1080 = vld [vmem:[#allocation8 + $0xe0] sm:$0xf]
        %v1081 = vld [vmem:[#allocation8 + $0xe4] sm:$0xf]
        %v1082 = vld [vmem:[#allocation8 + $0xe8] sm:$0xf]
        %v1083 = vld [vmem:[#allocation8 + $0xec] sm:$0xf]
        %v1084 = vld [vmem:[#allocation8 + $0xf0] sm:$0xf]
        %v1085 = vld [vmem:[#allocation8 + $0xf4] sm:$0xf]
        %v1086 = vld [vmem:[#allocation8 + $0xf8] sm:$0xf]
        %v1087 = vld [vmem:[#allocation8 + $0xfc] sm:$0xf]
        %v1152 = vunpack.c.l.b16 %v1024
        %v1153 = vunpack.c.l.b16 %v1025
        %v1154 = vunpack.c.l.b16 %v1026
        %v1155 = vunpack.c.l.b16 %v1027
        %v1156 = vunpack.c.l.b16 %v1028
        %v1157 = vunpack.c.l.b16 %v1029
        %v1158 = vunpack.c.l.b16 %v1030
        %v1159 = vunpack.c.l.b16 %v1031
        %v1160 = vunpack.c.l.b16 %v1032
        %v1161 = vunpack.c.l.b16 %v1033
        %v1162 = vunpack.c.l.b16 %v1034
        %v1163 = vunpack.c.l.b16 %v1035
        %v1164 = vunpack.c.l.b16 %v1036
        %v1165 = vunpack.c.l.b16 %v1037
        %v1166 = vunpack.c.l.b16 %v1038
        %v1167 = vunpack.c.l.b16 %v1039
        %v1168 = vunpack.c.l.b16 %v1040
        %v1169 = vunpack.c.l.b16 %v1041
        %v1170 = vunpack.c.l.b16 %v1042
        %v1171 = vunpack.c.l.b16 %v1043
        %v1172 = vunpack.c.l.b16 %v1044
        %v1173 = vunpack.c.l.b16 %v1045
        %v1174 = vunpack.c.l.b16 %v1046
        %v1175 = vunpack.c.l.b16 %v1047
        %v1176 = vunpack.c.l.b16 %v1048
        %v1177 = vunpack.c.l.b16 %v1049
        %v1178 = vunpack.c.l.b16 %v1050
        %v1179 = vunpack.c.l.b16 %v1051
        %v1180 = vunpack.c.l.b16 %v1052
        %v1181 = vunpack.c.l.b16 %v1053
        %v1182 = vunpack.c.l.b16 %v1054
        %v1183 = vunpack.c.l.b16 %v1055
        %v1184 = vunpack.c.l.b16 %v1056
        %v1185 = vunpack.c.l.b16 %v1057
        %v1186 = vunpack.c.l.b16 %v1058
        %v1187 = vunpack.c.l.b16 %v1059
        %v1188 = vunpack.c.l.b16 %v1060
        %v1189 = vunpack.c.l.b16 %v1061
        %v1190 = vunpack.c.l.b16 %v1062
        %v1191 = vunpack.c.l.b16 %v1063
        %v1192 = vunpack.c.l.b16 %v1064
        %v1193 = vunpack.c.l.b16 %v1065
        %v1194 = vunpack.c.l.b16 %v1066
        %v1195 = vunpack.c.l.b16 %v1067
        %v1196 = vunpack.c.l.b16 %v1068
        %v1197 = vunpack.c.l.b16 %v1069
        %v1198 = vunpack.c.l.b16 %v1070
        %v1199 = vunpack.c.l.b16 %v1071
        %v1200 = vunpack.c.l.b16 %v1072
        %v1201 = vunpack.c.l.b16 %v1073
        %v1202 = vunpack.c.l.b16 %v1074
        %v1203 = vunpack.c.l.b16 %v1075
        %v1204 = vunpack.c.l.b16 %v1076
        %v1205 = vunpack.c.l.b16 %v1077
        %v1206 = vunpack.c.l.b16 %v1078
        %v1207 = vunpack.c.l.b16 %v1079
        %v1208 = vunpack.c.l.b16 %v1080
        %v1209 = vunpack.c.l.b16 %v1081
        %v1210 = vunpack.c.l.b16 %v1082
        %v1211 = vunpack.c.l.b16 %v1083
        %v1212 = vunpack.c.l.b16 %v1084
        %v1213 = vunpack.c.l.b16 %v1085
        %v1214 = vunpack.c.l.b16 %v1086
        %v1215 = vunpack.c.l.b16 %v1087
        %v1216 = vpack.c.b16 %v1153, %v1152
        %v1217 = vpack.c.b16 %v1155, %v1154
        %v1218 = vpack.c.b16 %v1157, %v1156
        %v1219 = vpack.c.b16 %v1159, %v1158
        %v1220 = vpack.c.b16 %v1161, %v1160
        %v1221 = vpack.c.b16 %v1163, %v1162
        %v1222 = vpack.c.b16 %v1165, %v1164
        %v1223 = vpack.c.b16 %v1167, %v1166
        %v1224 = vpack.c.b16 %v1169, %v1168
        %v1225 = vpack.c.b16 %v1171, %v1170
        %v1226 = vpack.c.b16 %v1173, %v1172
        %v1227 = vpack.c.b16 %v1175, %v1174
        %v1228 = vpack.c.b16 %v1177, %v1176
        %v1229 = vpack.c.b16 %v1179, %v1178
        %v1230 = vpack.c.b16 %v1181, %v1180
        %v1231 = vpack.c.b16 %v1183, %v1182
        %v1232 = vpack.c.b16 %v1185, %v1184
        %v1233 = vpack.c.b16 %v1187, %v1186
        %v1234 = vpack.c.b16 %v1189, %v1188
        %v1235 = vpack.c.b16 %v1191, %v1190
        %v1236 = vpack.c.b16 %v1193, %v1192
        %v1237 = vpack.c.b16 %v1195, %v1194
        %v1238 = vpack.c.b16 %v1197, %v1196
        %v1239 = vpack.c.b16 %v1199, %v1198
        %v1240 = vpack.c.b16 %v1201, %v1200
        %v1241 = vpack.c.b16 %v1203, %v1202
        %v1242 = vpack.c.b16 %v1205, %v1204
        %v1243 = vpack.c.b16 %v1207, %v1206
        %v1244 = vpack.c.b16 %v1209, %v1208
        %v1245 = vpack.c.b16 %v1211, %v1210
        %v1246 = vpack.c.b16 %v1213, %v1212
        %v1247 = vpack.c.b16 %v1215, %v1214
        %1280 = vmatpush.bf16.msra.mxu0 %v1223
        %1281 = vmatpush.bf16.msra.mxu0 %v1222
        %1282 = vmatpush.bf16.msra.mxu0 %v1221
        %1283 = vmatpush.bf16.msra.mxu0 %v1220
        %1284 = vmatpush.bf16.msra.mxu0 %v1219
        %1285 = vmatpush.bf16.msra.mxu0 %v1218
        %1286 = vmatpush.bf16.msra.mxu0 %v1217
        %1287 = vmatpush.bf16.msra.mxu0 %v1216
        %1288 = vmatmul.bf16.gmra.mxu0 %v1020
        %v1289 = vpop.f32.mrf.mxu0
        %v1290 = vadd.f32 0.0, %v1289
        %v1291 = vpop.f32.mrf.mxu0
        %v1292 = vadd.f32 0.0, %v1291
        %1293 = vdwg.mxu0
        %1294 = vmatpush.bf16.msra.mxu0 %v1231
        %1295 = vmatpush.bf16.msra.mxu0 %v1230
        %1296 = vmatpush.bf16.msra.mxu0 %v1229
        %1297 = vmatpush.bf16.msra.mxu0 %v1228
        %1298 = vmatpush.bf16.msra.mxu0 %v1227
        %1299 = vmatpush.bf16.msra.mxu0 %v1226
        %1300 = vmatpush.bf16.msra.mxu0 %v1225
        %1301 = vmatpush.bf16.msra.mxu0 %v1224
        %1302 = vmatmul.bf16.gmra.mxu0 %v1021
        %v1303 = vpop.f32.mrf.mxu0
        %v1304 = vadd.f32 %v1290, %v1303
        %v1305 = vpop.f32.mrf.mxu0
        %v1306 = vadd.f32 %v1292, %v1305
        %1307 = vdwg.mxu0
        %1308 = vmatpush.bf16.msra.mxu0 %v1239
        %1309 = vmatpush.bf16.msra.mxu0 %v1238
        %1310 = vmatpush.bf16.msra.mxu0 %v1237
        %1311 = vmatpush.bf16.msra.mxu0 %v1236
        %1312 = vmatpush.bf16.msra.mxu0 %v1235
        %1313 = vmatpush.bf16.msra.mxu0 %v1234
        %1314 = vmatpush.bf16.msra.mxu0 %v1233
        %1315 = vmatpush.bf16.msra.mxu0 %v1232
        %1316 = vmatmul.bf16.gmra.mxu0 %v1022
        %v1317 = vpop.f32.mrf.mxu0
        %v1318 = vadd.f32 %v1304, %v1317
        %v1319 = vpop.f32.mrf.mxu0
        %v1320 = vadd.f32 %v1306, %v1319
        %1321 = vdwg.mxu0
        %1322 = vmatpush.bf16.msra.mxu0 %v1247
        %1323 = vmatpush.bf16.msra.mxu0 %v1246
        %1324 = vmatpush.bf16.msra.mxu0 %v1245
        %1325 = vmatpush.bf16.msra.mxu0 %v1244
        %1326 = vmatpush.bf16.msra.mxu0 %v1243
        %1327 = vmatpush.bf16.msra.mxu0 %v1242
        %1328 = vmatpush.bf16.msra.mxu0 %v1241
        %1329 = vmatpush.bf16.msra.mxu0 %v1240
        %1330 = vmatmul.bf16.gmra.mxu0 %v1023
        %v1331 = vpop.f32.mrf.mxu0
        %v1332 = vadd.f32 %v1318, %v1331
        %v1333 = vpop.f32.mrf.mxu0
        %v1334 = vadd.f32 %v1320, %v1333
        %1335 = vdwg.mxu0
        %v1336 = vpack.c.bf16 %v1334, %v1332
        %1337 = vmatpush.bf16.msra.mxu0 0
        %1338 = vmatpush.bf16.msra.mxu0 0
        %1339 = vmatpush.bf16.msra.mxu0 0
        %1340 = vmatpush.bf16.msra.mxu0 0
        %1341 = vmatpush.bf16.msra.mxu0 0
        %1342 = vmatpush.bf16.msra.mxu0 0
        %1343 = vmatpush.bf16.msra.mxu0 0
        %1344 = vmatpush.bf16.msra.mxu0 %v1336
        %1345 = vmatmul.bf16.gmra.mxu0 %v910
        %v1346 = vpop.f32.mrf.mxu0
        %v1347 = vadd.f32 0.0, %v1346
        %v1348 = vpop.f32.mrf.mxu0
        %v1349 = vadd.f32 0.0, %v1348
        %1350 = vdwg.mxu0
        %v1351 = vmul.f32 %v971, %v1332
        %v1352 = vmul.f32 %v976, %v1334
        %v1353 = vmul.f32 %v989, %v1347
        %v1354 = vmul.f32 %v994, %v1349
        %v1355 = vadd.f32 %v1351, %v1353
        %v1356 = vadd.f32 %v1352, %v1354
        %v1357 = vmax.f32 %v1355, 0.0
        %v1358 = vmax.f32 %v1356, 0.0
        %v1359 = vld [vmem:[%s2] sm:$0xf]
        %v1360 = vld [vmem:[%s2 + $0x4] sm:$0xf]
        %v1361 = vpack.c.bf16 %v1358, %v1357
        %v1364 = vunpack.c.l.b16 %v1359
        %v1365 = vunpack.c.l.b16 %v1360
        %v1366 = vpack.c.b16 %v1365, %v1364
        %v1368 = vsel %vm908, %v1366, 0
        %1370 = vmatpush.bf16.msra.mxu0 0
        %1371 = vmatpush.bf16.msra.mxu0 0
        %1372 = vmatpush.bf16.msra.mxu0 0
        %1373 = vmatpush.bf16.msra.mxu0 0
        %1374 = vmatpush.bf16.msra.mxu0 0
        %1375 = vmatpush.bf16.msra.mxu0 0
        %1376 = vmatpush.bf16.msra.mxu0 0
        %1377 = vmatpush.bf16.msra.mxu0 %v1361
        %1378 = vmatmul.bf16.gmra.mxu0 %v1368
        %v1379 = vpop.f32.mrf.mxu0
        %v1380 = vadd.f32 0.0, %v1379
        %v1381 = vpop.f32.mrf.mxu0
        %v1382 = vadd.f32 0.0, %v1381
        %1383 = vdwg.mxu0
        %v1384 = vld [vmem:[%s3] sm:$0xff]
        %v1385 = vld [vmem:[%s3 + $0x8] sm:$0xff]
        %1387 = vset.pattern.permute.xlu0 0
        %1388 = vperm.xlu0 %1387, %v1384
        %v1389 = vpop.permute.xlu0 %1388
        %1392 = vset.pattern.permute.xlu0 0
        %1393 = vperm.xlu0 %1392, %v1385
        %v1394 = vpop.permute.xlu0 %1393
        %v1396 = vmul.f32 %v1380, %v1389
        %v1397 = vmul.f32 %v1382, %v1394
        %v1398 = vmul.f32 %v1396, %v1396
        %v1399 = vmul.f32 %v1397, %v1397
        %1400 = vadd.xlane.f32.xlu0 %v1398
        %v1401 = vpop.xlane.xlu0 %1400
        %1402 = vadd.xlane.f32.xlu0 %v1399
        %v1403 = vpop.xlane.xlu0 %1402
        %v1404 = vmax.f32 %v1401, 1e-24
        %v1405 = vmax.f32 %v1403, 1e-24
        %v1406 = vrsqrt.pop %v1404
        %v1407 = vmul.f32 %v1406, %v1404
        %v1408 = vmul.f32 %v1407, %v1406
        %v1409 = vmul.f32 0.5, %v1408
        %v1410 = vsub.f32 1.5, %v1409
        %v1411 = vmul.f32 %v1406, %v1410
        %vm1412 = vweird.f32 %v1404
        %vm1413 = vweird.f32 %v1406
        %vm1414 = vmor %vm1412, %vm1413
        %v1415 = vsel %vm1414, %v1406, %v1411
        %v1416 = vrsqrt.pop %v1405
        %v1417 = vmul.f32 %v1416, %v1405
        %v1418 = vmul.f32 %v1417, %v1416
        %v1419 = vmul.f32 0.5, %v1418
        %v1420 = vsub.f32 1.5, %v1419
        %v1421 = vmul.f32 %v1416, %v1420
        %vm1422 = vweird.f32 %v1405
        %vm1423 = vweird.f32 %v1416
        %vm1424 = vmor %vm1422, %vm1423
        %v1425 = vsel %vm1424, %v1416, %v1421
        %v1426 = vmul.f32 %v1396, %v1415
        %v1427 = vmul.f32 %v1397, %v1425
        %v1428 = vsub.f32 0.0, %v1426
        %v1429 = vsub.f32 0.0, %v1427
        %v1430 = vmul.f32 %v1428, 1.442695
        %v1431 = vpow.pop %v1430
        %v1432 = vmul.f32 %v1429, 1.442695
        %v1433 = vpow.pop %v1432
        %v1434 = vadd.f32 %v1431, 1.0
        %v1435 = vadd.f32 %v1433, 1.0
        %v1436 = vrcp.pop %v1434
        %v1437 = vmul.f32 %v1434, %v1436
        %v1438 = vsub.f32 1.0, %v1437
        %v1439 = vmul.f32 %v1436, %v1438
        %v1440 = vadd.f32 %v1436, %v1439
        %vm1441 = vweird.f32 %v1434
        %vm1442 = vweird.f32 %v1436
        %vm1443 = vmor %vm1441, %vm1442
        %v1444 = vsel %vm1443, %v1436, %v1440
        %v1445 = vand.u32 2147483647, %v1434
        %vm1446 = vcmp.eq.f32.partialorder %v1445, 8.507059e+37
        %v1447 = vand.u32 %v1434, 2147483648
        %v1448 = vor.u32 1.1754944e-38, %v1447
        %v1449 = vsel %vm1446, %v1448, %v1444
        %v1450 = vmul.f32 1.0, %v1449
        %v1451 = vrcp.pop %v1435
        %v1452 = vmul.f32 %v1435, %v1451
        %v1453 = vsub.f32 1.0, %v1452
        %v1454 = vmul.f32 %v1451, %v1453
        %v1455 = vadd.f32 %v1451, %v1454
        %vm1456 = vweird.f32 %v1435
        %vm1457 = vweird.f32 %v1451
        %vm1458 = vmor %vm1456, %vm1457
        %v1459 = vsel %vm1458, %v1451, %v1455
        %v1460 = vand.u32 2147483647, %v1435
        %vm1461 = vcmp.eq.f32.partialorder %v1460, 8.507059e+37
        %v1462 = vand.u32 %v1435, 2147483648
        %v1463 = vor.u32 1.1754944e-38, %v1462
        %v1464 = vsel %vm1461, %v1463, %v1459
        %v1465 = vmul.f32 1.0, %v1464
        %p1466 = scmp.eq.s32.totalorder %s39, 0
        // Predicated region
        $region93: #{tpu_custom_call.1} parent=71 // pred_check
          %p1467 = pneg %p1466
        $region94: #{tpu_custom_call.1} parent=71 // pred_check_branch
          %1469 = sbr.rel (%p1467) target = $region96
        $region95: #{tpu_custom_call.1} parent=71 // pred_region
          %1470 = vst [vmem:[#allocation2] sm:$0xff] %v1355
          %1471 = vst [vmem:[#allocation2 + $0x8] sm:$0xff] %v1356
          %1472 = vst [vmem:[#allocation3] sm:$0xff] %v1450
          %1473 = vst [vmem:[#allocation3 + $0x8] sm:$0xff] %v1465
        $region96: #{tpu_custom_call.1} parent=71 // pred_fallthru
          _
        %p1474 = scmp.eq.s32.totalorder %s39, 1
        // Predicated region
        $region97: #{tpu_custom_call.1} parent=71 // pred_check
          %p1475 = pneg %p1474
        $region98: #{tpu_custom_call.1} parent=71 // pred_check_branch
          %1477 = sbr.rel (%p1475) target = $region100
        $region99: #{tpu_custom_call.1} parent=71 // pred_region
          %s1478 = scalar_lea.vmem [#allocation2], 16
          %1479 = vst [vmem:[%s1478] sm:$0xff] %v1355
          %1480 = vst [vmem:[%s1478 + $0x8] sm:$0xff] %v1356
          %s1481 = scalar_lea.vmem [#allocation3], 16
          %1482 = vst [vmem:[%s1481] sm:$0xff] %v1450
          %1483 = vst [vmem:[%s1481 + $0x8] sm:$0xff] %v1465
        $region100: #{tpu_custom_call.1} parent=71 // pred_fallthru
          _
        %p1484 = scmp.eq.s32.totalorder %s39, 2
        // Predicated region
        $region101: #{tpu_custom_call.1} parent=71 // pred_check
          %p1485 = pneg %p1484
        $region102: #{tpu_custom_call.1} parent=71 // pred_check_branch
          %1487 = sbr.rel (%p1485) target = $region104
        $region103: #{tpu_custom_call.1} parent=71 // pred_region
          %s1488 = scalar_lea.vmem [#allocation2], 32
          %1489 = vst [vmem:[%s1488] sm:$0xff] %v1355
          %1490 = vst [vmem:[%s1488 + $0x8] sm:$0xff] %v1356
          %s1491 = scalar_lea.vmem [#allocation3], 32
          %1492 = vst [vmem:[%s1491] sm:$0xff] %v1450
          %1493 = vst [vmem:[%s1491 + $0x8] sm:$0xff] %v1465
        $region104: #{tpu_custom_call.1} parent=71 // pred_fallthru
          _
        // Predicated region
        $region105: #{tpu_custom_call.1} parent=71 // pred_check
          %p1494 = pneg %p1466
        $region106: #{tpu_custom_call.1} parent=71 // pred_check_branch
          %1496 = sbr.rel (%p1494) target = $region108
        $region107: #{tpu_custom_call.1} parent=71 // pred_region
          %1497 = vst [vmem:[#allocation14] sm:$0xff] %v1355
          %1498 = vst [vmem:[#allocation14 + $0x8] sm:$0xff] %v1356
          %v1499 = vpack.c.bf16 %v1356, %v1355
          %v1500 = vld [vmem:[#allocation10] sm:$0xf]
          %v1501 = vld [vmem:[#allocation10 + $0x4] sm:$0xf]
          %v1502 = vld [vmem:[#allocation10 + $0x8] sm:$0xf]
          %v1503 = vld [vmem:[#allocation10 + $0xc] sm:$0xf]
          %v1504 = vld [vmem:[#allocation10 + $0x10] sm:$0xf]
          %v1505 = vld [vmem:[#allocation10 + $0x14] sm:$0xf]
          %v1506 = vld [vmem:[#allocation10 + $0x18] sm:$0xf]
          %v1507 = vld [vmem:[#allocation10 + $0x1c] sm:$0xf]
          %v1508 = vld [vmem:[#allocation10 + $0x20] sm:$0xf]
          %v1509 = vld [vmem:[#allocation10 + $0x24] sm:$0xf]
          %v1510 = vld [vmem:[#allocation10 + $0x28] sm:$0xf]
          %v1511 = vld [vmem:[#allocation10 + $0x2c] sm:$0xf]
          %v1512 = vld [vmem:[#allocation10 + $0x30] sm:$0xf]
          %v1513 = vld [vmem:[#allocation10 + $0x34] sm:$0xf]
          %v1514 = vld [vmem:[#allocation10 + $0x38] sm:$0xf]
          %v1515 = vld [vmem:[#allocation10 + $0x3c] sm:$0xf]
          %v1532 = vunpack.c.l.b16 %v1500
          %v1533 = vunpack.c.l.b16 %v1501
          %v1534 = vunpack.c.l.b16 %v1502
          %v1535 = vunpack.c.l.b16 %v1503
          %v1536 = vunpack.c.l.b16 %v1504
          %v1537 = vunpack.c.l.b16 %v1505
          %v1538 = vunpack.c.l.b16 %v1506
          %v1539 = vunpack.c.l.b16 %v1507
          %v1540 = vunpack.c.l.b16 %v1508
          %v1541 = vunpack.c.l.b16 %v1509
          %v1542 = vunpack.c.l.b16 %v1510
          %v1543 = vunpack.c.l.b16 %v1511
          %v1544 = vunpack.c.l.b16 %v1512
          %v1545 = vunpack.c.l.b16 %v1513
          %v1546 = vunpack.c.l.b16 %v1514
          %v1547 = vunpack.c.l.b16 %v1515
          %v1548 = vpack.c.b16 %v1533, %v1532
          %v1549 = vpack.c.b16 %v1535, %v1534
          %v1550 = vpack.c.b16 %v1537, %v1536
          %v1551 = vpack.c.b16 %v1539, %v1538
          %v1552 = vpack.c.b16 %v1541, %v1540
          %v1553 = vpack.c.b16 %v1543, %v1542
          %v1554 = vpack.c.b16 %v1545, %v1544
          %v1555 = vpack.c.b16 %v1547, %v1546
          %1564 = vmatpush.bf16.msra.mxu0 %v1555
          %1565 = vmatpush.bf16.msra.mxu0 %v1554
          %1566 = vmatpush.bf16.msra.mxu0 %v1553
          %1567 = vmatpush.bf16.msra.mxu0 %v1552
          %1568 = vmatpush.bf16.msra.mxu0 %v1551
          %1569 = vmatpush.bf16.msra.mxu0 %v1550
          %1570 = vmatpush.bf16.msra.mxu0 %v1549
          %1571 = vmatpush.bf16.msra.mxu0 %v1548
          %1572 = vmatmul.bf16.gmra.mxu0 %v1499
          %v1573 = vpop.f32.mrf.mxu0
          %v1574 = vadd.f32 0.0, %v1573
          %v1575 = vpop.f32.mrf.mxu0
          %v1576 = vadd.f32 0.0, %v1575
          %1577 = vdwg.mxu0
          %v1578 = vpack.c.bf16 %v1576, %v1574
          %1579 = vmatpush.bf16.msra.mxu0 0
          %1580 = vmatpush.bf16.msra.mxu0 0
          %1581 = vmatpush.bf16.msra.mxu0 0
          %1582 = vmatpush.bf16.msra.mxu0 0
          %1583 = vmatpush.bf16.msra.mxu0 0
          %1584 = vmatpush.bf16.msra.mxu0 0
          %1585 = vmatpush.bf16.msra.mxu0 0
          %1586 = vmatpush.bf16.msra.mxu0 %v1578
          %1587 = vmatmul.bf16.gmra.mxu0 %v910
          %v1588 = vpop.f32.mrf.mxu0
          %v1589 = vadd.f32 0.0, %v1588
          %v1590 = vpop.f32.mrf.mxu0
          %v1591 = vadd.f32 0.0, %v1590
          %1592 = vdwg.mxu0
          %1593 = vst [vmem:[#allocation15] sm:$0xff] %v1589
          %1594 = vst [vmem:[#allocation15 + $0x8] sm:$0xff] %v1591
        $region108: #{tpu_custom_call.1} parent=71 // pred_fallthru
          _
        // Predicated region
        $region109: #{tpu_custom_call.1} parent=71 // pred_check
          %p1595 = pneg %p1484
        $region110: #{tpu_custom_call.1} parent=71 // pred_check_branch
          %1597 = sbr.rel (%p1595) target = $region112
        $region111: #{tpu_custom_call.1} parent=71 // pred_region
          %v1598 = vld [vmem:[#allocation2] sm:$0xff]
          %v1599 = vld [vmem:[#allocation2 + $0x8] sm:$0xff]
          %s1600 = scalar_lea.vmem [#allocation2], 32
          %v1601 = vld [vmem:[%s1600] sm:$0xff]
          %v1602 = vld [vmem:[%s1600 + $0x8] sm:$0xff]
          %v1603 = vmax.f32 %v1598, 0.0
          %v1604 = vmax.f32 %v1599, 0.0
          %s1605 = scalar_lea.vmem [#allocation2], 16
          %v1606 = vld [vmem:[%s1605] sm:$0xff]
          %v1607 = vld [vmem:[%s1605 + $0x8] sm:$0xff]
          %v1608 = vmax.f32 %v1606, 0.0
          %v1609 = vmax.f32 %v1607, 0.0
          %v1610 = vmax.f32 %v1601, 0.0
          %v1611 = vmax.f32 %v1602, 0.0
          %v1612 = vlaneseq
          %v1613 = vand.u32 %v1612, 127
          %v1614 = vld [vmem:[#allocation3] sm:$0xff]
          %v1615 = vld [vmem:[#allocation3 + $0x8] sm:$0xff]
          %v1616 = vpack.c.bf16 %v1615, %v1614
          %v1617 = vld [vmem:[#allocation11] sm:$0xf]
          %v1618 = vld [vmem:[#allocation11 + $0x4] sm:$0xf]
          %v1619 = vld [vmem:[#allocation11 + $0x8] sm:$0xf]
          %v1620 = vld [vmem:[#allocation11 + $0xc] sm:$0xf]
          %v1621 = vld [vmem:[#allocation11 + $0x10] sm:$0xf]
          %v1622 = vld [vmem:[#allocation11 + $0x14] sm:$0xf]
          %v1623 = vld [vmem:[#allocation11 + $0x18] sm:$0xf]
          %v1624 = vld [vmem:[#allocation11 + $0x1c] sm:$0xf]
          %v1625 = vld [vmem:[#allocation11 + $0x20] sm:$0xf]
          %v1626 = vld [vmem:[#allocation11 + $0x24] sm:$0xf]
          %v1627 = vld [vmem:[#allocation11 + $0x28] sm:$0xf]
          %v1628 = vld [vmem:[#allocation11 + $0x2c] sm:$0xf]
          %v1629 = vld [vmem:[#allocation11 + $0x30] sm:$0xf]
          %v1630 = vld [vmem:[#allocation11 + $0x34] sm:$0xf]
          %v1631 = vld [vmem:[#allocation11 + $0x38] sm:$0xf]
          %v1632 = vld [vmem:[#allocation11 + $0x3c] sm:$0xf]
          %v1649 = vunpack.c.l.b16 %v1617
          %v1650 = vunpack.c.l.b16 %v1618
          %v1651 = vunpack.c.l.b16 %v1619
          %v1652 = vunpack.c.l.b16 %v1620
          %v1653 = vunpack.c.l.b16 %v1621
          %v1654 = vunpack.c.l.b16 %v1622
          %v1655 = vunpack.c.l.b16 %v1623
          %v1656 = vunpack.c.l.b16 %v1624
          %v1657 = vunpack.c.l.b16 %v1625
          %v1658 = vunpack.c.l.b16 %v1626
          %v1659 = vunpack.c.l.b16 %v1627
          %v1660 = vunpack.c.l.b16 %v1628
          %v1661 = vunpack.c.l.b16 %v1629
          %v1662 = vunpack.c.l.b16 %v1630
          %v1663 = vunpack.c.l.b16 %v1631
          %v1664 = vunpack.c.l.b16 %v1632
          %v1665 = vpack.c.b16 %v1650, %v1649
          %v1666 = vpack.c.b16 %v1652, %v1651
          %v1667 = vpack.c.b16 %v1654, %v1653
          %v1668 = vpack.c.b16 %v1656, %v1655
          %v1669 = vpack.c.b16 %v1658, %v1657
          %v1670 = vpack.c.b16 %v1660, %v1659
          %v1671 = vpack.c.b16 %v1662, %v1661
          %v1672 = vpack.c.b16 %v1664, %v1663
          %1681 = vmatpush.bf16.msra.mxu0 %v1672
          %1682 = vmatpush.bf16.msra.mxu0 %v1671
          %1683 = vmatpush.bf16.msra.mxu0 %v1670
          %1684 = vmatpush.bf16.msra.mxu0 %v1669
          %1685 = vmatpush.bf16.msra.mxu0 %v1668
          %1686 = vmatpush.bf16.msra.mxu0 %v1667
          %1687 = vmatpush.bf16.msra.mxu0 %v1666
          %1688 = vmatpush.bf16.msra.mxu0 %v1665
          %1689 = vmatmul.bf16.gmra.mxu0 %v1616
          %v1690 = vpop.f32.mrf.mxu0
          %v1691 = vadd.f32 0.0, %v1690
          %v1692 = vpop.f32.mrf.mxu0
          %v1693 = vadd.f32 0.0, %v1692
          %1694 = vdwg.mxu0
          %v1695 = vmul.f32 %v1603, %v1691
          %v1696 = vmul.f32 %v1604, %v1693
          %1697 = vadd.xlane.f32.xlu0 %v1695
          %v1698 = vpop.xlane.xlu0 %1697
          %1699 = vadd.xlane.f32.xlu0 %v1696
          %v1700 = vpop.xlane.xlu0 %1699
          %v1701 = vld [vmem:[#allocation4] sm:$0x1]
          %v1703 = vperm.slane %v1701, 0
          %v1705 = vadd.f32 %v1698, %v1703
          %v1706 = vadd.f32 %v1700, %v1703
          %v1707 = vmul.f32 %v1608, %v1691
          %v1708 = vmul.f32 %v1609, %v1693
          %1709 = vadd.xlane.f32.xlu0 %v1707
          %v1710 = vpop.xlane.xlu0 %1709
          %1711 = vadd.xlane.f32.xlu0 %v1708
          %v1712 = vpop.xlane.xlu0 %1711
          %v1713 = vadd.f32 %v1710, %v1703
          %v1714 = vadd.f32 %v1712, %v1703
          %vm1715 = vcmp.eq.s32.totalorder %v1613, 0
          %vm1716 = vcmp.eq.s32.totalorder %v1613, 1
          %1718 = vset.pattern.permute.xlu0 0
          %1719 = vperm.xlu0 %1718, %v1713
          %v1720 = vpop.permute.xlu0 %1719
          %1723 = vset.pattern.permute.xlu0 0
          %1724 = vperm.xlu0 %1723, %v1714
          %v1725 = vpop.permute.xlu0 %1724
          %v1727 = vsel %vm1716, %v1720, 0.0
          %v1728 = vsel %vm1716, %v1725, 0.0
          %1730 = vset.pattern.permute.xlu0 0
          %1731 = vperm.xlu0 %1730, %v1705
          %v1732 = vpop.permute.xlu0 %1731
          %1735 = vset.pattern.permute.xlu0 0
          %1736 = vperm.xlu0 %1735, %v1706
          %v1737 = vpop.permute.xlu0 %1736
          %v1739 = vsel %vm1715, %v1732, %v1727
          %v1740 = vsel %vm1715, %v1737, %v1728
          %1741 = vst [vmem:[#allocation17] sm:$0xff] %v1739
          %1742 = vst [vmem:[#allocation17 + $0x8] sm:$0xff] %v1740
          %s1743 = scalar_lea.vmem [#allocation3], 16
          %v1744 = vld [vmem:[%s1743] sm:$0xff]
          %v1745 = vld [vmem:[%s1743 + $0x8] sm:$0xff]
          %v1746 = vpack.c.bf16 %v1745, %v1744
          %v1747 = vld [vmem:[#allocation11] sm:$0xf]
          %v1748 = vld [vmem:[#allocation11 + $0x4] sm:$0xf]
          %v1749 = vld [vmem:[#allocation11 + $0x8] sm:$0xf]
          %v1750 = vld [vmem:[#allocation11 + $0xc] sm:$0xf]
          %v1751 = vld [vmem:[#allocation11 + $0x10] sm:$0xf]
          %v1752 = vld [vmem:[#allocation11 + $0x14] sm:$0xf]
          %v1753 = vld [vmem:[#allocation11 + $0x18] sm:$0xf]
          %v1754 = vld [vmem:[#allocation11 + $0x1c] sm:$0xf]
          %v1755 = vld [vmem:[#allocation11 + $0x20] sm:$0xf]
          %v1756 = vld [vmem:[#allocation11 + $0x24] sm:$0xf]
          %v1757 = vld [vmem:[#allocation11 + $0x28] sm:$0xf]
          %v1758 = vld [vmem:[#allocation11 + $0x2c] sm:$0xf]
          %v1759 = vld [vmem:[#allocation11 + $0x30] sm:$0xf]
          %v1760 = vld [vmem:[#allocation11 + $0x34] sm:$0xf]
          %v1761 = vld [vmem:[#allocation11 + $0x38] sm:$0xf]
          %v1762 = vld [vmem:[#allocation11 + $0x3c] sm:$0xf]
          %v1779 = vunpack.c.l.b16 %v1747
          %v1780 = vunpack.c.l.b16 %v1748
          %v1781 = vunpack.c.l.b16 %v1749
          %v1782 = vunpack.c.l.b16 %v1750
          %v1783 = vunpack.c.l.b16 %v1751
          %v1784 = vunpack.c.l.b16 %v1752
          %v1785 = vunpack.c.l.b16 %v1753
          %v1786 = vunpack.c.l.b16 %v1754
          %v1787 = vunpack.c.l.b16 %v1755
          %v1788 = vunpack.c.l.b16 %v1756
          %v1789 = vunpack.c.l.b16 %v1757
          %v1790 = vunpack.c.l.b16 %v1758
          %v1791 = vunpack.c.l.b16 %v1759
          %v1792 = vunpack.c.l.b16 %v1760
          %v1793 = vunpack.c.l.b16 %v1761
          %v1794 = vunpack.c.l.b16 %v1762
          %v1795 = vpack.c.b16 %v1780, %v1779
          %v1796 = vpack.c.b16 %v1782, %v1781
          %v1797 = vpack.c.b16 %v1784, %v1783
          %v1798 = vpack.c.b16 %v1786, %v1785
          %v1799 = vpack.c.b16 %v1788, %v1787
          %v1800 = vpack.c.b16 %v1790, %v1789
          %v1801 = vpack.c.b16 %v1792, %v1791
          %v1802 = vpack.c.b16 %v1794, %v1793
          %1811 = vmatpush.bf16.msra.mxu0 %v1802
          %1812 = vmatpush.bf16.msra.mxu0 %v1801
          %1813 = vmatpush.bf16.msra.mxu0 %v1800
          %1814 = vmatpush.bf16.msra.mxu0 %v1799
          %1815 = vmatpush.bf16.msra.mxu0 %v1798
          %1816 = vmatpush.bf16.msra.mxu0 %v1797
          %1817 = vmatpush.bf16.msra.mxu0 %v1796
          %1818 = vmatpush.bf16.msra.mxu0 %v1795
          %1819 = vmatmul.bf16.gmra.mxu0 %v1746
          %v1820 = vpop.f32.mrf.mxu0
          %v1821 = vadd.f32 0.0, %v1820
          %v1822 = vpop.f32.mrf.mxu0
          %v1823 = vadd.f32 0.0, %v1822
          %1824 = vdwg.mxu0
          %v1825 = vmul.f32 %v1608, %v1821
          %v1826 = vmul.f32 %v1609, %v1823
          %1827 = vadd.xlane.f32.xlu0 %v1825
          %v1828 = vpop.xlane.xlu0 %1827
          %1829 = vadd.xlane.f32.xlu0 %v1826
          %v1830 = vpop.xlane.xlu0 %1829
          %v1831 = vld [vmem:[#allocation4] sm:$0x1]
          %v1833 = vperm.slane %v1831, 0
          %v1835 = vadd.f32 %v1828, %v1833
          %v1836 = vadd.f32 %v1830, %v1833
          %v1837 = vmul.f32 %v1603, %v1821
          %v1838 = vmul.f32 %v1604, %v1823
          %1839 = vadd.xlane.f32.xlu0 %v1837
          %v1840 = vpop.xlane.xlu0 %1839
          %1841 = vadd.xlane.f32.xlu0 %v1838
          %v1842 = vpop.xlane.xlu0 %1841
          %v1843 = vadd.f32 %v1840, %v1833
          %v1844 = vadd.f32 %v1842, %v1833
          %1846 = vset.pattern.permute.xlu0 0
          %1847 = vperm.xlu0 %1846, %v1843
          %v1848 = vpop.permute.xlu0 %1847
          %1851 = vset.pattern.permute.xlu0 0
          %1852 = vperm.xlu0 %1851, %v1844
          %v1853 = vpop.permute.xlu0 %1852
          %v1855 = vsel %vm1716, %v1848, 0.0
          %v1856 = vsel %vm1716, %v1853, 0.0
          %1858 = vset.pattern.permute.xlu0 0
          %1859 = vperm.xlu0 %1858, %v1835
          %v1860 = vpop.permute.xlu0 %1859
          %1863 = vset.pattern.permute.xlu0 0
          %1864 = vperm.xlu0 %1863, %v1836
          %v1865 = vpop.permute.xlu0 %1864
          %v1867 = vsel %vm1715, %v1860, %v1855
          %v1868 = vsel %vm1715, %v1865, %v1856
          %s1869 = scalar_lea.vmem [#allocation17], 16
          %1870 = vst [vmem:[%s1869] sm:$0xff] %v1867
          %1871 = vst [vmem:[%s1869 + $0x8] sm:$0xff] %v1868
          %s1872 = scalar_lea.vmem [#allocation3], 32
          %v1873 = vld [vmem:[%s1872] sm:$0xff]
          %v1874 = vld [vmem:[%s1872 + $0x8] sm:$0xff]
          %v1875 = vpack.c.bf16 %v1874, %v1873
          %v1876 = vld [vmem:[#allocation11] sm:$0xf]
          %v1877 = vld [vmem:[#allocation11 + $0x4] sm:$0xf]
          %v1878 = vld [vmem:[#allocation11 + $0x8] sm:$0xf]
          %v1879 = vld [vmem:[#allocation11 + $0xc] sm:$0xf]
          %v1880 = vld [vmem:[#allocation11 + $0x10] sm:$0xf]
          %v1881 = vld [vmem:[#allocation11 + $0x14] sm:$0xf]
          %v1882 = vld [vmem:[#allocation11 + $0x18] sm:$0xf]
          %v1883 = vld [vmem:[#allocation11 + $0x1c] sm:$0xf]
          %v1884 = vld [vmem:[#allocation11 + $0x20] sm:$0xf]
          %v1885 = vld [vmem:[#allocation11 + $0x24] sm:$0xf]
          %v1886 = vld [vmem:[#allocation11 + $0x28] sm:$0xf]
          %v1887 = vld [vmem:[#allocation11 + $0x2c] sm:$0xf]
          %v1888 = vld [vmem:[#allocation11 + $0x30] sm:$0xf]
          %v1889 = vld [vmem:[#allocation11 + $0x34] sm:$0xf]
          %v1890 = vld [vmem:[#allocation11 + $0x38] sm:$0xf]
          %v1891 = vld [vmem:[#allocation11 + $0x3c] sm:$0xf]
          %v1908 = vunpack.c.l.b16 %v1876
          %v1909 = vunpack.c.l.b16 %v1877
          %v1910 = vunpack.c.l.b16 %v1878
          %v1911 = vunpack.c.l.b16 %v1879
          %v1912 = vunpack.c.l.b16 %v1880
          %v1913 = vunpack.c.l.b16 %v1881
          %v1914 = vunpack.c.l.b16 %v1882
          %v1915 = vunpack.c.l.b16 %v1883
          %v1916 = vunpack.c.l.b16 %v1884
          %v1917 = vunpack.c.l.b16 %v1885
          %v1918 = vunpack.c.l.b16 %v1886
          %v1919 = vunpack.c.l.b16 %v1887
          %v1920 = vunpack.c.l.b16 %v1888
          %v1921 = vunpack.c.l.b16 %v1889
          %v1922 = vunpack.c.l.b16 %v1890
          %v1923 = vunpack.c.l.b16 %v1891
          %v1924 = vpack.c.b16 %v1909, %v1908
          %v1925 = vpack.c.b16 %v1911, %v1910
          %v1926 = vpack.c.b16 %v1913, %v1912
          %v1927 = vpack.c.b16 %v1915, %v1914
          %v1928 = vpack.c.b16 %v1917, %v1916
          %v1929 = vpack.c.b16 %v1919, %v1918
          %v1930 = vpack.c.b16 %v1921, %v1920
          %v1931 = vpack.c.b16 %v1923, %v1922
          %1940 = vmatpush.bf16.msra.mxu0 %v1931
          %1941 = vmatpush.bf16.msra.mxu0 %v1930
          %1942 = vmatpush.bf16.msra.mxu0 %v1929
          %1943 = vmatpush.bf16.msra.mxu0 %v1928
          %1944 = vmatpush.bf16.msra.mxu0 %v1927
          %1945 = vmatpush.bf16.msra.mxu0 %v1926
          %1946 = vmatpush.bf16.msra.mxu0 %v1925
          %1947 = vmatpush.bf16.msra.mxu0 %v1924
          %1948 = vmatmul.bf16.gmra.mxu0 %v1875
          %v1949 = vpop.f32.mrf.mxu0
          %v1950 = vadd.f32 0.0, %v1949
          %v1951 = vpop.f32.mrf.mxu0
          %v1952 = vadd.f32 0.0, %v1951
          %1953 = vdwg.mxu0
          %v1954 = vmul.f32 %v1610, %v1950
          %v1955 = vmul.f32 %v1611, %v1952
          %1956 = vadd.xlane.f32.xlu0 %v1954
          %v1957 = vpop.xlane.xlu0 %1956
          %1958 = vadd.xlane.f32.xlu0 %v1955
          %v1959 = vpop.xlane.xlu0 %1958
          %v1960 = vld [vmem:[#allocation4] sm:$0x1]
          %v1962 = vperm.slane %v1960, 0
          %v1964 = vadd.f32 %v1957, %v1962
          %v1965 = vadd.f32 %v1959, %v1962
          %v1966 = vmul.f32 %v1603, %v1950
          %v1967 = vmul.f32 %v1604, %v1952
          %1968 = vadd.xlane.f32.xlu0 %v1966
          %v1969 = vpop.xlane.xlu0 %1968
          %1970 = vadd.xlane.f32.xlu0 %v1967
          %v1971 = vpop.xlane.xlu0 %1970
          %v1972 = vadd.f32 %v1969, %v1962
          %v1973 = vadd.f32 %v1971, %v1962
          %1975 = vset.pattern.permute.xlu0 0
          %1976 = vperm.xlu0 %1975, %v1972
          %v1977 = vpop.permute.xlu0 %1976
          %1980 = vset.pattern.permute.xlu0 0
          %1981 = vperm.xlu0 %1980, %v1973
          %v1982 = vpop.permute.xlu0 %1981
          %v1984 = vsel %vm1716, %v1977, 0.0
          %v1985 = vsel %vm1716, %v1982, 0.0
          %1987 = vset.pattern.permute.xlu0 0
          %1988 = vperm.xlu0 %1987, %v1964
          %v1989 = vpop.permute.xlu0 %1988
          %1992 = vset.pattern.permute.xlu0 0
          %1993 = vperm.xlu0 %1992, %v1965
          %v1994 = vpop.permute.xlu0 %1993
          %v1996 = vsel %vm1715, %v1989, %v1984
          %v1997 = vsel %vm1715, %v1994, %v1985
          %s1998 = scalar_lea.vmem [#allocation17], 32
          %1999 = vst [vmem:[%s1998] sm:$0xff] %v1996
          %2000 = vst [vmem:[%s1998 + $0x8] sm:$0xff] %v1997
          %v2001 = vpack.c.bf16 %v1599, %v1598
          %v2002 = vld [vmem:[#allocation13] sm:$0xf]
          %v2003 = vld [vmem:[#allocation13 + $0x4] sm:$0xf]
          %v2004 = vld [vmem:[#allocation13 + $0x8] sm:$0xf]
          %v2005 = vld [vmem:[#allocation13 + $0xc] sm:$0xf]
          %v2006 = vld [vmem:[#allocation13 + $0x10] sm:$0xf]
          %v2007 = vld [vmem:[#allocation13 + $0x14] sm:$0xf]
          %v2008 = vld [vmem:[#allocation13 + $0x18] sm:$0xf]
          %v2009 = vld [vmem:[#allocation13 + $0x1c] sm:$0xf]
          %v2010 = vld [vmem:[#allocation13 + $0x20] sm:$0xf]
          %v2011 = vld [vmem:[#allocation13 + $0x24] sm:$0xf]
          %v2012 = vld [vmem:[#allocation13 + $0x28] sm:$0xf]
          %v2013 = vld [vmem:[#allocation13 + $0x2c] sm:$0xf]
          %v2014 = vld [vmem:[#allocation13 + $0x30] sm:$0xf]
          %v2015 = vld [vmem:[#allocation13 + $0x34] sm:$0xf]
          %v2016 = vld [vmem:[#allocation13 + $0x38] sm:$0xf]
          %v2017 = vld [vmem:[#allocation13 + $0x3c] sm:$0xf]
          %v2018 = vld [vmem:[%s12] sm:$0x1]
          %v2020 = vperm.slane %v2018, 0
          %v2038 = vunpack.c.l.b16 %v2002
          %v2039 = vunpack.c.l.b16 %v2003
          %v2040 = vunpack.c.l.b16 %v2004
          %v2041 = vunpack.c.l.b16 %v2005
          %v2042 = vunpack.c.l.b16 %v2006
          %v2043 = vunpack.c.l.b16 %v2007
          %v2044 = vunpack.c.l.b16 %v2008
          %v2045 = vunpack.c.l.b16 %v2009
          %v2046 = vunpack.c.l.b16 %v2010
          %v2047 = vunpack.c.l.b16 %v2011
          %v2048 = vunpack.c.l.b16 %v2012
          %v2049 = vunpack.c.l.b16 %v2013
          %v2050 = vunpack.c.l.b16 %v2014
          %v2051 = vunpack.c.l.b16 %v2015
          %v2052 = vunpack.c.l.b16 %v2016
          %v2053 = vunpack.c.l.b16 %v2017
          %v2054 = vpack.c.b16 %v2039, %v2038
          %v2055 = vpack.c.b16 %v2041, %v2040
          %v2056 = vpack.c.b16 %v2043, %v2042
          %v2057 = vpack.c.b16 %v2045, %v2044
          %v2058 = vpack.c.b16 %v2047, %v2046
          %v2059 = vpack.c.b16 %v2049, %v2048
          %v2060 = vpack.c.b16 %v2051, %v2050
          %v2061 = vpack.c.b16 %v2053, %v2052
          %2070 = vmatpush.bf16.msra.mxu0 %v2061
          %2071 = vmatpush.bf16.msra.mxu0 %v2060
          %2072 = vmatpush.bf16.msra.mxu0 %v2059
          %2073 = vmatpush.bf16.msra.mxu0 %v2058
          %2074 = vmatpush.bf16.msra.mxu0 %v2057
          %2075 = vmatpush.bf16.msra.mxu0 %v2056
          %2076 = vmatpush.bf16.msra.mxu0 %v2055
          %2077 = vmatpush.bf16.msra.mxu0 %v2054
          %2078 = vmatmul.bf16.gmra.mxu0 %v2001
          %v2079 = vpop.f32.mrf.mxu0
          %v2080 = vadd.f32 %v2020, %v2079
          %v2081 = vpop.f32.mrf.mxu0
          %v2082 = vadd.f32 %v2020, %v2081
          %2083 = vdwg.mxu0
          %2084 = vst [vmem:[#allocation18] sm:$0xff] %v2080
          %2085 = vst [vmem:[#allocation18 + $0x8] sm:$0xff] %v2082
          %v2086 = vpack.c.bf16 %v1602, %v1601
          %v2087 = vld [vmem:[#allocation13] sm:$0xf]
          %v2088 = vld [vmem:[#allocation13 + $0x4] sm:$0xf]
          %v2089 = vld [vmem:[#allocation13 + $0x8] sm:$0xf]
          %v2090 = vld [vmem:[#allocation13 + $0xc] sm:$0xf]
          %v2091 = vld [vmem:[#allocation13 + $0x10] sm:$0xf]
          %v2092 = vld [vmem:[#allocation13 + $0x14] sm:$0xf]
          %v2093 = vld [vmem:[#allocation13 + $0x18] sm:$0xf]
          %v2094 = vld [vmem:[#allocation13 + $0x1c] sm:$0xf]
          %v2095 = vld [vmem:[#allocation13 + $0x20] sm:$0xf]
          %v2096 = vld [vmem:[#allocation13 + $0x24] sm:$0xf]
          %v2097 = vld [vmem:[#allocation13 + $0x28] sm:$0xf]
          %v2098 = vld [vmem:[#allocation13 + $0x2c] sm:$0xf]
          %v2099 = vld [vmem:[#allocation13 + $0x30] sm:$0xf]
          %v2100 = vld [vmem:[#allocation13 + $0x34] sm:$0xf]
          %v2101 = vld [vmem:[#allocation13 + $0x38] sm:$0xf]
          %v2102 = vld [vmem:[#allocation13 + $0x3c] sm:$0xf]
          %v2103 = vld [vmem:[%s12] sm:$0x1]
          %v2105 = vperm.slane %v2103, 0
          %v2123 = vunpack.c.l.b16 %v2087
          %v2124 = vunpack.c.l.b16 %v2088
          %v2125 = vunpack.c.l.b16 %v2089
          %v2126 = vunpack.c.l.b16 %v2090
          %v2127 = vunpack.c.l.b16 %v2091
          %v2128 = vunpack.c.l.b16 %v2092
          %v2129 = vunpack.c.l.b16 %v2093
          %v2130 = vunpack.c.l.b16 %v2094
          %v2131 = vunpack.c.l.b16 %v2095
          %v2132 = vunpack.c.l.b16 %v2096
          %v2133 = vunpack.c.l.b16 %v2097
          %v2134 = vunpack.c.l.b16 %v2098
          %v2135 = vunpack.c.l.b16 %v2099
          %v2136 = vunpack.c.l.b16 %v2100
          %v2137 = vunpack.c.l.b16 %v2101
          %v2138 = vunpack.c.l.b16 %v2102
          %v2139 = vpack.c.b16 %v2124, %v2123
          %v2140 = vpack.c.b16 %v2126, %v2125
          %v2141 = vpack.c.b16 %v2128, %v2127
          %v2142 = vpack.c.b16 %v2130, %v2129
          %v2143 = vpack.c.b16 %v2132, %v2131
          %v2144 = vpack.c.b16 %v2134, %v2133
          %v2145 = vpack.c.b16 %v2136, %v2135
          %v2146 = vpack.c.b16 %v2138, %v2137
          %2155 = vmatpush.bf16.msra.mxu0 %v2146
          %2156 = vmatpush.bf16.msra.mxu0 %v2145
          %2157 = vmatpush.bf16.msra.mxu0 %v2144
          %2158 = vmatpush.bf16.msra.mxu0 %v2143
          %2159 = vmatpush.bf16.msra.mxu0 %v2142
          %2160 = vmatpush.bf16.msra.mxu0 %v2141
          %2161 = vmatpush.bf16.msra.mxu0 %v2140
          %2162 = vmatpush.bf16.msra.mxu0 %v2139
          %2163 = vmatmul.bf16.gmra.mxu0 %v2086
          %v2164 = vpop.f32.mrf.mxu0
          %v2165 = vadd.f32 %v2105, %v2164
          %v2166 = vpop.f32.mrf.mxu0
          %v2167 = vadd.f32 %v2105, %v2166
          %2168 = vdwg.mxu0
          %2169 = vst [vmem:[#allocation20] sm:$0xff] %v2165
          %2170 = vst [vmem:[#allocation20 + $0x8] sm:$0xff] %v2167
          %vm2171 = vcmp.lt.s32.totalorder %v1613, 32
          %v2172 = vmul.f32 %v1601, 1.1111112
          %v2173 = vmul.f32 %v1602, 1.1111112
          %v2174 = vsel %vm2171, %v2172, -1e+30
          %v2175 = vsel %vm2171, %v2173, -1e+30
          %2176 = vmax.xlane.f32.xlu0 %v2174
          %v2177 = vpop.xlane.xlu0 %2176
          %2178 = vmax.xlane.f32.xlu0 %v2175
          %v2179 = vpop.xlane.xlu0 %2178
          %v2180 = vsub.f32 %v2174, %v2177
          %v2181 = vsub.f32 %v2175, %v2179
          %v2182 = vmul.f32 %v2180, 1.442695
          %v2183 = vpow.pop %v2182
          %v2184 = vmul.f32 %v2181, 1.442695
          %v2185 = vpow.pop %v2184
          %2186 = vadd.xlane.f32.xlu0 %v2183
          %v2187 = vpop.xlane.xlu0 %2186
          %2188 = vadd.xlane.f32.xlu0 %v2185
          %v2189 = vpop.xlane.xlu0 %2188
          %v2190 = vlog2.pop %v2187
          %v2191 = vmul.f32 %v2190, 0.6931472
          %v2192 = vlog2.pop %v2189
          %v2193 = vmul.f32 %v2192, 0.6931472
          %v2194 = vsub.f32 %v2180, %v2191
          %v2195 = vsub.f32 %v2181, %v2193
          %v2196 = vmul.f32 %v1598, 16.666666
          %v2197 = vmul.f32 %v1599, 16.666666
          %v2198 = vsel %vm2171, %v2196, -1e+30
          %v2199 = vsel %vm2171, %v2197, -1e+30
          %2200 = vmax.xlane.f32.xlu0 %v2198
          %v2201 = vpop.xlane.xlu0 %2200
          %2202 = vmax.xlane.f32.xlu0 %v2199
          %v2203 = vpop.xlane.xlu0 %2202
          %v2204 = vsub.f32 %v2198, %v2201
          %v2205 = vsub.f32 %v2199, %v2203
          %v2206 = vmul.f32 %v2204, 1.442695
          %v2207 = vpow.pop %v2206
          %v2208 = vmul.f32 %v2205, 1.442695
          %v2209 = vpow.pop %v2208
          %2210 = vadd.xlane.f32.xlu0 %v2207
          %v2211 = vpop.xlane.xlu0 %2210
          %2212 = vadd.xlane.f32.xlu0 %v2209
          %v2213 = vpop.xlane.xlu0 %2212
          %v2214 = vrcp.pop %v2211
          %v2215 = vmul.f32 %v2211, %v2214
          %v2216 = vsub.f32 1.0, %v2215
          %v2217 = vmul.f32 %v2214, %v2216
          %v2218 = vadd.f32 %v2214, %v2217
          %vm2219 = vweird.f32 %v2211
          %vm2220 = vweird.f32 %v2214
          %vm2221 = vmor %vm2219, %vm2220
          %v2222 = vsel %vm2221, %v2214, %v2218
          %v2223 = vand.u32 2147483647, %v2211
          %vm2224 = vcmp.eq.f32.partialorder %v2223, 8.507059e+37
          %v2225 = vand.u32 %v2211, 2147483648
          %v2226 = vor.u32 1.1754944e-38, %v2225
          %v2227 = vsel %vm2224, %v2226, %v2222
          %v2228 = vmul.f32 %v2207, %v2227
          %v2229 = vrcp.pop %v2213
          %v2230 = vmul.f32 %v2213, %v2229
          %v2231 = vsub.f32 1.0, %v2230
          %v2232 = vmul.f32 %v2229, %v2231
          %v2233 = vadd.f32 %v2229, %v2232
          %vm2234 = vweird.f32 %v2213
          %vm2235 = vweird.f32 %v2229
          %vm2236 = vmor %vm2234, %vm2235
          %v2237 = vsel %vm2236, %v2229, %v2233
          %v2238 = vand.u32 2147483647, %v2213
          %vm2239 = vcmp.eq.f32.partialorder %v2238, 8.507059e+37
          %v2240 = vand.u32 %v2213, 2147483648
          %v2241 = vor.u32 1.1754944e-38, %v2240
          %v2242 = vsel %vm2239, %v2241, %v2237
          %v2243 = vmul.f32 %v2209, %v2242
          %v2244 = vmul.f32 %v2228, %v2194
          %v2245 = vmul.f32 %v2243, %v2195
          %v2246 = vsel %vm2171, %v2244, 0.0
          %v2247 = vsel %vm2171, %v2245, 0.0
          %2248 = vadd.xlane.f32.xlu0 %v2246
          %v2249 = vpop.xlane.xlu0 %2248
          %2250 = vadd.xlane.f32.xlu0 %v2247
          %v2251 = vpop.xlane.xlu0 %2250
          %v2252 = vsub.f32 0.0, %v2249
          %v2253 = vsub.f32 0.0, %v2251
          %v2254 = vadd.f32 %v2252, %v2253
          %v2255 = vrot.slane %v2254, 4
          %v2256 = vadd.f32 %v2254, %v2255
          %v2257 = vrot.slane %v2256, 2
          %v2258 = vadd.f32 %v2256, %v2257
          %v2259 = vrot.slane %v2258, 1
          %v2260 = vadd.f32 %v2258, %v2259
          %v2261 = vrcp.pop 16.0
          %v2262 = vmul.f32 16.0, %v2261
          %v2263 = vsub.f32 1.0, %v2262
          %v2264 = vmul.f32 %v2261, %v2263
          %v2265 = vadd.f32 %v2261, %v2264
          %vm2266 = vweird.f32 %v2261
          %v2267 = vsel %vm2266, %v2261, %v2265
          %v2268 = vmul.f32 %v2260, %v2267
          %v2269 = vmul.f32 %v1598, 1.1111112
          %v2270 = vmul.f32 %v1599, 1.1111112
          %v2271 = vsel %vm2171, %v2269, -1e+30
          %v2272 = vsel %vm2171, %v2270, -1e+30
          %2273 = vmax.xlane.f32.xlu0 %v2271
          %v2274 = vpop.xlane.xlu0 %2273
          %2275 = vmax.xlane.f32.xlu0 %v2272
          %v2276 = vpop.xlane.xlu0 %2275
          %v2277 = vsub.f32 %v2271, %v2274
          %v2278 = vsub.f32 %v2272, %v2276
          %v2279 = vmul.f32 %v2277, 1.442695
          %v2280 = vpow.pop %v2279
          %v2281 = vmul.f32 %v2278, 1.442695
          %v2282 = vpow.pop %v2281
          %2283 = vadd.xlane.f32.xlu0 %v2280
          %v2284 = vpop.xlane.xlu0 %2283
          %2285 = vadd.xlane.f32.xlu0 %v2282
          %v2286 = vpop.xlane.xlu0 %2285
          %v2287 = vlog2.pop %v2284
          %v2288 = vmul.f32 %v2287, 0.6931472
          %v2289 = vlog2.pop %v2286
          %v2290 = vmul.f32 %v2289, 0.6931472
          %v2291 = vsub.f32 %v2277, %v2288
          %v2292 = vsub.f32 %v2278, %v2290
          %v2293 = vmul.f32 %v1601, 16.666666
          %v2294 = vmul.f32 %v1602, 16.666666
          %v2295 = vsel %vm2171, %v2293, -1e+30
          %v2296 = vsel %vm2171, %v2294, -1e+30
          %2297 = vmax.xlane.f32.xlu0 %v2295
          %v2298 = vpop.xlane.xlu0 %2297
          %2299 = vmax.xlane.f32.xlu0 %v2296
          %v2300 = vpop.xlane.xlu0 %2299
          %v2301 = vsub.f32 %v2295, %v2298
          %v2302 = vsub.f32 %v2296, %v2300
          %v2303 = vmul.f32 %v2301, 1.442695
          %v2304 = vpow.pop %v2303
          %v2305 = vmul.f32 %v2302, 1.442695
          %v2306 = vpow.pop %v2305
          %2307 = vadd.xlane.f32.xlu0 %v2304
          %v2308 = vpop.xlane.xlu0 %2307
          %2309 = vadd.xlane.f32.xlu0 %v2306
          %v2310 = vpop.xlane.xlu0 %2309
          %v2311 = vrcp.pop %v2308
          %v2312 = vmul.f32 %v2308, %v2311
          %v2313 = vsub.f32 1.0, %v2312
          %v2314 = vmul.f32 %v2311, %v2313
          %v2315 = vadd.f32 %v2311, %v2314
          %vm2316 = vweird.f32 %v2308
          %vm2317 = vweird.f32 %v2311
          %vm2318 = vmor %vm2316, %vm2317
          %v2319 = vsel %vm2318, %v2311, %v2315
          %v2320 = vand.u32 2147483647, %v2308
          %vm2321 = vcmp.eq.f32.partialorder %v2320, 8.507059e+37
          %v2322 = vand.u32 %v2308, 2147483648
          %v2323 = vor.u32 1.1754944e-38, %v2322
          %v2324 = vsel %vm2321, %v2323, %v2319
          %v2325 = vmul.f32 %v2304, %v2324
          %v2326 = vrcp.pop %v2310
          %v2327 = vmul.f32 %v2310, %v2326
          %v2328 = vsub.f32 1.0, %v2327
          %v2329 = vmul.f32 %v2326, %v2328
          %v2330 = vadd.f32 %v2326, %v2329
          %vm2331 = vweird.f32 %v2310
          %vm2332 = vweird.f32 %v2326
          %vm2333 = vmor %vm2331, %vm2332
          %v2334 = vsel %vm2333, %v2326, %v2330
          %v2335 = vand.u32 2147483647, %v2310
          %vm2336 = vcmp.eq.f32.partialorder %v2335, 8.507059e+37
          %v2337 = vand.u32 %v2310, 2147483648
          %v2338 = vor.u32 1.1754944e-38, %v2337
          %v2339 = vsel %vm2336, %v2338, %v2334
          %v2340 = vmul.f32 %v2306, %v2339
          %v2341 = vmul.f32 %v2325, %v2291
          %v2342 = vmul.f32 %v2340, %v2292
          %v2343 = vsel %vm2171, %v2341, 0.0
          %v2344 = vsel %vm2171, %v2342, 0.0
          %2345 = vadd.xlane.f32.xlu0 %v2343
          %v2346 = vpop.xlane.xlu0 %2345
          %2347 = vadd.xlane.f32.xlu0 %v2344
          %v2348 = vpop.xlane.xlu0 %2347
          %v2349 = vsub.f32 0.0, %v2346
          %v2350 = vsub.f32 0.0, %v2348
          %v2351 = vadd.f32 %v2349, %v2350
          %v2352 = vrot.slane %v2351, 4
          %v2353 = vadd.f32 %v2351, %v2352
          %v2354 = vrot.slane %v2353, 2
          %v2355 = vadd.f32 %v2353, %v2354
          %v2356 = vrot.slane %v2355, 1
          %v2357 = vadd.f32 %v2355, %v2356
          %v2358 = vmul.f32 %v2357, %v2267
          %v2359 = vadd.f32 %v2268, %v2358
          %v2360 = vmul.f32 %v2359, 0.5
          %vm2361 = vcmask 0
          %2362 = vst.msk [vmem:[#allocation21] sm:$0x1] %vm2361, %v2360
        $region112: #{tpu_custom_call.1} parent=71 // pred_fallthru
          _
        // Predicated region
        $region113: #{tpu_custom_call.1} parent=71 // pred_check
          %p2363 = pneg %p330
        $region114: #{tpu_custom_call.1} parent=71 // pred_check_branch
          %2365 = sbr.rel (%p2363) target = $region116
        $region115: #{tpu_custom_call.1} parent=71 // pred_region
          %2367 = vsyncadd [#allocation7], 0
          %s2368 = sshll.u32 [#allocation14], 4
          %s2369 = int_to_ptr.vmem [resolvable:$true] %s2368
          %s2370 = sshll.u32 %s13, 4
          %s2371 = int_to_ptr.hbm [resolvable:$true] %s2370
          %2376 = dma.vmem_to_hbm [thread:$0]  %s2369, 256, %s2371, [#allocation7], 128, 128, 8
        $region116: #{tpu_custom_call.1} parent=71 // pred_fallthru
          _
        // Predicated region
        $region117: #{tpu_custom_call.1} parent=71 // pred_check
          %p2377 = pneg %p351
        $region118: #{tpu_custom_call.1} parent=71 // pred_check_branch
          %2379 = sbr.rel (%p2377) target = $region120
        $region119: #{tpu_custom_call.1} parent=71 // pred_region
          %2381 = vsyncadd [#allocation16], 0
          %s2382 = sshll.u32 [#allocation15], 4
          %s2383 = int_to_ptr.vmem [resolvable:$true] %s2382
          %s2384 = sshll.u32 %s14, 4
          %s2385 = int_to_ptr.hbm [resolvable:$true] %s2384
          %2390 = dma.vmem_to_hbm [thread:$0]  %s2383, 256, %s2385, [#allocation16], 128, 128, 8
        $region120: #{tpu_custom_call.1} parent=71 // pred_fallthru
          _
        // Predicated region
        $region121: #{tpu_custom_call.1} parent=71 // pred_check
          %p2391 = pneg %p372
        $region122: #{tpu_custom_call.1} parent=71 // pred_check_branch
          %2393 = sbr.rel (%p2391) target = $region124
        $region123: #{tpu_custom_call.1} parent=71 // pred_region
          %2395 = vsyncadd [#allocation16], 0
          %s2396 = sshll.u32 [#allocation17], 4
          %s2397 = int_to_ptr.vmem [resolvable:$true] %s2396
          %s2398 = sshll.u32 %s15, 4
          %s2399 = int_to_ptr.hbm [resolvable:$true] %s2398
          %2404 = dma.vmem_to_hbm [thread:$0]  %s2397, 768, %s2399, [#allocation16], 128, 128, 8
        $region124: #{tpu_custom_call.1} parent=71 // pred_fallthru
          _
        // Predicated region
        $region125: #{tpu_custom_call.1} parent=71 // pred_check
          %p2405 = pneg %p393
        $region126: #{tpu_custom_call.1} parent=71 // pred_check_branch
          %2407 = sbr.rel (%p2405) target = $region128
        $region127: #{tpu_custom_call.1} parent=71 // pred_region
          %2409 = vsyncadd [#allocation19], 0
          %s2410 = sshll.u32 [#allocation18], 4
          %s2411 = int_to_ptr.vmem [resolvable:$true] %s2410
          %s2412 = sshll.u32 %s16, 4
          %s2413 = int_to_ptr.hbm [resolvable:$true] %s2412
          %2418 = dma.vmem_to_hbm [thread:$0]  %s2411, 256, %s2413, [#allocation19], 128, 128, 8
        $region128: #{tpu_custom_call.1} parent=71 // pred_fallthru
          _
        // Predicated region
        $region129: #{tpu_custom_call.1} parent=71 // pred_check
          %p2419 = pneg %p414
        $region130: #{tpu_custom_call.1} parent=71 // pred_check_branch
          %2421 = sbr.rel (%p2419) target = $region132
        $region131: #{tpu_custom_call.1} parent=71 // pred_region
          %2423 = vsyncadd [#allocation19], 0
          %s2424 = sshll.u32 [#allocation20], 4
          %s2425 = int_to_ptr.vmem [resolvable:$true] %s2424
          %s2426 = sshll.u32 %s17, 4
          %s2427 = int_to_ptr.hbm [resolvable:$true] %s2426
          %2432 = dma.vmem_to_hbm [thread:$0]  %s2425, 256, %s2427, [#allocation19], 128, 128, 8
        $region132: #{tpu_custom_call.1} parent=71 // pred_fallthru
          _
        // Predicated region
        $region133: #{tpu_custom_call.1} parent=71 // pred_check
          %p2433 = pneg %p435
        $region134: #{tpu_custom_call.1} parent=71 // pred_check_branch
          %2435 = sbr.rel (%p2433) target = $region136
        $region135: #{tpu_custom_call.1} parent=71 // pred_region
          %2437 = vsyncadd [#allocation22], 0
          %s2439 = sshll.u32 [#allocation21], 4
          %s2440 = int_to_ptr.vmem [resolvable:$true] %s2439
          %s2441 = sshll.u32 %s18, 4
          %s2442 = int_to_ptr.hbm [resolvable:$true] %s2441
          %2444 = dma.vmem_to_hbm [thread:$0]  %s2440, 16, %s2442, [#allocation22]
        $region136: #{tpu_custom_call.1} parent=71 // pred_fallthru
          _
        // Predicated region
        $region137: #{tpu_custom_call.1} parent=71 // pred_check
          %p2445 = pneg %p330
        $region138: #{tpu_custom_call.1} parent=71 // pred_check_branch
          %2447 = sbr.rel (%p2445) target = $region140
        $region139: #{tpu_custom_call.1} parent=71 // pred_region
          %2449 = dma.done [#allocation7], 256
        $region140: #{tpu_custom_call.1} parent=71 // pred_fallthru
          _
        // Predicated region
        $region141: #{tpu_custom_call.1} parent=71 // pred_check
          %p2450 = pneg %p351
        $region142: #{tpu_custom_call.1} parent=71 // pred_check_branch
          %2452 = sbr.rel (%p2450) target = $region144
        $region143: #{tpu_custom_call.1} parent=71 // pred_region
          %2454 = dma.done [#allocation16], 256
        $region144: #{tpu_custom_call.1} parent=71 // pred_fallthru
          _
        // Predicated region
        $region145: #{tpu_custom_call.1} parent=71 // pred_check
          %p2455 = pneg %p372
        $region146: #{tpu_custom_call.1} parent=71 // pred_check_branch
          %2457 = sbr.rel (%p2455) target = $region148
        $region147: #{tpu_custom_call.1} parent=71 // pred_region
          %2459 = dma.done [#allocation16], 768
        $region148: #{tpu_custom_call.1} parent=71 // pred_fallthru
          _
        // Predicated region
        $region149: #{tpu_custom_call.1} parent=71 // pred_check
          %p2460 = pneg %p393
        $region150: #{tpu_custom_call.1} parent=71 // pred_check_branch
          %2462 = sbr.rel (%p2460) target = $region152
        $region151: #{tpu_custom_call.1} parent=71 // pred_region
          %2464 = dma.done [#allocation19], 256
        $region152: #{tpu_custom_call.1} parent=71 // pred_fallthru
          _
        // Predicated region
        $region153: #{tpu_custom_call.1} parent=71 // pred_check
          %p2465 = pneg %p414
        $region154: #{tpu_custom_call.1} parent=71 // pred_check_branch
          %2467 = sbr.rel (%p2465) target = $region156
        $region155: #{tpu_custom_call.1} parent=71 // pred_region
          %2469 = dma.done [#allocation19], 256
        $region156: #{tpu_custom_call.1} parent=71 // pred_fallthru
          _
        // Predicated region
        $region157: #{tpu_custom_call.1} parent=71 // pred_check
          %p2470 = pneg %p435
        $region158: #{tpu_custom_call.1} parent=71 // pred_check_branch
          %2472 = sbr.rel (%p2470) target = $region160
        $region159: #{tpu_custom_call.1} parent=71 // pred_region
          %2474 = dma.done [#allocation22], 16
        $region160: #{tpu_custom_call.1} parent=71 // pred_fallthru
          _
      $region72: #{tpu_custom_call.1} parent=5 // pred_fallthru
        _
      %p2475 = scmp.le.s32.totalorder 2, %s34
      // Predicated region
      $region161: #{tpu_custom_call.1} parent=5 // pred_check
        %p2476 = pneg %p2475
      $region162: #{tpu_custom_call.1} parent=5 // pred_check_branch
        %2478 = sbr.rel (%p2476) target = $region164
      $region163: #{tpu_custom_call.1} parent=5 // pred_region
        %s2479 = ssub.s32 %s34, 2
      $region164: #{tpu_custom_call.1} parent=5 // pred_fallthru
        _
    $region6: #{tpu_custom_call.1} parent=1 // loop_footer
      %s38 = sadd.s32 1, %s34
    $region7: #{tpu_custom_call.1} parent=1 // loop_footer_branch
      %33 = sbr.rel target = $region3
    $region8: #{tpu_custom_call.1} parent=1 // loop_exit
      _
    %2480 = vsyncpa [#allocation6], 1
    %s2481 = scalar_lea.sflag [#allocation6], 1
    %2482 = vsyncpa %s2481, 1
    %2483 = vsyncpa [#allocation9], 1
    %2484 = vsyncpa [#allocation12], 1
    %2485 = vsyncpa [#allocation7], 1
    %s2486 = scalar_lea.sflag [#allocation7], 1
    %2487 = vsyncpa %s2486, 1
    %2488 = vsyncpa [#allocation16], 1
    %2489 = vsyncpa [#allocation19], 1
    %2490 = vsyncpa [#allocation22], 1

// kernel: tpu_custom_call.1
$region0: #{tpu_custom_call.1}
  #allocation0 [shape = 'u32[]', space=smem, size = 0x4, offset = 0x4, fixed_abs, tag = 'smem constant byte address 0x4 - core index']
  #allocation1 [shape = 'u32[72,128]{1,0:T(1,128)}', space=vmem, size = 0x9000, scoped, tag = 'internal scratch']
  #allocation2 [shape = 'f32[3,16,128]{2,1,0:T(8,128)}', space=vmem, size = 0x6000, scoped, tag = 'scratch operand']
  #allocation3 [shape = 'f32[3,16,128]{2,1,0:T(8,128)}', space=vmem, size = 0x6000, scoped, tag = 'scratch operand']
  #allocation4 [shape = 'f32[1,1]{1,0:T(1,128)S(1)}', space=vmem, size = 0x200, scoped, tag = 'scoped memory for tpu_custom_call.1']
  %s0 = inlined_call_operand.vmem [shape: bf16[3,16,128], index: 0, kind: input, shape index: {}]
  %s1 = inlined_call_operand.vmem [shape: bf16[16,16], index: 1, kind: input, shape index: {}]
  %s2 = inlined_call_operand.vmem [shape: bf16[16,16], index: 2, kind: input, shape index: {}]
  %s3 = inlined_call_operand.vmem [shape: f32[16,1], index: 3, kind: input, shape index: {}]
  %s4 = inlined_call_operand.vmem [shape: f32[16,1], index: 4, kind: input, shape index: {}]
  %s5 = inlined_call_operand.vmem [shape: f32[16,1], index: 5, kind: input, shape index: {}]
  %s6 = inlined_call_operand.hbm [shape: bf16[128,512], index: 6, kind: input, shape index: {}]
  %s7 = inlined_call_operand.hbm [shape: bf16[512,128], index: 7, kind: input, shape index: {}]
  %s8 = inlined_call_operand.hbm [shape: bf16[128,128], index: 8, kind: input, shape index: {}]
  %s9 = inlined_call_operand.hbm [shape: bf16[128,128], index: 9, kind: input, shape index: {}]
  %s10 = inlined_call_operand.<no memory space> [shape: f32[1,1], index: 10, kind: input, shape index: {}]
  %s11 = inlined_call_operand.hbm [shape: bf16[128,128], index: 11, kind: input, shape index: {}]
  %s12 = inlined_call_operand.vmem [shape: f32[1,128], index: 12, kind: input, shape index: {}]
  %s13 = inlined_call_operand.hbm [shape: f32[16,128], index: 13, kind: output, shape index: {0}]
  %s14 = inlined_call_operand.hbm [shape: f32[16,128], index: 14, kind: output, shape index: {1}]
  %s15 = inlined_call_operand.hbm [shape: f32[3,16,128], index: 15, kind: output, shape index: {2}]
  %s16 = inlined_call_operand.hbm [shape: f32[16,128], index: 16, kind: output, shape index: {3}]
  %s17 = inlined_call_operand.hbm [shape: f32[16,128], index: 17, kind: output, shape index: {4}]
  %s18 = inlined_call_operand.hbm [shape: f32[1,1], index: 18, kind: output, shape index: {5}]
  %19 = xla_tuple %s13, %s14, %s15, %s16, %s17, %s18
  %s20 = sld [smem:[#allocation0]]
  $region165: #{tpu_custom_call.1} parent=0
    _
  %s22 = ssub.s32 1, %s20
  %s23 = scalar_select 0, %s22, %s20
  %v24 = vstv %s10
  %25 = vst [vmem:[#allocation4] sm:$0x1] %v24
  $region1: #{tpu_custom_call.1} parent=0
    #allocation5 [shape = 'u8[131072]{0}', space=vmem, size = 0x20000, scoped, tag = 'input window, operand 6, single buffered']
    #allocation6 [shape = 's32[2]{0}', space=sflag, size = 0x8, scoped, tag = 'scoped memory for tpu_custom_call.1']
    #allocation7 [shape = 's32[2]{0}', space=sflag, size = 0x8, scoped, tag = 'scoped memory for tpu_custom_call.1']
    #allocation8 [shape = 'u8[131072]{0}', space=vmem, size = 0x20000, scoped, tag = 'input window, operand 7, single buffered']
    #allocation9 [shape = 's32[1]{0}', space=sflag, size = 0x4, scoped, tag = 'scoped memory for tpu_custom_call.1']
    #allocation10 [shape = 'u8[32768]{0}', space=vmem, size = 0x8000, scoped, tag = 'input window, operand 8, single buffered']
    #allocation11 [shape = 'u8[32768]{0}', space=vmem, size = 0x8000, scoped, tag = 'input window, operand 9, single buffered']
    #allocation12 [shape = 's32[1]{0}', space=sflag, size = 0x4, scoped, tag = 'scoped memory for tpu_custom_call.1']
    #allocation13 [shape = 'u8[32768]{0}', space=vmem, size = 0x8000, scoped, tag = 'input window, operand 11, single buffered']
    #allocation14 [shape = 'u8[8192]{0}', space=vmem, size = 0x2000, scoped, tag = 'output window, operand 0, single buffered']
    #allocation15 [shape = 'u8[8192]{0}', space=vmem, size = 0x2000, scoped, tag = 'output window, operand 1, single buffered']
    #allocation16 [shape = 's32[1]{0}', space=sflag, size = 0x4, scoped, tag = 'scoped memory for tpu_custom_call.1']
    #allocation17 [shape = 'u8[24576]{0}', space=vmem, size = 0x6000, scoped, tag = 'output window, operand 2, single buffered']
    #allocation18 [shape = 'u8[8192]{0}', space=vmem, size = 0x2000, scoped, tag = 'output window, operand 3, single buffered']
    #allocation19 [shape = 's32[1]{0}', space=sflag, size = 0x4, scoped, tag = 'scoped memory for tpu_custom_call.1']
    #allocation20 [shape = 'u8[8192]{0}', space=vmem, size = 0x2000, scoped, tag = 'output window, operand 4, single buffered']
    #allocation21 [shape = 'u8[512]{0}', space=vmem, size = 0x400, scoped, tag = 'output window, operand 5, single buffered']
    #allocation22 [shape = 's32[1]{0}', space=sflag, size = 0x4, scoped, tag = 'scoped memory for tpu_custom_call.1']
    %26 = vsyncpa [#allocation6], 0
    %27 = vsyncpa [#allocation9], 0
    %28 = vsyncpa [#allocation12], 0
    %29 = vsyncpa [#allocation7], 0
    %30 = vsyncpa [#allocation16], 0
    %31 = vsyncpa [#allocation19], 0
    %32 = vsyncpa [#allocation22], 0
    loop: start=0, step=1, limit=5
    $region2: #{tpu_custom_call.1} parent=1 // loop_pre_header
      _
    $region3: #{tpu_custom_call.1} parent=1 // loop_header
      %s34 = sphi 0, %s38
      %p35 = scmp.ge.s32.totalorder %s34, 5
      %s44 = sphi 0, %s46
      %s47 = sphi 0, %s44
      %s48 = sphi 0, %s47
      %s64 = sphi 0, %s48
      %s68 = sphi 0, %s68
      %s70 = sphi 0, %s68
      %s71 = sphi 0, %s70
      %s85 = sphi 0, %s71
      %s89 = sphi 0, %s89
      %s91 = sphi 0, %s89
      %s92 = sphi 0, %s91
      %s106 = sphi 0, %s92
      %s110 = sphi 0, %s110
      %s112 = sphi 0, %s110
      %s113 = sphi 0, %s112
      %s127 = sphi 0, %s113
      %s131 = sphi 0, %s131
      %s133 = sphi 0, %s131
      %s134 = sphi 0, %s133
      %s148 = sphi 0, %s134
      %s152 = sphi 0, %s152
      %s154 = sphi 0, %s152
      %s155 = sphi 0, %s154
      %s169 = sphi 0, %s155
      %s173 = sphi 0, %s173
      %s175 = sphi 0, %s173
      %s176 = sphi 0, %s175
      %s190 = sphi 0, %s176
      %s194 = sphi 0, %s194
      %s196 = sphi 0, %s194
      %s197 = sphi 0, %s196
      %s211 = sphi 0, %s197
      %s215 = sphi 0, %s215
      %s217 = sphi 0, %s215
      %s218 = sphi 0, %s217
      %s232 = sphi 0, %s218
      %s236 = sphi 0, %s236
      %s238 = sphi 0, %s236
      %s239 = sphi 0, %s238
      %s253 = sphi 0, %s239
      %s257 = sphi 0, %s257
      %s259 = sphi 0, %s257
      %s260 = sphi 0, %s259
      %s274 = sphi 0, %s260
      %s278 = sphi 0, %s278
      %s280 = sphi 0, %s278
      %s281 = sphi 0, %s280
      %s295 = sphi 0, %s281
      %s299 = sphi 0, %s299
      %s301 = sphi 0, %s299
      %s302 = sphi 0, %s301
      %s316 = sphi 0, %s302
      %s320 = sphi 0, %s320
      %s322 = sphi 0, %s320
      %s323 = sphi 0, %s322
      %s337 = sphi 0, %s323
      %s341 = sphi 0, %s341
      %s343 = sphi 0, %s341
      %s344 = sphi 0, %s343
      %s358 = sphi 0, %s344
      %s362 = sphi 0, %s362
      %s364 = sphi 0, %s362
      %s365 = sphi 0, %s364
      %s379 = sphi 0, %s365
      %s383 = sphi 0, %s383
      %s385 = sphi 0, %s383
      %s386 = sphi 0, %s385
      %s400 = sphi 0, %s386
      %s404 = sphi 0, %s404
      %s406 = sphi 0, %s404
      %s407 = sphi 0, %s406
      %s421 = sphi 0, %s407
      %s425 = sphi 0, %s425
      %s427 = sphi 0, %s425
      %s428 = sphi 0, %s427
      %s442 = sphi 0, %s428
    $region4: #{tpu_custom_call.1} parent=1 // loop_header_branch
      %37 = sbr.rel (%p35) target = $region8
    $region5: #{tpu_custom_call.1} parent=1 // loop_body
      %s39 = ssub.s32 %s34, 1
      %s40 = ssub.s32 %s34, 2
      %s41 = sadd.s32 %s34, 1
      %s42 = ssub.s32 %s34, %s41
      %p43 = scmp.eq.s32.totalorder %s42, 0
      %s45 = sadd.s32 %s44, 1
      %s46 = scalar_select %p43, %s44, %s45
      %p49 = pneg %p43
      %p50 = scmp.eq.s32.totalorder %s34, 2
      %p51 = por %p49, %p50
      %p52 = scmp.ne.s32.totalorder %s44, %s47
      %p53 = scmp.eq.s32.totalorder %s34, 0
      %p54 = por %p52, %p53
      %p55 = scmp.ne.s32.totalorder %s44, %s47
      %p56 = scmp.eq.s32.totalorder %s39, 2
      %p57 = por %p55, %p56
      %p58 = scmp.ne.s32.totalorder %s47, %s48
      %p59 = scmp.eq.s32.totalorder %s39, 0
      %p60 = por %p58, %p59
      %p61 = scmp.ne.s32.totalorder %s47, %s48
      %p62 = scmp.eq.s32.totalorder %s40, 2
      %p63 = por %p61, %p62
      %p65 = scmp.ne.s32.totalorder %s48, %s64
      %p66 = scmp.eq.s32.totalorder %s40, 0
      %p67 = por %p65, %p66
      %s69 = sadd.s32 %s68, 1
      %p72 = scmp.eq.s32.totalorder %s34, 2
      %p73 = scmp.ne.s32.totalorder %s68, %s70
      %p74 = scmp.eq.s32.totalorder %s34, 0
      %p75 = por %p73, %p74
      %p76 = scmp.ne.s32.totalorder %s68, %s70
      %p77 = scmp.eq.s32.totalorder %s39, 2
      %p78 = por %p76, %p77
      %p79 = scmp.ne.s32.totalorder %s70, %s71
      %p80 = scmp.eq.s32.totalorder %s39, 0
      %p81 = por %p79, %p80
      %p82 = scmp.ne.s32.totalorder %s70, %s71
      %p83 = scmp.eq.s32.totalorder %s40, 2
      %p84 = por %p82, %p83
      %p86 = scmp.ne.s32.totalorder %s71, %s85
      %p87 = scmp.eq.s32.totalorder %s40, 0
      %p88 = por %p86, %p87
      %s90 = sadd.s32 %s89, 1
      %p93 = scmp.eq.s32.totalorder %s34, 2
      %p94 = scmp.ne.s32.totalorder %s89, %s91
      %p95 = scmp.eq.s32.totalorder %s34, 0
      %p96 = por %p94, %p95
      %p97 = scmp.ne.s32.totalorder %s89, %s91
      %p98 = scmp.eq.s32.totalorder %s39, 2
      %p99 = por %p97, %p98
      %p100 = scmp.ne.s32.totalorder %s91, %s92
      %p101 = scmp.eq.s32.totalorder %s39, 0
      %p102 = por %p100, %p101
      %p103 = scmp.ne.s32.totalorder %s91, %s92
      %p104 = scmp.eq.s32.totalorder %s40, 2
      %p105 = por %p103, %p104
      %p107 = scmp.ne.s32.totalorder %s92, %s106
      %p108 = scmp.eq.s32.totalorder %s40, 0
      %p109 = por %p107, %p108
      %s111 = sadd.s32 %s110, 1
      %p114 = scmp.eq.s32.totalorder %s34, 2
      %p115 = scmp.ne.s32.totalorder %s110, %s112
      %p116 = scmp.eq.s32.totalorder %s34, 0
      %p117 = por %p115, %p116
      %p118 = scmp.ne.s32.totalorder %s110, %s112
      %p119 = scmp.eq.s32.totalorder %s39, 2
      %p120 = por %p118, %p119
      %p121 = scmp.ne.s32.totalorder %s112, %s113
      %p122 = scmp.eq.s32.totalorder %s39, 0
      %p123 = por %p121, %p122
      %p124 = scmp.ne.s32.totalorder %s112, %s113
      %p125 = scmp.eq.s32.totalorder %s40, 2
      %p126 = por %p124, %p125
      %p128 = scmp.ne.s32.totalorder %s113, %s127
      %p129 = scmp.eq.s32.totalorder %s40, 0
      %p130 = por %p128, %p129
      %s132 = sadd.s32 %s131, 1
      %p135 = scmp.eq.s32.totalorder %s34, 2
      %p136 = scmp.ne.s32.totalorder %s131, %s133
      %p137 = scmp.eq.s32.totalorder %s34, 0
      %p138 = por %p136, %p137
      %p139 = scmp.ne.s32.totalorder %s131, %s133
      %p140 = scmp.eq.s32.totalorder %s39, 2
      %p141 = por %p139, %p140
      %p142 = scmp.ne.s32.totalorder %s133, %s134
      %p143 = scmp.eq.s32.totalorder %s39, 0
      %p144 = por %p142, %p143
      %p145 = scmp.ne.s32.totalorder %s133, %s134
      %p146 = scmp.eq.s32.totalorder %s40, 2
      %p147 = por %p145, %p146
      %p149 = scmp.ne.s32.totalorder %s134, %s148
      %p150 = scmp.eq.s32.totalorder %s40, 0
      %p151 = por %p149, %p150
      %s153 = sadd.s32 %s152, 1
      %p156 = scmp.eq.s32.totalorder %s34, 2
      %p157 = scmp.ne.s32.totalorder %s152, %s154
      %p158 = scmp.eq.s32.totalorder %s34, 0
      %p159 = por %p157, %p158
      %p160 = scmp.ne.s32.totalorder %s152, %s154
      %p161 = scmp.eq.s32.totalorder %s39, 2
      %p162 = por %p160, %p161
      %p163 = scmp.ne.s32.totalorder %s154, %s155
      %p164 = scmp.eq.s32.totalorder %s39, 0
      %p165 = por %p163, %p164
      %p166 = scmp.ne.s32.totalorder %s154, %s155
      %p167 = scmp.eq.s32.totalorder %s40, 2
      %p168 = por %p166, %p167
      %p170 = scmp.ne.s32.totalorder %s155, %s169
      %p171 = scmp.eq.s32.totalorder %s40, 0
      %p172 = por %p170, %p171
      %s174 = sadd.s32 %s173, 1
      %p177 = scmp.eq.s32.totalorder %s34, 2
      %p178 = scmp.ne.s32.totalorder %s173, %s175
      %p179 = scmp.eq.s32.totalorder %s34, 0
      %p180 = por %p178, %p179
      %p181 = scmp.ne.s32.totalorder %s173, %s175
      %p182 = scmp.eq.s32.totalorder %s39, 2
      %p183 = por %p181, %p182
      %p184 = scmp.ne.s32.totalorder %s175, %s176
      %p185 = scmp.eq.s32.totalorder %s39, 0
      %p186 = por %p184, %p185
      %p187 = scmp.ne.s32.totalorder %s175, %s176
      %p188 = scmp.eq.s32.totalorder %s40, 2
      %p189 = por %p187, %p188
      %p191 = scmp.ne.s32.totalorder %s176, %s190
      %p192 = scmp.eq.s32.totalorder %s40, 0
      %p193 = por %p191, %p192
      %s195 = sadd.s32 %s194, 1
      %p198 = scmp.eq.s32.totalorder %s34, 2
      %p199 = scmp.ne.s32.totalorder %s194, %s196
      %p200 = scmp.eq.s32.totalorder %s34, 0
      %p201 = por %p199, %p200
      %p202 = scmp.ne.s32.totalorder %s194, %s196
      %p203 = scmp.eq.s32.totalorder %s39, 2
      %p204 = por %p202, %p203
      %p205 = scmp.ne.s32.totalorder %s196, %s197
      %p206 = scmp.eq.s32.totalorder %s39, 0
      %p207 = por %p205, %p206
      %p208 = scmp.ne.s32.totalorder %s196, %s197
      %p209 = scmp.eq.s32.totalorder %s40, 2
      %p210 = por %p208, %p209
      %p212 = scmp.ne.s32.totalorder %s197, %s211
      %p213 = scmp.eq.s32.totalorder %s40, 0
      %p214 = por %p212, %p213
      %s216 = sadd.s32 %s215, 1
      %p219 = scmp.eq.s32.totalorder %s34, 2
      %p220 = scmp.ne.s32.totalorder %s215, %s217
      %p221 = scmp.eq.s32.totalorder %s34, 0
      %p222 = por %p220, %p221
      %p223 = scmp.ne.s32.totalorder %s215, %s217
      %p224 = scmp.eq.s32.totalorder %s39, 2
      %p225 = por %p223, %p224
      %p226 = scmp.ne.s32.totalorder %s217, %s218
      %p227 = scmp.eq.s32.totalorder %s39, 0
      %p228 = por %p226, %p227
      %p229 = scmp.ne.s32.totalorder %s217, %s218
      %p230 = scmp.eq.s32.totalorder %s40, 2
      %p231 = por %p229, %p230
      %p233 = scmp.ne.s32.totalorder %s218, %s232
      %p234 = scmp.eq.s32.totalorder %s40, 0
      %p235 = por %p233, %p234
      %s237 = sadd.s32 %s236, 1
      %p240 = scmp.eq.s32.totalorder %s34, 2
      %p241 = scmp.ne.s32.totalorder %s236, %s238
      %p242 = scmp.eq.s32.totalorder %s34, 0
      %p243 = por %p241, %p242
      %p244 = scmp.ne.s32.totalorder %s236, %s238
      %p245 = scmp.eq.s32.totalorder %s39, 2
      %p246 = por %p244, %p245
      %p247 = scmp.ne.s32.totalorder %s238, %s239
      %p248 = scmp.eq.s32.totalorder %s39, 0
      %p249 = por %p247, %p248
      %p250 = scmp.ne.s32.totalorder %s238, %s239
      %p251 = scmp.eq.s32.totalorder %s40, 2
      %p252 = por %p250, %p251
      %p254 = scmp.ne.s32.totalorder %s239, %s253
      %p255 = scmp.eq.s32.totalorder %s40, 0
      %p256 = por %p254, %p255
      %s258 = sadd.s32 %s257, 1
      %p261 = scmp.eq.s32.totalorder %s34, 2
      %p262 = scmp.ne.s32.totalorder %s257, %s259
      %p263 = scmp.eq.s32.totalorder %s34, 0
      %p264 = por %p262, %p263
      %p265 = scmp.ne.s32.totalorder %s257, %s259
      %p266 = scmp.eq.s32.totalorder %s39, 2
      %p267 = por %p265, %p266
      %p268 = scmp.ne.s32.totalorder %s259, %s260
      %p269 = scmp.eq.s32.totalorder %s39, 0
      %p270 = por %p268, %p269
      %p271 = scmp.ne.s32.totalorder %s259, %s260
      %p272 = scmp.eq.s32.totalorder %s40, 2
      %p273 = por %p271, %p272
      %p275 = scmp.ne.s32.totalorder %s260, %s274
      %p276 = scmp.eq.s32.totalorder %s40, 0
      %p277 = por %p275, %p276
      %s279 = sadd.s32 %s278, 1
      %p282 = scmp.eq.s32.totalorder %s34, 2
      %p283 = scmp.ne.s32.totalorder %s278, %s280
      %p284 = scmp.eq.s32.totalorder %s34, 0
      %p285 = por %p283, %p284
      %p286 = scmp.ne.s32.totalorder %s278, %s280
      %p287 = scmp.eq.s32.totalorder %s39, 2
      %p288 = por %p286, %p287
      %p289 = scmp.ne.s32.totalorder %s280, %s281
      %p290 = scmp.eq.s32.totalorder %s39, 0
      %p291 = por %p289, %p290
      %p292 = scmp.ne.s32.totalorder %s280, %s281
      %p293 = scmp.eq.s32.totalorder %s40, 2
      %p294 = por %p292, %p293
      %p296 = scmp.ne.s32.totalorder %s281, %s295
      %p297 = scmp.eq.s32.totalorder %s40, 0
      %p298 = por %p296, %p297
      %s300 = sadd.s32 %s299, 1
      %p303 = scmp.eq.s32.totalorder %s34, 2
      %p304 = scmp.ne.s32.totalorder %s299, %s301
      %p305 = scmp.eq.s32.totalorder %s34, 0
      %p306 = por %p304, %p305
      %p307 = scmp.ne.s32.totalorder %s299, %s301
      %p308 = scmp.eq.s32.totalorder %s39, 2
      %p309 = por %p307, %p308
      %p310 = scmp.ne.s32.totalorder %s301, %s302
      %p311 = scmp.eq.s32.totalorder %s39, 0
      %p312 = por %p310, %p311
      %p313 = scmp.ne.s32.totalorder %s301, %s302
      %p314 = scmp.eq.s32.totalorder %s40, 2
      %p315 = por %p313, %p314
      %p317 = scmp.ne.s32.totalorder %s302, %s316
      %p318 = scmp.eq.s32.totalorder %s40, 0
      %p319 = por %p317, %p318
      %s321 = sadd.s32 %s320, 1
      %p324 = scmp.eq.s32.totalorder %s34, 2
      %p325 = scmp.ne.s32.totalorder %s320, %s322
      %p326 = scmp.eq.s32.totalorder %s34, 0
      %p327 = por %p325, %p326
      %p328 = scmp.ne.s32.totalorder %s320, %s322
      %p329 = scmp.eq.s32.totalorder %s39, 2
      %p330 = por %p328, %p329
      %p331 = scmp.ne.s32.totalorder %s322, %s323
      %p332 = scmp.eq.s32.totalorder %s39, 0
      %p333 = por %p331, %p332
      %p334 = scmp.ne.s32.totalorder %s322, %s323
      %p335 = scmp.eq.s32.totalorder %s40, 2
      %p336 = por %p334, %p335
      %p338 = scmp.ne.s32.totalorder %s323, %s337
      %p339 = scmp.eq.s32.totalorder %s40, 0
      %p340 = por %p338, %p339
      %s342 = sadd.s32 %s341, 1
      %p345 = scmp.eq.s32.totalorder %s34, 2
      %p346 = scmp.ne.s32.totalorder %s341, %s343
      %p347 = scmp.eq.s32.totalorder %s34, 0
      %p348 = por %p346, %p347
      %p349 = scmp.ne.s32.totalorder %s341, %s343
      %p350 = scmp.eq.s32.totalorder %s39, 2
      %p351 = por %p349, %p350
      %p352 = scmp.ne.s32.totalorder %s343, %s344
      %p353 = scmp.eq.s32.totalorder %s39, 0
      %p354 = por %p352, %p353
      %p355 = scmp.ne.s32.totalorder %s343, %s344
      %p356 = scmp.eq.s32.totalorder %s40, 2
      %p357 = por %p355, %p356
      %p359 = scmp.ne.s32.totalorder %s344, %s358
      %p360 = scmp.eq.s32.totalorder %s40, 0
      %p361 = por %p359, %p360
      %s363 = sadd.s32 %s362, 1
      %p366 = scmp.eq.s32.totalorder %s34, 2
      %p367 = scmp.ne.s32.totalorder %s362, %s364
      %p368 = scmp.eq.s32.totalorder %s34, 0
      %p369 = por %p367, %p368
      %p370 = scmp.ne.s32.totalorder %s362, %s364
      %p371 = scmp.eq.s32.totalorder %s39, 2
      %p372 = por %p370, %p371
      %p373 = scmp.ne.s32.totalorder %s364, %s365
      %p374 = scmp.eq.s32.totalorder %s39, 0
      %p375 = por %p373, %p374
      %p376 = scmp.ne.s32.totalorder %s364, %s365
      %p377 = scmp.eq.s32.totalorder %s40, 2
      %p378 = por %p376, %p377
      %p380 = scmp.ne.s32.totalorder %s365, %s379
      %p381 = scmp.eq.s32.totalorder %s40, 0
      %p382 = por %p380, %p381
      %s384 = sadd.s32 %s383, 1
      %p387 = scmp.eq.s32.totalorder %s34, 2
      %p388 = scmp.ne.s32.totalorder %s383, %s385
      %p389 = scmp.eq.s32.totalorder %s34, 0
      %p390 = por %p388, %p389
      %p391 = scmp.ne.s32.totalorder %s383, %s385
      %p392 = scmp.eq.s32.totalorder %s39, 2
      %p393 = por %p391, %p392
      %p394 = scmp.ne.s32.totalorder %s385, %s386
      %p395 = scmp.eq.s32.totalorder %s39, 0
      %p396 = por %p394, %p395
      %p397 = scmp.ne.s32.totalorder %s385, %s386
      %p398 = scmp.eq.s32.totalorder %s40, 2
      %p399 = por %p397, %p398
      %p401 = scmp.ne.s32.totalorder %s386, %s400
      %p402 = scmp.eq.s32.totalorder %s40, 0
      %p403 = por %p401, %p402
      %s405 = sadd.s32 %s404, 1
      %p408 = scmp.eq.s32.totalorder %s34, 2
      %p409 = scmp.ne.s32.totalorder %s404, %s406
      %p410 = scmp.eq.s32.totalorder %s34, 0
      %p411 = por %p409, %p410
      %p412 = scmp.ne.s32.totalorder %s404, %s406
      %p413 = scmp.eq.s32.totalorder %s39, 2
      %p414 = por %p412, %p413
      %p415 = scmp.ne.s32.totalorder %s406, %s407
      %p416 = scmp.eq.s32.totalorder %s39, 0
      %p417 = por %p415, %p416
      %p418 = scmp.ne.s32.totalorder %s406, %s407
      %p419 = scmp.eq.s32.totalorder %s40, 2
      %p420 = por %p418, %p419
      %p422 = scmp.ne.s32.totalorder %s407, %s421
      %p423 = scmp.eq.s32.totalorder %s40, 0
      %p424 = por %p422, %p423
      %s426 = sadd.s32 %s425, 1
      %p429 = scmp.eq.s32.totalorder %s34, 2
      %p430 = scmp.ne.s32.totalorder %s425, %s427
      %p431 = scmp.eq.s32.totalorder %s34, 0
      %p432 = por %p430, %p431
      %p433 = scmp.ne.s32.totalorder %s425, %s427
      %p434 = scmp.eq.s32.totalorder %s39, 2
      %p435 = por %p433, %p434
      %p436 = scmp.ne.s32.totalorder %s427, %s428
      %p437 = scmp.eq.s32.totalorder %s39, 0
      %p438 = por %p436, %p437
      %p439 = scmp.ne.s32.totalorder %s427, %s428
      %p440 = scmp.eq.s32.totalorder %s40, 2
      %p441 = por %p439, %p440
      %p443 = scmp.ne.s32.totalorder %s428, %s442
      %p444 = scmp.eq.s32.totalorder %s40, 0
      %p445 = por %p443, %p444
      %p446 = scmp.le.s32.totalorder 1, %s34
      %p447 = scmp.lt.s32.totalorder %s34, 4
      %p448 = pnand %p446, %p447
      %p449 = pneg %p448
      // Predicated region
      $region9: #{tpu_custom_call.1} parent=5 // pred_check
        _
      $region10: #{tpu_custom_call.1} parent=5 // pred_check_branch
        %451 = sbr.rel (%p448) target = $region12
      $region11: #{tpu_custom_call.1} parent=5 // pred_region
        %s452 = ssub.s32 %s34, 1
        // Predicated region
        $region13: #{tpu_custom_call.1} parent=11 // pred_check
          %p453 = pneg %p81
        $region14: #{tpu_custom_call.1} parent=11 // pred_check_branch
          %455 = sbr.rel (%p453) target = $region16
        $region15: #{tpu_custom_call.1} parent=11 // pred_region
          _
        $region16: #{tpu_custom_call.1} parent=11 // pred_fallthru
          _
        // Predicated region
        $region17: #{tpu_custom_call.1} parent=11 // pred_check
          %p456 = pneg %p102
        $region18: #{tpu_custom_call.1} parent=11 // pred_check_branch
          %458 = sbr.rel (%p456) target = $region20
        $region19: #{tpu_custom_call.1} parent=11 // pred_region
          _
        $region20: #{tpu_custom_call.1} parent=11 // pred_fallthru
          _
        // Predicated region
        $region21: #{tpu_custom_call.1} parent=11 // pred_check
          %p459 = pneg %p123
        $region22: #{tpu_custom_call.1} parent=11 // pred_check_branch
          %461 = sbr.rel (%p459) target = $region24
        $region23: #{tpu_custom_call.1} parent=11 // pred_region
          _
        $region24: #{tpu_custom_call.1} parent=11 // pred_fallthru
          _
        // Predicated region
        $region25: #{tpu_custom_call.1} parent=11 // pred_check
          %p462 = pneg %p144
        $region26: #{tpu_custom_call.1} parent=11 // pred_check_branch
          %464 = sbr.rel (%p462) target = $region28
        $region27: #{tpu_custom_call.1} parent=11 // pred_region
          _
        $region28: #{tpu_custom_call.1} parent=11 // pred_fallthru
          _
        // Predicated region
        $region29: #{tpu_custom_call.1} parent=11 // pred_check
          %p465 = pneg %p165
        $region30: #{tpu_custom_call.1} parent=11 // pred_check_branch
          %467 = sbr.rel (%p465) target = $region32
        $region31: #{tpu_custom_call.1} parent=11 // pred_region
          _
        $region32: #{tpu_custom_call.1} parent=11 // pred_fallthru
          _
        // Predicated region
        $region33: #{tpu_custom_call.1} parent=11 // pred_check
          %p468 = pneg %p186
        $region34: #{tpu_custom_call.1} parent=11 // pred_check_branch
          %470 = sbr.rel (%p468) target = $region36
        $region35: #{tpu_custom_call.1} parent=11 // pred_region
          %472 = vsyncadd [#allocation6], 0
          %s473 = sshll.u32 %s6, 4
          %s474 = int_to_ptr.hbm [resolvable:$true] %s473
          %s475 = sshll.u32 [#allocation5], 4
          %s476 = int_to_ptr.vmem [resolvable:$true] %s475
          %481 = dma.hbm_to_vmem [thread:$0]  %s474, 4096, %s476, [#allocation6], 256, 256, 16
        $region36: #{tpu_custom_call.1} parent=11 // pred_fallthru
          _
        // Predicated region
        $region37: #{tpu_custom_call.1} parent=11 // pred_check
          %p482 = pneg %p207
        $region38: #{tpu_custom_call.1} parent=11 // pred_check_branch
          %484 = sbr.rel (%p482) target = $region40
        $region39: #{tpu_custom_call.1} parent=11 // pred_region
          %486 = vsyncadd [#allocation9], 0
          %s487 = sshll.u32 %s7, 4
          %s488 = int_to_ptr.hbm [resolvable:$true] %s487
          %s489 = sshll.u32 [#allocation8], 4
          %s490 = int_to_ptr.vmem [resolvable:$true] %s489
          %495 = dma.hbm_to_vmem [thread:$0]  %s488, 4096, %s490, [#allocation9], 64, 64, 4
        $region40: #{tpu_custom_call.1} parent=11 // pred_fallthru
          _
        // Predicated region
        $region41: #{tpu_custom_call.1} parent=11 // pred_check
          %p496 = pneg %p228
        $region42: #{tpu_custom_call.1} parent=11 // pred_check_branch
          %498 = sbr.rel (%p496) target = $region44
        $region43: #{tpu_custom_call.1} parent=11 // pred_region
          %500 = vsyncadd [#allocation9], 0
          %s501 = sshll.u32 %s8, 4
          %s502 = int_to_ptr.hbm [resolvable:$true] %s501
          %s503 = sshll.u32 [#allocation10], 4
          %s504 = int_to_ptr.vmem [resolvable:$true] %s503
          %509 = dma.hbm_to_vmem [thread:$0]  %s502, 1024, %s504, [#allocation9], 64, 64, 4
        $region44: #{tpu_custom_call.1} parent=11 // pred_fallthru
          _
        // Predicated region
        $region45: #{tpu_custom_call.1} parent=11 // pred_check
          %p510 = pneg %p249
        $region46: #{tpu_custom_call.1} parent=11 // pred_check_branch
          %512 = sbr.rel (%p510) target = $region48
        $region47: #{tpu_custom_call.1} parent=11 // pred_region
          %514 = vsyncadd [#allocation12], 0
          %s515 = sshll.u32 %s9, 4
          %s516 = int_to_ptr.hbm [resolvable:$true] %s515
          %s517 = sshll.u32 [#allocation11], 4
          %s518 = int_to_ptr.vmem [resolvable:$true] %s517
          %523 = dma.hbm_to_vmem [thread:$0]  %s516, 1024, %s518, [#allocation12], 64, 64, 4
        $region48: #{tpu_custom_call.1} parent=11 // pred_fallthru
          _
        // Predicated region
        $region49: #{tpu_custom_call.1} parent=11 // pred_check
          %p524 = pneg %p270
        $region50: #{tpu_custom_call.1} parent=11 // pred_check_branch
          %526 = sbr.rel (%p524) target = $region52
        $region51: #{tpu_custom_call.1} parent=11 // pred_region
          _
        $region52: #{tpu_custom_call.1} parent=11 // pred_fallthru
          _
        // Predicated region
        $region53: #{tpu_custom_call.1} parent=11 // pred_check
          %p527 = pneg %p291
        $region54: #{tpu_custom_call.1} parent=11 // pred_check_branch
          %529 = sbr.rel (%p527) target = $region56
        $region55: #{tpu_custom_call.1} parent=11 // pred_region
          %531 = vsyncadd [#allocation12], 0
          %s532 = sshll.u32 %s11, 4
          %s533 = int_to_ptr.hbm [resolvable:$true] %s532
          %s534 = sshll.u32 [#allocation13], 4
          %s535 = int_to_ptr.vmem [resolvable:$true] %s534
          %540 = dma.hbm_to_vmem [thread:$0]  %s533, 1024, %s535, [#allocation12], 64, 64, 4
        $region56: #{tpu_custom_call.1} parent=11 // pred_fallthru
          _
        // Predicated region
        $region57: #{tpu_custom_call.1} parent=11 // pred_check
          %p541 = pneg %p312
        $region58: #{tpu_custom_call.1} parent=11 // pred_check_branch
          %543 = sbr.rel (%p541) target = $region60
        $region59: #{tpu_custom_call.1} parent=11 // pred_region
          _
        $region60: #{tpu_custom_call.1} parent=11 // pred_fallthru
          _
      $region12: #{tpu_custom_call.1} parent=5 // pred_fallthru
        _
      %p544 = scmp.lt.s32.totalorder %s34, 3
      // Predicated region
      $region61: #{tpu_custom_call.1} parent=5 // pred_check
        %p545 = pneg %p544
      $region62: #{tpu_custom_call.1} parent=5 // pred_check_branch
        %547 = sbr.rel (%p545) target = $region64
      $region63: #{tpu_custom_call.1} parent=5 // pred_region
        // Predicated region
        $region65: #{tpu_custom_call.1} parent=63 // pred_check
          %p548 = pneg %p54
        $region66: #{tpu_custom_call.1} parent=63 // pred_check_branch
          %550 = sbr.rel (%p548) target = $region68
        $region67: #{tpu_custom_call.1} parent=63 // pred_region
          %p551 = scmp.lt.s32.totalorder %s34, 2
          %s552 = scalar_select %p551, %s34, 2
          %s553 = smul.addr %s552, 2
          %s554 = smul.addr %s553, 4
          %s555 = scalar_lea.vmem %s0, %s554
        $region68: #{tpu_custom_call.1} parent=63 // pred_fallthru
          _
      $region64: #{tpu_custom_call.1} parent=5 // pred_fallthru
        _
      %p556 = scmp.le.s32.totalorder 1, %s34
      %p557 = scmp.lt.s32.totalorder %s34, 4
      %p558 = pnand %p556, %p557
      %p559 = pneg %p558
      // Predicated region
      $region69: #{tpu_custom_call.1} parent=5 // pred_check
        _
      $region70: #{tpu_custom_call.1} parent=5 // pred_check_branch
        %561 = sbr.rel (%p558) target = $region72
      $region71: #{tpu_custom_call.1} parent=5 // pred_region
        %s562 = ssub.s32 %s34, 1
        // Predicated region
        $region73: #{tpu_custom_call.1} parent=71 // pred_check
          %p563 = pneg %p186
        $region74: #{tpu_custom_call.1} parent=71 // pred_check_branch
          %565 = sbr.rel (%p563) target = $region76
        $region75: #{tpu_custom_call.1} parent=71 // pred_region
          %567 = dma.done [#allocation6], 4096
        $region76: #{tpu_custom_call.1} parent=71 // pred_fallthru
          _
        // Predicated region
        $region77: #{tpu_custom_call.1} parent=71 // pred_check
          %p568 = pneg %p207
        $region78: #{tpu_custom_call.1} parent=71 // pred_check_branch
          %570 = sbr.rel (%p568) target = $region80
        $region79: #{tpu_custom_call.1} parent=71 // pred_region
          %572 = dma.done [#allocation9], 4096
        $region80: #{tpu_custom_call.1} parent=71 // pred_fallthru
          _
        // Predicated region
        $region81: #{tpu_custom_call.1} parent=71 // pred_check
          %p573 = pneg %p228
        $region82: #{tpu_custom_call.1} parent=71 // pred_check_branch
          %575 = sbr.rel (%p573) target = $region84
        $region83: #{tpu_custom_call.1} parent=71 // pred_region
          %577 = dma.done [#allocation9], 1024
        $region84: #{tpu_custom_call.1} parent=71 // pred_fallthru
          _
        // Predicated region
        $region85: #{tpu_custom_call.1} parent=71 // pred_check
          %p578 = pneg %p249
        $region86: #{tpu_custom_call.1} parent=71 // pred_check_branch
          %580 = sbr.rel (%p578) target = $region88
        $region87: #{tpu_custom_call.1} parent=71 // pred_region
          %582 = dma.done [#allocation12], 1024
        $region88: #{tpu_custom_call.1} parent=71 // pred_fallthru
          _
        // Predicated region
        $region89: #{tpu_custom_call.1} parent=71 // pred_check
          %p583 = pneg %p291
        $region90: #{tpu_custom_call.1} parent=71 // pred_check_branch
          %585 = sbr.rel (%p583) target = $region92
        $region91: #{tpu_custom_call.1} parent=71 // pred_region
          %587 = dma.done [#allocation12], 1024
        $region92: #{tpu_custom_call.1} parent=71 // pred_fallthru
          _
        %p588 = scmp.lt.s32.totalorder %s39, 2
        %s589 = scalar_select %p588, %s39, 2
        %s590 = smul.addr %s589, 2
        %s591 = smul.addr %s590, 4
        %s592 = scalar_lea.vmem %s0, %s591
        %p593 = pneg %p60
        %p594 = pneg %p57
        %p595 = pneg %p81
        %p596 = pneg %p78
        %p597 = pneg %p102
        %p598 = pneg %p99
        %p599 = pneg %p123
        %p600 = pneg %p120
        %p601 = pneg %p144
        %p602 = pneg %p141
        %p603 = pneg %p165
        %p604 = pneg %p162
        %p605 = pneg %p186
        %p606 = pneg %p183
        %p607 = pneg %p207
        %p608 = pneg %p204
        %p609 = pneg %p228
        %p610 = pneg %p225
        %p611 = pneg %p249
        %p612 = pneg %p246
        %p613 = pneg %p270
        %p614 = pneg %p267
        %p615 = pneg %p291
        %p616 = pneg %p288
        %p617 = pneg %p312
        %p618 = pneg %p309
        %p619 = pneg %p333
        %p620 = pneg %p330
        %p621 = pneg %p354
        %p622 = pneg %p351
        %p623 = pneg %p375
        %p624 = pneg %p372
        %p625 = pneg %p396
        %p626 = pneg %p393
        %p627 = pneg %p417
        %p628 = pneg %p414
        %p629 = pneg %p438
        %p630 = pneg %p435
        %p631 = scmp.lt.s32.totalorder %s39, 2
        %s632 = scalar_select %p631, %s39, 2
        %s633 = smul.addr %s632, 2
        %s634 = smul.addr %s633, 4
        %s635 = scalar_lea.vmem %s0, %s634
        %v637 = vld [vmem:[%s1] sm:$0xf]
        %v638 = vld [vmem:[%s1 + $0x4] sm:$0xf]
        %v639 = vld [vmem:[%s4] sm:$0xff]
        %v640 = vld [vmem:[%s4 + $0x8] sm:$0xff]
        %v641 = vld [vmem:[%s5] sm:$0xff]
        %v642 = vld [vmem:[%s5 + $0x8] sm:$0xff]
        %v643 = vld [vmem:[%s635] sm:$0xf]
        %v644 = vld [vmem:[%s635 + $0x4] sm:$0xf]
        %v645 = vld [vmem:[#allocation5] sm:$0xff]
        %v646 = vld [vmem:[#allocation5 + $0x8] sm:$0xff]
        %v647 = vld [vmem:[#allocation5 + $0x10] sm:$0xff]
        %v648 = vld [vmem:[#allocation5 + $0x18] sm:$0xff]
        %v649 = vld [vmem:[#allocation5 + $0x20] sm:$0xff]
        %v650 = vld [vmem:[#allocation5 + $0x28] sm:$0xff]
        %v651 = vld [vmem:[#allocation5 + $0x30] sm:$0xff]
        %v652 = vld [vmem:[#allocation5 + $0x38] sm:$0xff]
        %v653 = vld [vmem:[#allocation5 + $0x40] sm:$0xff]
        %v654 = vld [vmem:[#allocation5 + $0x48] sm:$0xff]
        %v655 = vld [vmem:[#allocation5 + $0x50] sm:$0xff]
        %v656 = vld [vmem:[#allocation5 + $0x58] sm:$0xff]
        %v657 = vld [vmem:[#allocation5 + $0x60] sm:$0xff]
        %v658 = vld [vmem:[#allocation5 + $0x68] sm:$0xff]
        %v659 = vld [vmem:[#allocation5 + $0x70] sm:$0xff]
        %v660 = vld [vmem:[#allocation5 + $0x78] sm:$0xff]
        %v661 = vld [vmem:[#allocation5 + $0x80] sm:$0xff]
        %v662 = vld [vmem:[#allocation5 + $0x88] sm:$0xff]
        %v663 = vld [vmem:[#allocation5 + $0x90] sm:$0xff]
        %v664 = vld [vmem:[#allocation5 + $0x98] sm:$0xff]
        %v665 = vld [vmem:[#allocation5 + $0xa0] sm:$0xff]
        %v666 = vld [vmem:[#allocation5 + $0xa8] sm:$0xff]
        %v667 = vld [vmem:[#allocation5 + $0xb0] sm:$0xff]
        %v668 = vld [vmem:[#allocation5 + $0xb8] sm:$0xff]
        %v669 = vld [vmem:[#allocation5 + $0xc0] sm:$0xff]
        %v670 = vld [vmem:[#allocation5 + $0xc8] sm:$0xff]
        %v671 = vld [vmem:[#allocation5 + $0xd0] sm:$0xff]
        %v672 = vld [vmem:[#allocation5 + $0xd8] sm:$0xff]
        %v673 = vld [vmem:[#allocation5 + $0xe0] sm:$0xff]
        %v674 = vld [vmem:[#allocation5 + $0xe8] sm:$0xff]
        %v675 = vld [vmem:[#allocation5 + $0xf0] sm:$0xff]
        %v676 = vld [vmem:[#allocation5 + $0xf8] sm:$0xff]
        %v679 = vunpack.c.l.b16 %v643
        %v680 = vunpack.c.l.b16 %v644
        %v681 = vpack.c.b16 %v680, %v679
        %v715 = vunpack.c.l.b16 %v645
        %v716 = vunpack.c.h.b16 %v645
        %v717 = vunpack.c.l.b16 %v646
        %v718 = vunpack.c.h.b16 %v646
        %v719 = vunpack.c.l.b16 %v647
        %v720 = vunpack.c.h.b16 %v647
        %v721 = vunpack.c.l.b16 %v648
        %v722 = vunpack.c.h.b16 %v648
        %v723 = vunpack.c.l.b16 %v649
        %v724 = vunpack.c.h.b16 %v649
        %v725 = vunpack.c.l.b16 %v650
        %v726 = vunpack.c.h.b16 %v650
        %v727 = vunpack.c.l.b16 %v651
        %v728 = vunpack.c.h.b16 %v651
        %v729 = vunpack.c.l.b16 %v652
        %v730 = vunpack.c.h.b16 %v652
        %v731 = vunpack.c.l.b16 %v653
        %v732 = vunpack.c.h.b16 %v653
        %v733 = vunpack.c.l.b16 %v654
        %v734 = vunpack.c.h.b16 %v654
        %v735 = vunpack.c.l.b16 %v655
        %v736 = vunpack.c.h.b16 %v655
        %v737 = vunpack.c.l.b16 %v656
        %v738 = vunpack.c.h.b16 %v656
        %v739 = vunpack.c.l.b16 %v657
        %v740 = vunpack.c.h.b16 %v657
        %v741 = vunpack.c.l.b16 %v658
        %v742 = vunpack.c.h.b16 %v658
        %v743 = vunpack.c.l.b16 %v659
        %v744 = vunpack.c.h.b16 %v659
        %v745 = vunpack.c.l.b16 %v660
        %v746 = vunpack.c.h.b16 %v660
        %v747 = vunpack.c.l.b16 %v661
        %v748 = vunpack.c.h.b16 %v661
        %v749 = vunpack.c.l.b16 %v662
        %v750 = vunpack.c.h.b16 %v662
        %v751 = vunpack.c.l.b16 %v663
        %v752 = vunpack.c.h.b16 %v663
        %v753 = vunpack.c.l.b16 %v664
        %v754 = vunpack.c.h.b16 %v664
        %v755 = vunpack.c.l.b16 %v665
        %v756 = vunpack.c.h.b16 %v665
        %v757 = vunpack.c.l.b16 %v666
        %v758 = vunpack.c.h.b16 %v666
        %v759 = vunpack.c.l.b16 %v667
        %v760 = vunpack.c.h.b16 %v667
        %v761 = vunpack.c.l.b16 %v668
        %v762 = vunpack.c.h.b16 %v668
        %v763 = vunpack.c.l.b16 %v669
        %v764 = vunpack.c.h.b16 %v669
        %v765 = vunpack.c.l.b16 %v670
        %v766 = vunpack.c.h.b16 %v670
        %v767 = vunpack.c.l.b16 %v671
        %v768 = vunpack.c.h.b16 %v671
        %v769 = vunpack.c.l.b16 %v672
        %v770 = vunpack.c.h.b16 %v672
        %v771 = vunpack.c.l.b16 %v673
        %v772 = vunpack.c.h.b16 %v673
        %v773 = vunpack.c.l.b16 %v674
        %v774 = vunpack.c.h.b16 %v674
        %v775 = vunpack.c.l.b16 %v675
        %v776 = vunpack.c.h.b16 %v675
        %v777 = vunpack.c.l.b16 %v676
        %v778 = vunpack.c.h.b16 %v676
        %v779 = vpack.c.b16 %v719, %v715
        %v780 = vpack.c.b16 %v720, %v716
        %v781 = vpack.c.b16 %v721, %v717
        %v782 = vpack.c.b16 %v722, %v718
        %v783 = vpack.c.b16 %v727, %v723
        %v784 = vpack.c.b16 %v728, %v724
        %v785 = vpack.c.b16 %v729, %v725
        %v786 = vpack.c.b16 %v730, %v726
        %v787 = vpack.c.b16 %v735, %v731
        %v788 = vpack.c.b16 %v736, %v732
        %v789 = vpack.c.b16 %v737, %v733
        %v790 = vpack.c.b16 %v738, %v734
        %v791 = vpack.c.b16 %v743, %v739
        %v792 = vpack.c.b16 %v744, %v740
        %v793 = vpack.c.b16 %v745, %v741
        %v794 = vpack.c.b16 %v746, %v742
        %v795 = vpack.c.b16 %v751, %v747
        %v796 = vpack.c.b16 %v752, %v748
        %v797 = vpack.c.b16 %v753, %v749
        %v798 = vpack.c.b16 %v754, %v750
        %v799 = vpack.c.b16 %v759, %v755
        %v800 = vpack.c.b16 %v760, %v756
        %v801 = vpack.c.b16 %v761, %v757
        %v802 = vpack.c.b16 %v762, %v758
        %v803 = vpack.c.b16 %v767, %v763
        %v804 = vpack.c.b16 %v768, %v764
        %v805 = vpack.c.b16 %v769, %v765
        %v806 = vpack.c.b16 %v770, %v766
        %v807 = vpack.c.b16 %v775, %v771
        %v808 = vpack.c.b16 %v776, %v772
        %v809 = vpack.c.b16 %v777, %v773
        %v810 = vpack.c.b16 %v778, %v774
        %843 = vmatpush.bf16.msra.mxu0 %v807
        %844 = vmatpush.bf16.msra.mxu0 %v803
        %845 = vmatpush.bf16.msra.mxu0 %v799
        %846 = vmatpush.bf16.msra.mxu0 %v795
        %847 = vmatpush.bf16.msra.mxu0 %v791
        %848 = vmatpush.bf16.msra.mxu0 %v787
        %849 = vmatpush.bf16.msra.mxu0 %v783
        %850 = vmatpush.bf16.msra.mxu0 %v779
        %851 = vmatmul.bf16.gmra.mxu0 %v681
        %v852 = vpop.f32.mrf.mxu0
        %v853 = vadd.f32 0.0, %v852
        %v854 = vpop.f32.mrf.mxu0
        %v855 = vadd.f32 0.0, %v854
        %856 = vdwg.mxu0
        %857 = vmatpush.bf16.msra.mxu0 %v808
        %858 = vmatpush.bf16.msra.mxu0 %v804
        %859 = vmatpush.bf16.msra.mxu0 %v800
        %860 = vmatpush.bf16.msra.mxu0 %v796
        %861 = vmatpush.bf16.msra.mxu0 %v792
        %862 = vmatpush.bf16.msra.mxu0 %v788
        %863 = vmatpush.bf16.msra.mxu0 %v784
        %864 = vmatpush.bf16.msra.mxu0 %v780
        %865 = vmatmul.bf16.gmra.mxu0 %v681
        %v866 = vpop.f32.mrf.mxu0
        %v867 = vadd.f32 0.0, %v866
        %v868 = vpop.f32.mrf.mxu0
        %v869 = vadd.f32 0.0, %v868
        %870 = vdwg.mxu0
        %871 = vmatpush.bf16.msra.mxu0 %v809
        %872 = vmatpush.bf16.msra.mxu0 %v805
        %873 = vmatpush.bf16.msra.mxu0 %v801
        %874 = vmatpush.bf16.msra.mxu0 %v797
        %875 = vmatpush.bf16.msra.mxu0 %v793
        %876 = vmatpush.bf16.msra.mxu0 %v789
        %877 = vmatpush.bf16.msra.mxu0 %v785
        %878 = vmatpush.bf16.msra.mxu0 %v781
        %879 = vmatmul.bf16.gmra.mxu0 %v681
        %v880 = vpop.f32.mrf.mxu0
        %v881 = vadd.f32 0.0, %v880
        %v882 = vpop.f32.mrf.mxu0
        %v883 = vadd.f32 0.0, %v882
        %884 = vdwg.mxu0
        %885 = vmatpush.bf16.msra.mxu0 %v810
        %886 = vmatpush.bf16.msra.mxu0 %v806
        %887 = vmatpush.bf16.msra.mxu0 %v802
        %888 = vmatpush.bf16.msra.mxu0 %v798
        %889 = vmatpush.bf16.msra.mxu0 %v794
        %890 = vmatpush.bf16.msra.mxu0 %v790
        %891 = vmatpush.bf16.msra.mxu0 %v786
        %892 = vmatpush.bf16.msra.mxu0 %v782
        %893 = vmatmul.bf16.gmra.mxu0 %v681
        %v894 = vpop.f32.mrf.mxu0
        %v895 = vadd.f32 0.0, %v894
        %v896 = vpop.f32.mrf.mxu0
        %v897 = vadd.f32 0.0, %v896
        %898 = vdwg.mxu0
        %v899 = vpack.c.bf16 %v855, %v853
        %v900 = vpack.c.bf16 %v869, %v867
        %v901 = vpack.c.bf16 %v883, %v881
        %v902 = vpack.c.bf16 %v897, %v895
        %v905 = vunpack.c.l.b16 %v637
        %v906 = vunpack.c.l.b16 %v638
        %v907 = vpack.c.b16 %v906, %v905
        %vm908 = vcmask 130048
        %v910 = vsel %vm908, %v907, 0
        %912 = vmatpush.bf16.msra.mxu0 0
        %913 = vmatpush.bf16.msra.mxu0 0
        %914 = vmatpush.bf16.msra.mxu0 0
        %915 = vmatpush.bf16.msra.mxu0 0
        %916 = vmatpush.bf16.msra.mxu0 0
        %917 = vmatpush.bf16.msra.mxu0 0
        %918 = vmatpush.bf16.msra.mxu0 0
        %919 = vmatpush.bf16.msra.mxu0 %v899
        %920 = vmatmul.bf16.gmra.mxu0 %v910
        %v921 = vpop.f32.mrf.mxu0
        %v922 = vadd.f32 0.0, %v921
        %v923 = vpop.f32.mrf.mxu0
        %v924 = vadd.f32 0.0, %v923
        %925 = vdwg.mxu0
        %926 = vmatpush.bf16.msra.mxu0 0
        %927 = vmatpush.bf16.msra.mxu0 0
        %928 = vmatpush.bf16.msra.mxu0 0
        %929 = vmatpush.bf16.msra.mxu0 0
        %930 = vmatpush.bf16.msra.mxu0 0
        %931 = vmatpush.bf16.msra.mxu0 0
        %932 = vmatpush.bf16.msra.mxu0 0
        %933 = vmatpush.bf16.msra.mxu0 %v900
        %934 = vmatmul.bf16.gmra.mxu0 %v910
        %v935 = vpop.f32.mrf.mxu0
        %v936 = vadd.f32 0.0, %v935
        %v937 = vpop.f32.mrf.mxu0
        %v938 = vadd.f32 0.0, %v937
        %939 = vdwg.mxu0
        %940 = vmatpush.bf16.msra.mxu0 0
        %941 = vmatpush.bf16.msra.mxu0 0
        %942 = vmatpush.bf16.msra.mxu0 0
        %943 = vmatpush.bf16.msra.mxu0 0
        %944 = vmatpush.bf16.msra.mxu0 0
        %945 = vmatpush.bf16.msra.mxu0 0
        %946 = vmatpush.bf16.msra.mxu0 0
        %947 = vmatpush.bf16.msra.mxu0 %v901
        %948 = vmatmul.bf16.gmra.mxu0 %v910
        %v949 = vpop.f32.mrf.mxu0
        %v950 = vadd.f32 0.0, %v949
        %v951 = vpop.f32.mrf.mxu0
        %v952 = vadd.f32 0.0, %v951
        %953 = vdwg.mxu0
        %954 = vmatpush.bf16.msra.mxu0 0
        %955 = vmatpush.bf16.msra.mxu0 0
        %956 = vmatpush.bf16.msra.mxu0 0
        %957 = vmatpush.bf16.msra.mxu0 0
        %958 = vmatpush.bf16.msra.mxu0 0
        %959 = vmatpush.bf16.msra.mxu0 0
        %960 = vmatpush.bf16.msra.mxu0 0
        %961 = vmatpush.bf16.msra.mxu0 %v902
        %962 = vmatmul.bf16.gmra.mxu0 %v910
        %v963 = vpop.f32.mrf.mxu0
        %v964 = vadd.f32 0.0, %v963
        %v965 = vpop.f32.mrf.mxu0
        %v966 = vadd.f32 0.0, %v965
        %967 = vdwg.mxu0
        %969 = vset.pattern.permute.xlu0 0
        %970 = vperm.xlu0 %969, %v639
        %v971 = vpop.permute.xlu0 %970
        %974 = vset.pattern.permute.xlu0 0
        %975 = vperm.xlu0 %974, %v640
        %v976 = vpop.permute.xlu0 %975
        %v978 = vmul.f32 %v971, %v853
        %v979 = vmul.f32 %v971, %v867
        %v980 = vmul.f32 %v971, %v881
        %v981 = vmul.f32 %v971, %v895
        %v982 = vmul.f32 %v976, %v855
        %v983 = vmul.f32 %v976, %v869
        %v984 = vmul.f32 %v976, %v883
        %v985 = vmul.f32 %v976, %v897
        %987 = vset.pattern.permute.xlu0 0
        %988 = vperm.xlu0 %987, %v641
        %v989 = vpop.permute.xlu0 %988
        %992 = vset.pattern.permute.xlu0 0
        %993 = vperm.xlu0 %992, %v642
        %v994 = vpop.permute.xlu0 %993
        %v996 = vmul.f32 %v989, %v922
        %v997 = vmul.f32 %v989, %v936
        %v998 = vmul.f32 %v989, %v950
        %v999 = vmul.f32 %v989, %v964
        %v1000 = vmul.f32 %v994, %v924
        %v1001 = vmul.f32 %v994, %v938
        %v1002 = vmul.f32 %v994, %v952
        %v1003 = vmul.f32 %v994, %v966
        %v1004 = vadd.f32 %v978, %v996
        %v1005 = vadd.f32 %v979, %v997
        %v1006 = vadd.f32 %v980, %v998
        %v1007 = vadd.f32 %v981, %v999
        %v1008 = vadd.f32 %v982, %v1000
        %v1009 = vadd.f32 %v983, %v1001
        %v1010 = vadd.f32 %v984, %v1002
        %v1011 = vadd.f32 %v985, %v1003
        %v1012 = vmax.f32 %v1004, 0.0
        %v1013 = vmax.f32 %v1005, 0.0
        %v1014 = vmax.f32 %v1006, 0.0
        %v1015 = vmax.f32 %v1007, 0.0
        %v1016 = vmax.f32 %v1008, 0.0
        %v1017 = vmax.f32 %v1009, 0.0
        %v1018 = vmax.f32 %v1010, 0.0
        %v1019 = vmax.f32 %v1011, 0.0
        %v1020 = vpack.c.bf16 %v1016, %v1012
        %v1021 = vpack.c.bf16 %v1017, %v1013
        %v1022 = vpack.c.bf16 %v1018, %v1014
        %v1023 = vpack.c.bf16 %v1019, %v1015
        %v1024 = vld [vmem:[#allocation8] sm:$0xf]
        %v1025 = vld [vmem:[#allocation8 + $0x4] sm:$0xf]
        %v1026 = vld [vmem:[#allocation8 + $0x8] sm:$0xf]
        %v1027 = vld [vmem:[#allocation8 + $0xc] sm:$0xf]
        %v1028 = vld [vmem:[#allocation8 + $0x10] sm:$0xf]
        %v1029 = vld [vmem:[#allocation8 + $0x14] sm:$0xf]
        %v1030 = vld [vmem:[#allocation8 + $0x18] sm:$0xf]
        %v1031 = vld [vmem:[#allocation8 + $0x1c] sm:$0xf]
        %v1032 = vld [vmem:[#allocation8 + $0x20] sm:$0xf]
        %v1033 = vld [vmem:[#allocation8 + $0x24] sm:$0xf]
        %v1034 = vld [vmem:[#allocation8 + $0x28] sm:$0xf]
        %v1035 = vld [vmem:[#allocation8 + $0x2c] sm:$0xf]
        %v1036 = vld [vmem:[#allocation8 + $0x30] sm:$0xf]
        %v1037 = vld [vmem:[#allocation8 + $0x34] sm:$0xf]
        %v1038 = vld [vmem:[#allocation8 + $0x38] sm:$0xf]
        %v1039 = vld [vmem:[#allocation8 + $0x3c] sm:$0xf]
        %v1040 = vld [vmem:[#allocation8 + $0x40] sm:$0xf]
        %v1041 = vld [vmem:[#allocation8 + $0x44] sm:$0xf]
        %v1042 = vld [vmem:[#allocation8 + $0x48] sm:$0xf]
        %v1043 = vld [vmem:[#allocation8 + $0x4c] sm:$0xf]
        %v1044 = vld [vmem:[#allocation8 + $0x50] sm:$0xf]
        %v1045 = vld [vmem:[#allocation8 + $0x54] sm:$0xf]
        %v1046 = vld [vmem:[#allocation8 + $0x58] sm:$0xf]
        %v1047 = vld [vmem:[#allocation8 + $0x5c] sm:$0xf]
        %v1048 = vld [vmem:[#allocation8 + $0x60] sm:$0xf]
        %v1049 = vld [vmem:[#allocation8 + $0x64] sm:$0xf]
        %v1050 = vld [vmem:[#allocation8 + $0x68] sm:$0xf]
        %v1051 = vld [vmem:[#allocation8 + $0x6c] sm:$0xf]
        %v1052 = vld [vmem:[#allocation8 + $0x70] sm:$0xf]
        %v1053 = vld [vmem:[#allocation8 + $0x74] sm:$0xf]
        %v1054 = vld [vmem:[#allocation8 + $0x78] sm:$0xf]
        %v1055 = vld [vmem:[#allocation8 + $0x7c] sm:$0xf]
        %v1056 = vld [vmem:[#allocation8 + $0x80] sm:$0xf]
        %v1057 = vld [vmem:[#allocation8 + $0x84] sm:$0xf]
        %v1058 = vld [vmem:[#allocation8 + $0x88] sm:$0xf]
        %v1059 = vld [vmem:[#allocation8 + $0x8c] sm:$0xf]
        %v1060 = vld [vmem:[#allocation8 + $0x90] sm:$0xf]
        %v1061 = vld [vmem:[#allocation8 + $0x94] sm:$0xf]
        %v1062 = vld [vmem:[#allocation8 + $0x98] sm:$0xf]
        %v1063 = vld [vmem:[#allocation8 + $0x9c] sm:$0xf]
        %v1064 = vld [vmem:[#allocation8 + $0xa0] sm:$0xf]
        %v1065 = vld [vmem:[#allocation8 + $0xa4] sm:$0xf]
        %v1066 = vld [vmem:[#allocation8 + $0xa8] sm:$0xf]
        %v1067 = vld [vmem:[#allocation8 + $0xac] sm:$0xf]
        %v1068 = vld [vmem:[#allocation8 + $0xb0] sm:$0xf]
        %v1069 = vld [vmem:[#allocation8 + $0xb4] sm:$0xf]
        %v1070 = vld [vmem:[#allocation8 + $0xb8] sm:$0xf]
        %v1071 = vld [vmem:[#allocation8 + $0xbc] sm:$0xf]
        %v1072 = vld [vmem:[#allocation8 + $0xc0] sm:$0xf]
        %v1073 = vld [vmem:[#allocation8 + $0xc4] sm:$0xf]
        %v1074 = vld [vmem:[#allocation8 + $0xc8] sm:$0xf]
        %v1075 = vld [vmem:[#allocation8 + $0xcc] sm:$0xf]
        %v1076 = vld [vmem:[#allocation8 + $0xd0] sm:$0xf]
        %v1077 = vld [vmem:[#allocation8 + $0xd4] sm:$0xf]
        %v1078 = vld [vmem:[#allocation8 + $0xd8] sm:$0xf]
        %v1079 = vld [vmem:[#allocation8 + $0xdc] sm:$0xf]
        %v1080 = vld [vmem:[#allocation8 + $0xe0] sm:$0xf]
        %v1081 = vld [vmem:[#allocation8 + $0xe4] sm:$0xf]
        %v1082 = vld [vmem:[#allocation8 + $0xe8] sm:$0xf]
        %v1083 = vld [vmem:[#allocation8 + $0xec] sm:$0xf]
        %v1084 = vld [vmem:[#allocation8 + $0xf0] sm:$0xf]
        %v1085 = vld [vmem:[#allocation8 + $0xf4] sm:$0xf]
        %v1086 = vld [vmem:[#allocation8 + $0xf8] sm:$0xf]
        %v1087 = vld [vmem:[#allocation8 + $0xfc] sm:$0xf]
        %v1152 = vunpack.c.l.b16 %v1024
        %v1153 = vunpack.c.l.b16 %v1025
        %v1154 = vunpack.c.l.b16 %v1026
        %v1155 = vunpack.c.l.b16 %v1027
        %v1156 = vunpack.c.l.b16 %v1028
        %v1157 = vunpack.c.l.b16 %v1029
        %v1158 = vunpack.c.l.b16 %v1030
        %v1159 = vunpack.c.l.b16 %v1031
        %v1160 = vunpack.c.l.b16 %v1032
        %v1161 = vunpack.c.l.b16 %v1033
        %v1162 = vunpack.c.l.b16 %v1034
        %v1163 = vunpack.c.l.b16 %v1035
        %v1164 = vunpack.c.l.b16 %v1036
        %v1165 = vunpack.c.l.b16 %v1037
        %v1166 = vunpack.c.l.b16 %v1038
        %v1167 = vunpack.c.l.b16 %v1039
        %v1168 = vunpack.c.l.b16 %v1040
        %v1169 = vunpack.c.l.b16 %v1041
        %v1170 = vunpack.c.l.b16 %v1042
        %v1171 = vunpack.c.l.b16 %v1043
        %v1172 = vunpack.c.l.b16 %v1044
        %v1173 = vunpack.c.l.b16 %v1045
        %v1174 = vunpack.c.l.b16 %v1046
        %v1175 = vunpack.c.l.b16 %v1047
        %v1176 = vunpack.c.l.b16 %v1048
        %v1177 = vunpack.c.l.b16 %v1049
        %v1178 = vunpack.c.l.b16 %v1050
        %v1179 = vunpack.c.l.b16 %v1051
        %v1180 = vunpack.c.l.b16 %v1052
        %v1181 = vunpack.c.l.b16 %v1053
        %v1182 = vunpack.c.l.b16 %v1054
        %v1183 = vunpack.c.l.b16 %v1055
        %v1184 = vunpack.c.l.b16 %v1056
        %v1185 = vunpack.c.l.b16 %v1057
        %v1186 = vunpack.c.l.b16 %v1058
        %v1187 = vunpack.c.l.b16 %v1059
        %v1188 = vunpack.c.l.b16 %v1060
        %v1189 = vunpack.c.l.b16 %v1061
        %v1190 = vunpack.c.l.b16 %v1062
        %v1191 = vunpack.c.l.b16 %v1063
        %v1192 = vunpack.c.l.b16 %v1064
        %v1193 = vunpack.c.l.b16 %v1065
        %v1194 = vunpack.c.l.b16 %v1066
        %v1195 = vunpack.c.l.b16 %v1067
        %v1196 = vunpack.c.l.b16 %v1068
        %v1197 = vunpack.c.l.b16 %v1069
        %v1198 = vunpack.c.l.b16 %v1070
        %v1199 = vunpack.c.l.b16 %v1071
        %v1200 = vunpack.c.l.b16 %v1072
        %v1201 = vunpack.c.l.b16 %v1073
        %v1202 = vunpack.c.l.b16 %v1074
        %v1203 = vunpack.c.l.b16 %v1075
        %v1204 = vunpack.c.l.b16 %v1076
        %v1205 = vunpack.c.l.b16 %v1077
        %v1206 = vunpack.c.l.b16 %v1078
        %v1207 = vunpack.c.l.b16 %v1079
        %v1208 = vunpack.c.l.b16 %v1080
        %v1209 = vunpack.c.l.b16 %v1081
        %v1210 = vunpack.c.l.b16 %v1082
        %v1211 = vunpack.c.l.b16 %v1083
        %v1212 = vunpack.c.l.b16 %v1084
        %v1213 = vunpack.c.l.b16 %v1085
        %v1214 = vunpack.c.l.b16 %v1086
        %v1215 = vunpack.c.l.b16 %v1087
        %v1216 = vpack.c.b16 %v1153, %v1152
        %v1217 = vpack.c.b16 %v1155, %v1154
        %v1218 = vpack.c.b16 %v1157, %v1156
        %v1219 = vpack.c.b16 %v1159, %v1158
        %v1220 = vpack.c.b16 %v1161, %v1160
        %v1221 = vpack.c.b16 %v1163, %v1162
        %v1222 = vpack.c.b16 %v1165, %v1164
        %v1223 = vpack.c.b16 %v1167, %v1166
        %v1224 = vpack.c.b16 %v1169, %v1168
        %v1225 = vpack.c.b16 %v1171, %v1170
        %v1226 = vpack.c.b16 %v1173, %v1172
        %v1227 = vpack.c.b16 %v1175, %v1174
        %v1228 = vpack.c.b16 %v1177, %v1176
        %v1229 = vpack.c.b16 %v1179, %v1178
        %v1230 = vpack.c.b16 %v1181, %v1180
        %v1231 = vpack.c.b16 %v1183, %v1182
        %v1232 = vpack.c.b16 %v1185, %v1184
        %v1233 = vpack.c.b16 %v1187, %v1186
        %v1234 = vpack.c.b16 %v1189, %v1188
        %v1235 = vpack.c.b16 %v1191, %v1190
        %v1236 = vpack.c.b16 %v1193, %v1192
        %v1237 = vpack.c.b16 %v1195, %v1194
        %v1238 = vpack.c.b16 %v1197, %v1196
        %v1239 = vpack.c.b16 %v1199, %v1198
        %v1240 = vpack.c.b16 %v1201, %v1200
        %v1241 = vpack.c.b16 %v1203, %v1202
        %v1242 = vpack.c.b16 %v1205, %v1204
        %v1243 = vpack.c.b16 %v1207, %v1206
        %v1244 = vpack.c.b16 %v1209, %v1208
        %v1245 = vpack.c.b16 %v1211, %v1210
        %v1246 = vpack.c.b16 %v1213, %v1212
        %v1247 = vpack.c.b16 %v1215, %v1214
        %1280 = vmatpush.bf16.msra.mxu0 %v1223
        %1281 = vmatpush.bf16.msra.mxu0 %v1222
        %1282 = vmatpush.bf16.msra.mxu0 %v1221
        %1283 = vmatpush.bf16.msra.mxu0 %v1220
        %1284 = vmatpush.bf16.msra.mxu0 %v1219
        %1285 = vmatpush.bf16.msra.mxu0 %v1218
        %1286 = vmatpush.bf16.msra.mxu0 %v1217
        %1287 = vmatpush.bf16.msra.mxu0 %v1216
        %1288 = vmatmul.bf16.gmra.mxu0 %v1020
        %v1289 = vpop.f32.mrf.mxu0
        %v1290 = vadd.f32 0.0, %v1289
        %v1291 = vpop.f32.mrf.mxu0
        %v1292 = vadd.f32 0.0, %v1291
        %1293 = vdwg.mxu0
        %1294 = vmatpush.bf16.msra.mxu0 %v1231
        %1295 = vmatpush.bf16.msra.mxu0 %v1230
        %1296 = vmatpush.bf16.msra.mxu0 %v1229
        %1297 = vmatpush.bf16.msra.mxu0 %v1228
        %1298 = vmatpush.bf16.msra.mxu0 %v1227
        %1299 = vmatpush.bf16.msra.mxu0 %v1226
        %1300 = vmatpush.bf16.msra.mxu0 %v1225
        %1301 = vmatpush.bf16.msra.mxu0 %v1224
        %1302 = vmatmul.bf16.gmra.mxu0 %v1021
        %v1303 = vpop.f32.mrf.mxu0
        %v1304 = vadd.f32 %v1290, %v1303
        %v1305 = vpop.f32.mrf.mxu0
        %v1306 = vadd.f32 %v1292, %v1305
        %1307 = vdwg.mxu0
        %1308 = vmatpush.bf16.msra.mxu0 %v1239
        %1309 = vmatpush.bf16.msra.mxu0 %v1238
        %1310 = vmatpush.bf16.msra.mxu0 %v1237
        %1311 = vmatpush.bf16.msra.mxu0 %v1236
        %1312 = vmatpush.bf16.msra.mxu0 %v1235
        %1313 = vmatpush.bf16.msra.mxu0 %v1234
        %1314 = vmatpush.bf16.msra.mxu0 %v1233
        %1315 = vmatpush.bf16.msra.mxu0 %v1232
        %1316 = vmatmul.bf16.gmra.mxu0 %v1022
        %v1317 = vpop.f32.mrf.mxu0
        %v1318 = vadd.f32 %v1304, %v1317
        %v1319 = vpop.f32.mrf.mxu0
        %v1320 = vadd.f32 %v1306, %v1319
        %1321 = vdwg.mxu0
        %1322 = vmatpush.bf16.msra.mxu0 %v1247
        %1323 = vmatpush.bf16.msra.mxu0 %v1246
        %1324 = vmatpush.bf16.msra.mxu0 %v1245
        %1325 = vmatpush.bf16.msra.mxu0 %v1244
        %1326 = vmatpush.bf16.msra.mxu0 %v1243
        %1327 = vmatpush.bf16.msra.mxu0 %v1242
        %1328 = vmatpush.bf16.msra.mxu0 %v1241
        %1329 = vmatpush.bf16.msra.mxu0 %v1240
        %1330 = vmatmul.bf16.gmra.mxu0 %v1023
        %v1331 = vpop.f32.mrf.mxu0
        %v1332 = vadd.f32 %v1318, %v1331
        %v1333 = vpop.f32.mrf.mxu0
        %v1334 = vadd.f32 %v1320, %v1333
        %1335 = vdwg.mxu0
        %v1336 = vpack.c.bf16 %v1334, %v1332
        %1337 = vmatpush.bf16.msra.mxu0 0
        %1338 = vmatpush.bf16.msra.mxu0 0
        %1339 = vmatpush.bf16.msra.mxu0 0
        %1340 = vmatpush.bf16.msra.mxu0 0
        %1341 = vmatpush.bf16.msra.mxu0 0
        %1342 = vmatpush.bf16.msra.mxu0 0
        %1343 = vmatpush.bf16.msra.mxu0 0
        %1344 = vmatpush.bf16.msra.mxu0 %v1336
        %1345 = vmatmul.bf16.gmra.mxu0 %v910
        %v1346 = vpop.f32.mrf.mxu0
        %v1347 = vadd.f32 0.0, %v1346
        %v1348 = vpop.f32.mrf.mxu0
        %v1349 = vadd.f32 0.0, %v1348
        %1350 = vdwg.mxu0
        %v1351 = vmul.f32 %v971, %v1332
        %v1352 = vmul.f32 %v976, %v1334
        %v1353 = vmul.f32 %v989, %v1347
        %v1354 = vmul.f32 %v994, %v1349
        %v1355 = vadd.f32 %v1351, %v1353
        %v1356 = vadd.f32 %v1352, %v1354
        %v1357 = vmax.f32 %v1355, 0.0
        %v1358 = vmax.f32 %v1356, 0.0
        %v1359 = vld [vmem:[%s2] sm:$0xf]
        %v1360 = vld [vmem:[%s2 + $0x4] sm:$0xf]
        %v1361 = vpack.c.bf16 %v1358, %v1357
        %v1364 = vunpack.c.l.b16 %v1359
        %v1365 = vunpack.c.l.b16 %v1360
        %v1366 = vpack.c.b16 %v1365, %v1364
        %v1368 = vsel %vm908, %v1366, 0
        %1370 = vmatpush.bf16.msra.mxu0 0
        %1371 = vmatpush.bf16.msra.mxu0 0
        %1372 = vmatpush.bf16.msra.mxu0 0
        %1373 = vmatpush.bf16.msra.mxu0 0
        %1374 = vmatpush.bf16.msra.mxu0 0
        %1375 = vmatpush.bf16.msra.mxu0 0
        %1376 = vmatpush.bf16.msra.mxu0 0
        %1377 = vmatpush.bf16.msra.mxu0 %v1361
        %1378 = vmatmul.bf16.gmra.mxu0 %v1368
        %v1379 = vpop.f32.mrf.mxu0
        %v1380 = vadd.f32 0.0, %v1379
        %v1381 = vpop.f32.mrf.mxu0
        %v1382 = vadd.f32 0.0, %v1381
        %1383 = vdwg.mxu0
        %v1384 = vld [vmem:[%s3] sm:$0xff]
        %v1385 = vld [vmem:[%s3 + $0x8] sm:$0xff]
        %1387 = vset.pattern.permute.xlu0 0
        %1388 = vperm.xlu0 %1387, %v1384
        %v1389 = vpop.permute.xlu0 %1388
        %1392 = vset.pattern.permute.xlu0 0
        %1393 = vperm.xlu0 %1392, %v1385
        %v1394 = vpop.permute.xlu0 %1393
        %v1396 = vmul.f32 %v1380, %v1389
        %v1397 = vmul.f32 %v1382, %v1394
        %v1398 = vmul.f32 %v1396, %v1396
        %v1399 = vmul.f32 %v1397, %v1397
        %1400 = vadd.xlane.f32.xlu0 %v1398
        %v1401 = vpop.xlane.xlu0 %1400
        %1402 = vadd.xlane.f32.xlu0 %v1399
        %v1403 = vpop.xlane.xlu0 %1402
        %v1404 = vmax.f32 %v1401, 1e-24
        %v1405 = vmax.f32 %v1403, 1e-24
        %v1406 = vrsqrt.pop %v1404
        %v1407 = vmul.f32 %v1406, %v1404
        %v1408 = vmul.f32 %v1407, %v1406
        %v1409 = vmul.f32 0.5, %v1408
        %v1410 = vsub.f32 1.5, %v1409
        %v1411 = vmul.f32 %v1406, %v1410
        %vm1412 = vweird.f32 %v1404
        %vm1413 = vweird.f32 %v1406
        %vm1414 = vmor %vm1412, %vm1413
        %v1415 = vsel %vm1414, %v1406, %v1411
        %v1416 = vrsqrt.pop %v1405
        %v1417 = vmul.f32 %v1416, %v1405
        %v1418 = vmul.f32 %v1417, %v1416
        %v1419 = vmul.f32 0.5, %v1418
        %v1420 = vsub.f32 1.5, %v1419
        %v1421 = vmul.f32 %v1416, %v1420
        %vm1422 = vweird.f32 %v1405
        %vm1423 = vweird.f32 %v1416
        %vm1424 = vmor %vm1422, %vm1423
        %v1425 = vsel %vm1424, %v1416, %v1421
        %v1426 = vmul.f32 %v1396, %v1415
        %v1427 = vmul.f32 %v1397, %v1425
        %v1428 = vsub.f32 0.0, %v1426
        %v1429 = vsub.f32 0.0, %v1427
        %v1430 = vmul.f32 %v1428, 1.442695
        %v1431 = vpow.pop %v1430
        %v1432 = vmul.f32 %v1429, 1.442695
        %v1433 = vpow.pop %v1432
        %v1434 = vadd.f32 %v1431, 1.0
        %v1435 = vadd.f32 %v1433, 1.0
        %v1436 = vrcp.pop %v1434
        %v1437 = vmul.f32 %v1434, %v1436
        %v1438 = vsub.f32 1.0, %v1437
        %v1439 = vmul.f32 %v1436, %v1438
        %v1440 = vadd.f32 %v1436, %v1439
        %vm1441 = vweird.f32 %v1434
        %vm1442 = vweird.f32 %v1436
        %vm1443 = vmor %vm1441, %vm1442
        %v1444 = vsel %vm1443, %v1436, %v1440
        %v1445 = vand.u32 2147483647, %v1434
        %vm1446 = vcmp.eq.f32.partialorder %v1445, 8.507059e+37
        %v1447 = vand.u32 %v1434, 2147483648
        %v1448 = vor.u32 1.1754944e-38, %v1447
        %v1449 = vsel %vm1446, %v1448, %v1444
        %v1450 = vmul.f32 1.0, %v1449
        %v1451 = vrcp.pop %v1435
        %v1452 = vmul.f32 %v1435, %v1451
        %v1453 = vsub.f32 1.0, %v1452
        %v1454 = vmul.f32 %v1451, %v1453
        %v1455 = vadd.f32 %v1451, %v1454
        %vm1456 = vweird.f32 %v1435
        %vm1457 = vweird.f32 %v1451
        %vm1458 = vmor %vm1456, %vm1457
        %v1459 = vsel %vm1458, %v1451, %v1455
        %v1460 = vand.u32 2147483647, %v1435
        %vm1461 = vcmp.eq.f32.partialorder %v1460, 8.507059e+37
        %v1462 = vand.u32 %v1435, 2147483648
        %v1463 = vor.u32 1.1754944e-38, %v1462
        %v1464 = vsel %vm1461, %v1463, %v1459
        %v1465 = vmul.f32 1.0, %v1464
        %p1466 = scmp.eq.s32.totalorder %s39, 0
        // Predicated region
        $region93: #{tpu_custom_call.1} parent=71 // pred_check
          %p1467 = pneg %p1466
        $region94: #{tpu_custom_call.1} parent=71 // pred_check_branch
          %1469 = sbr.rel (%p1467) target = $region96
        $region95: #{tpu_custom_call.1} parent=71 // pred_region
          %1470 = vst [vmem:[#allocation2] sm:$0xff] %v1355
          %1471 = vst [vmem:[#allocation2 + $0x8] sm:$0xff] %v1356
          %1472 = vst [vmem:[#allocation3] sm:$0xff] %v1450
          %1473 = vst [vmem:[#allocation3 + $0x8] sm:$0xff] %v1465
        $region96: #{tpu_custom_call.1} parent=71 // pred_fallthru
          _
        %p1474 = scmp.eq.s32.totalorder %s39, 1
        // Predicated region
        $region97: #{tpu_custom_call.1} parent=71 // pred_check
          %p1475 = pneg %p1474
        $region98: #{tpu_custom_call.1} parent=71 // pred_check_branch
          %1477 = sbr.rel (%p1475) target = $region100
        $region99: #{tpu_custom_call.1} parent=71 // pred_region
          %s1478 = scalar_lea.vmem [#allocation2], 16
          %1479 = vst [vmem:[%s1478] sm:$0xff] %v1355
          %1480 = vst [vmem:[%s1478 + $0x8] sm:$0xff] %v1356
          %s1481 = scalar_lea.vmem [#allocation3], 16
          %1482 = vst [vmem:[%s1481] sm:$0xff] %v1450
          %1483 = vst [vmem:[%s1481 + $0x8] sm:$0xff] %v1465
        $region100: #{tpu_custom_call.1} parent=71 // pred_fallthru
          _
        %p1484 = scmp.eq.s32.totalorder %s39, 2
        // Predicated region
        $region101: #{tpu_custom_call.1} parent=71 // pred_check
          %p1485 = pneg %p1484
        $region102: #{tpu_custom_call.1} parent=71 // pred_check_branch
          %1487 = sbr.rel (%p1485) target = $region104
        $region103: #{tpu_custom_call.1} parent=71 // pred_region
          %s1488 = scalar_lea.vmem [#allocation2], 32
          %1489 = vst [vmem:[%s1488] sm:$0xff] %v1355
          %1490 = vst [vmem:[%s1488 + $0x8] sm:$0xff] %v1356
          %s1491 = scalar_lea.vmem [#allocation3], 32
          %1492 = vst [vmem:[%s1491] sm:$0xff] %v1450
          %1493 = vst [vmem:[%s1491 + $0x8] sm:$0xff] %v1465
        $region104: #{tpu_custom_call.1} parent=71 // pred_fallthru
          _
        // Predicated region
        $region105: #{tpu_custom_call.1} parent=71 // pred_check
          %p1494 = pneg %p1466
        $region106: #{tpu_custom_call.1} parent=71 // pred_check_branch
          %1496 = sbr.rel (%p1494) target = $region108
        $region107: #{tpu_custom_call.1} parent=71 // pred_region
          %1497 = vst [vmem:[#allocation14] sm:$0xff] %v1355
          %1498 = vst [vmem:[#allocation14 + $0x8] sm:$0xff] %v1356
          %v1499 = vpack.c.bf16 %v1356, %v1355
          %v1500 = vld [vmem:[#allocation10] sm:$0xf]
          %v1501 = vld [vmem:[#allocation10 + $0x4] sm:$0xf]
          %v1502 = vld [vmem:[#allocation10 + $0x8] sm:$0xf]
          %v1503 = vld [vmem:[#allocation10 + $0xc] sm:$0xf]
          %v1504 = vld [vmem:[#allocation10 + $0x10] sm:$0xf]
          %v1505 = vld [vmem:[#allocation10 + $0x14] sm:$0xf]
          %v1506 = vld [vmem:[#allocation10 + $0x18] sm:$0xf]
          %v1507 = vld [vmem:[#allocation10 + $0x1c] sm:$0xf]
          %v1508 = vld [vmem:[#allocation10 + $0x20] sm:$0xf]
          %v1509 = vld [vmem:[#allocation10 + $0x24] sm:$0xf]
          %v1510 = vld [vmem:[#allocation10 + $0x28] sm:$0xf]
          %v1511 = vld [vmem:[#allocation10 + $0x2c] sm:$0xf]
          %v1512 = vld [vmem:[#allocation10 + $0x30] sm:$0xf]
          %v1513 = vld [vmem:[#allocation10 + $0x34] sm:$0xf]
          %v1514 = vld [vmem:[#allocation10 + $0x38] sm:$0xf]
          %v1515 = vld [vmem:[#allocation10 + $0x3c] sm:$0xf]
          %v1532 = vunpack.c.l.b16 %v1500
          %v1533 = vunpack.c.l.b16 %v1501
          %v1534 = vunpack.c.l.b16 %v1502
          %v1535 = vunpack.c.l.b16 %v1503
          %v1536 = vunpack.c.l.b16 %v1504
          %v1537 = vunpack.c.l.b16 %v1505
          %v1538 = vunpack.c.l.b16 %v1506
          %v1539 = vunpack.c.l.b16 %v1507
          %v1540 = vunpack.c.l.b16 %v1508
          %v1541 = vunpack.c.l.b16 %v1509
          %v1542 = vunpack.c.l.b16 %v1510
          %v1543 = vunpack.c.l.b16 %v1511
          %v1544 = vunpack.c.l.b16 %v1512
          %v1545 = vunpack.c.l.b16 %v1513
          %v1546 = vunpack.c.l.b16 %v1514
          %v1547 = vunpack.c.l.b16 %v1515
          %v1548 = vpack.c.b16 %v1533, %v1532
          %v1549 = vpack.c.b16 %v1535, %v1534
          %v1550 = vpack.c.b16 %v1537, %v1536
          %v1551 = vpack.c.b16 %v1539, %v1538
          %v1552 = vpack.c.b16 %v1541, %v1540
          %v1553 = vpack.c.b16 %v1543, %v1542
          %v1554 = vpack.c.b16 %v1545, %v1544
          %v1555 = vpack.c.b16 %v1547, %v1546
          %1564 = vmatpush.bf16.msra.mxu0 %v1555
          %1565 = vmatpush.bf16.msra.mxu0 %v1554
          %1566 = vmatpush.bf16.msra.mxu0 %v1553
          %1567 = vmatpush.bf16.msra.mxu0 %v1552
          %1568 = vmatpush.bf16.msra.mxu0 %v1551
          %1569 = vmatpush.bf16.msra.mxu0 %v1550
          %1570 = vmatpush.bf16.msra.mxu0 %v1549
          %1571 = vmatpush.bf16.msra.mxu0 %v1548
          %1572 = vmatmul.bf16.gmra.mxu0 %v1499
          %v1573 = vpop.f32.mrf.mxu0
          %v1574 = vadd.f32 0.0, %v1573
          %v1575 = vpop.f32.mrf.mxu0
          %v1576 = vadd.f32 0.0, %v1575
          %1577 = vdwg.mxu0
          %v1578 = vpack.c.bf16 %v1576, %v1574
          %1579 = vmatpush.bf16.msra.mxu0 0
          %1580 = vmatpush.bf16.msra.mxu0 0
          %1581 = vmatpush.bf16.msra.mxu0 0
          %1582 = vmatpush.bf16.msra.mxu0 0
          %1583 = vmatpush.bf16.msra.mxu0 0
          %1584 = vmatpush.bf16.msra.mxu0 0
          %1585 = vmatpush.bf16.msra.mxu0 0
          %1586 = vmatpush.bf16.msra.mxu0 %v1578
          %1587 = vmatmul.bf16.gmra.mxu0 %v910
          %v1588 = vpop.f32.mrf.mxu0
          %v1589 = vadd.f32 0.0, %v1588
          %v1590 = vpop.f32.mrf.mxu0
          %v1591 = vadd.f32 0.0, %v1590
          %1592 = vdwg.mxu0
          %1593 = vst [vmem:[#allocation15] sm:$0xff] %v1589
          %1594 = vst [vmem:[#allocation15 + $0x8] sm:$0xff] %v1591
        $region108: #{tpu_custom_call.1} parent=71 // pred_fallthru
          _
        // Predicated region
        $region109: #{tpu_custom_call.1} parent=71 // pred_check
          %p1595 = pneg %p1484
        $region110: #{tpu_custom_call.1} parent=71 // pred_check_branch
          %1597 = sbr.rel (%p1595) target = $region112
        $region111: #{tpu_custom_call.1} parent=71 // pred_region
          %v1598 = vld [vmem:[#allocation2] sm:$0xff]
          %v1599 = vld [vmem:[#allocation2 + $0x8] sm:$0xff]
          %s1600 = scalar_lea.vmem [#allocation2], 32
          %v1601 = vld [vmem:[%s1600] sm:$0xff]
          %v1602 = vld [vmem:[%s1600 + $0x8] sm:$0xff]
          %v1603 = vmax.f32 %v1598, 0.0
          %v1604 = vmax.f32 %v1599, 0.0
          %s1605 = scalar_lea.vmem [#allocation2], 16
          %v1606 = vld [vmem:[%s1605] sm:$0xff]
          %v1607 = vld [vmem:[%s1605 + $0x8] sm:$0xff]
          %v1608 = vmax.f32 %v1606, 0.0
          %v1609 = vmax.f32 %v1607, 0.0
          %v1610 = vmax.f32 %v1601, 0.0
          %v1611 = vmax.f32 %v1602, 0.0
          %v1612 = vlaneseq
          %v1613 = vand.u32 %v1612, 127
          %v1614 = vld [vmem:[#allocation3] sm:$0xff]
          %v1615 = vld [vmem:[#allocation3 + $0x8] sm:$0xff]
          %v1616 = vpack.c.bf16 %v1615, %v1614
          %v1617 = vld [vmem:[#allocation11] sm:$0xf]
          %v1618 = vld [vmem:[#allocation11 + $0x4] sm:$0xf]
          %v1619 = vld [vmem:[#allocation11 + $0x8] sm:$0xf]
          %v1620 = vld [vmem:[#allocation11 + $0xc] sm:$0xf]
          %v1621 = vld [vmem:[#allocation11 + $0x10] sm:$0xf]
          %v1622 = vld [vmem:[#allocation11 + $0x14] sm:$0xf]
          %v1623 = vld [vmem:[#allocation11 + $0x18] sm:$0xf]
          %v1624 = vld [vmem:[#allocation11 + $0x1c] sm:$0xf]
          %v1625 = vld [vmem:[#allocation11 + $0x20] sm:$0xf]
          %v1626 = vld [vmem:[#allocation11 + $0x24] sm:$0xf]
          %v1627 = vld [vmem:[#allocation11 + $0x28] sm:$0xf]
          %v1628 = vld [vmem:[#allocation11 + $0x2c] sm:$0xf]
          %v1629 = vld [vmem:[#allocation11 + $0x30] sm:$0xf]
          %v1630 = vld [vmem:[#allocation11 + $0x34] sm:$0xf]
          %v1631 = vld [vmem:[#allocation11 + $0x38] sm:$0xf]
          %v1632 = vld [vmem:[#allocation11 + $0x3c] sm:$0xf]
          %v1649 = vunpack.c.l.b16 %v1617
          %v1650 = vunpack.c.l.b16 %v1618
          %v1651 = vunpack.c.l.b16 %v1619
          %v1652 = vunpack.c.l.b16 %v1620
          %v1653 = vunpack.c.l.b16 %v1621
          %v1654 = vunpack.c.l.b16 %v1622
          %v1655 = vunpack.c.l.b16 %v1623
          %v1656 = vunpack.c.l.b16 %v1624
          %v1657 = vunpack.c.l.b16 %v1625
          %v1658 = vunpack.c.l.b16 %v1626
          %v1659 = vunpack.c.l.b16 %v1627
          %v1660 = vunpack.c.l.b16 %v1628
          %v1661 = vunpack.c.l.b16 %v1629
          %v1662 = vunpack.c.l.b16 %v1630
          %v1663 = vunpack.c.l.b16 %v1631
          %v1664 = vunpack.c.l.b16 %v1632
          %v1665 = vpack.c.b16 %v1650, %v1649
          %v1666 = vpack.c.b16 %v1652, %v1651
          %v1667 = vpack.c.b16 %v1654, %v1653
          %v1668 = vpack.c.b16 %v1656, %v1655
          %v1669 = vpack.c.b16 %v1658, %v1657
          %v1670 = vpack.c.b16 %v1660, %v1659
          %v1671 = vpack.c.b16 %v1662, %v1661
          %v1672 = vpack.c.b16 %v1664, %v1663
          %1681 = vmatpush.bf16.msra.mxu0 %v1672
          %1682 = vmatpush.bf16.msra.mxu0 %v1671
          %1683 = vmatpush.bf16.msra.mxu0 %v1670
          %1684 = vmatpush.bf16.msra.mxu0 %v1669
          %1685 = vmatpush.bf16.msra.mxu0 %v1668
          %1686 = vmatpush.bf16.msra.mxu0 %v1667
          %1687 = vmatpush.bf16.msra.mxu0 %v1666
          %1688 = vmatpush.bf16.msra.mxu0 %v1665
          %1689 = vmatmul.bf16.gmra.mxu0 %v1616
          %v1690 = vpop.f32.mrf.mxu0
          %v1691 = vadd.f32 0.0, %v1690
          %v1692 = vpop.f32.mrf.mxu0
          %v1693 = vadd.f32 0.0, %v1692
          %1694 = vdwg.mxu0
          %v1695 = vmul.f32 %v1603, %v1691
          %v1696 = vmul.f32 %v1604, %v1693
          %1697 = vadd.xlane.f32.xlu0 %v1695
          %v1698 = vpop.xlane.xlu0 %1697
          %1699 = vadd.xlane.f32.xlu0 %v1696
          %v1700 = vpop.xlane.xlu0 %1699
          %v1701 = vld [vmem:[#allocation4] sm:$0x1]
          %v1703 = vperm.slane %v1701, 0
          %v1705 = vadd.f32 %v1698, %v1703
          %v1706 = vadd.f32 %v1700, %v1703
          %v1707 = vmul.f32 %v1608, %v1691
          %v1708 = vmul.f32 %v1609, %v1693
          %1709 = vadd.xlane.f32.xlu0 %v1707
          %v1710 = vpop.xlane.xlu0 %1709
          %1711 = vadd.xlane.f32.xlu0 %v1708
          %v1712 = vpop.xlane.xlu0 %1711
          %v1713 = vadd.f32 %v1710, %v1703
          %v1714 = vadd.f32 %v1712, %v1703
          %vm1715 = vcmp.eq.s32.totalorder %v1613, 0
          %vm1716 = vcmp.eq.s32.totalorder %v1613, 1
          %1718 = vset.pattern.permute.xlu0 0
          %1719 = vperm.xlu0 %1718, %v1713
          %v1720 = vpop.permute.xlu0 %1719
          %1723 = vset.pattern.permute.xlu0 0
          %1724 = vperm.xlu0 %1723, %v1714
          %v1725 = vpop.permute.xlu0 %1724
          %v1727 = vsel %vm1716, %v1720, 0.0
          %v1728 = vsel %vm1716, %v1725, 0.0
          %1730 = vset.pattern.permute.xlu0 0
          %1731 = vperm.xlu0 %1730, %v1705
          %v1732 = vpop.permute.xlu0 %1731
          %1735 = vset.pattern.permute.xlu0 0
          %1736 = vperm.xlu0 %1735, %v1706
          %v1737 = vpop.permute.xlu0 %1736
          %v1739 = vsel %vm1715, %v1732, %v1727
          %v1740 = vsel %vm1715, %v1737, %v1728
          %1741 = vst [vmem:[#allocation17] sm:$0xff] %v1739
          %1742 = vst [vmem:[#allocation17 + $0x8] sm:$0xff] %v1740
          %s1743 = scalar_lea.vmem [#allocation3], 16
          %v1744 = vld [vmem:[%s1743] sm:$0xff]
          %v1745 = vld [vmem:[%s1743 + $0x8] sm:$0xff]
          %v1746 = vpack.c.bf16 %v1745, %v1744
          %v1747 = vld [vmem:[#allocation11] sm:$0xf]
          %v1748 = vld [vmem:[#allocation11 + $0x4] sm:$0xf]
          %v1749 = vld [vmem:[#allocation11 + $0x8] sm:$0xf]
          %v1750 = vld [vmem:[#allocation11 + $0xc] sm:$0xf]
          %v1751 = vld [vmem:[#allocation11 + $0x10] sm:$0xf]
          %v1752 = vld [vmem:[#allocation11 + $0x14] sm:$0xf]
          %v1753 = vld [vmem:[#allocation11 + $0x18] sm:$0xf]
          %v1754 = vld [vmem:[#allocation11 + $0x1c] sm:$0xf]
          %v1755 = vld [vmem:[#allocation11 + $0x20] sm:$0xf]
          %v1756 = vld [vmem:[#allocation11 + $0x24] sm:$0xf]
          %v1757 = vld [vmem:[#allocation11 + $0x28] sm:$0xf]
          %v1758 = vld [vmem:[#allocation11 + $0x2c] sm:$0xf]
          %v1759 = vld [vmem:[#allocation11 + $0x30] sm:$0xf]
          %v1760 = vld [vmem:[#allocation11 + $0x34] sm:$0xf]
          %v1761 = vld [vmem:[#allocation11 + $0x38] sm:$0xf]
          %v1762 = vld [vmem:[#allocation11 + $0x3c] sm:$0xf]
          %v1779 = vunpack.c.l.b16 %v1747
          %v1780 = vunpack.c.l.b16 %v1748
          %v1781 = vunpack.c.l.b16 %v1749
          %v1782 = vunpack.c.l.b16 %v1750
          %v1783 = vunpack.c.l.b16 %v1751
          %v1784 = vunpack.c.l.b16 %v1752
          %v1785 = vunpack.c.l.b16 %v1753
          %v1786 = vunpack.c.l.b16 %v1754
          %v1787 = vunpack.c.l.b16 %v1755
          %v1788 = vunpack.c.l.b16 %v1756
          %v1789 = vunpack.c.l.b16 %v1757
          %v1790 = vunpack.c.l.b16 %v1758
          %v1791 = vunpack.c.l.b16 %v1759
          %v1792 = vunpack.c.l.b16 %v1760
          %v1793 = vunpack.c.l.b16 %v1761
          %v1794 = vunpack.c.l.b16 %v1762
          %v1795 = vpack.c.b16 %v1780, %v1779
          %v1796 = vpack.c.b16 %v1782, %v1781
          %v1797 = vpack.c.b16 %v1784, %v1783
          %v1798 = vpack.c.b16 %v1786, %v1785
          %v1799 = vpack.c.b16 %v1788, %v1787
          %v1800 = vpack.c.b16 %v1790, %v1789
          %v1801 = vpack.c.b16 %v1792, %v1791
          %v1802 = vpack.c.b16 %v1794, %v1793
          %1811 = vmatpush.bf16.msra.mxu0 %v1802
          %1812 = vmatpush.bf16.msra.mxu0 %v1801
          %1813 = vmatpush.bf16.msra.mxu0 %v1800
          %1814 = vmatpush.bf16.msra.mxu0 %v1799
          %1815 = vmatpush.bf16.msra.mxu0 %v1798
          %1816 = vmatpush.bf16.msra.mxu0 %v1797
          %1817 = vmatpush.bf16.msra.mxu0 %v1796
          %1818 = vmatpush.bf16.msra.mxu0 %v1795
          %1819 = vmatmul.bf16.gmra.mxu0 %v1746
          %v1820 = vpop.f32.mrf.mxu0
          %v1821 = vadd.f32 0.0, %v1820
          %v1822 = vpop.f32.mrf.mxu0
          %v1823 = vadd.f32 0.0, %v1822
          %1824 = vdwg.mxu0
          %v1825 = vmul.f32 %v1608, %v1821
          %v1826 = vmul.f32 %v1609, %v1823
          %1827 = vadd.xlane.f32.xlu0 %v1825
          %v1828 = vpop.xlane.xlu0 %1827
          %1829 = vadd.xlane.f32.xlu0 %v1826
          %v1830 = vpop.xlane.xlu0 %1829
          %v1831 = vld [vmem:[#allocation4] sm:$0x1]
          %v1833 = vperm.slane %v1831, 0
          %v1835 = vadd.f32 %v1828, %v1833
          %v1836 = vadd.f32 %v1830, %v1833
          %v1837 = vmul.f32 %v1603, %v1821
          %v1838 = vmul.f32 %v1604, %v1823
          %1839 = vadd.xlane.f32.xlu0 %v1837
          %v1840 = vpop.xlane.xlu0 %1839
          %1841 = vadd.xlane.f32.xlu0 %v1838
          %v1842 = vpop.xlane.xlu0 %1841
          %v1843 = vadd.f32 %v1840, %v1833
          %v1844 = vadd.f32 %v1842, %v1833
          %1846 = vset.pattern.permute.xlu0 0
          %1847 = vperm.xlu0 %1846, %v1843
          %v1848 = vpop.permute.xlu0 %1847
          %1851 = vset.pattern.permute.xlu0 0
          %1852 = vperm.xlu0 %1851, %v1844
          %v1853 = vpop.permute.xlu0 %1852
          %v1855 = vsel %vm1716, %v1848, 0.0
          %v1856 = vsel %vm1716, %v1853, 0.0
          %1858 = vset.pattern.permute.xlu0 0
          %1859 = vperm.xlu0 %1858, %v1835
          %v1860 = vpop.permute.xlu0 %1859
          %1863 = vset.pattern.permute.xlu0 0
          %1864 = vperm.xlu0 %1863, %v1836
          %v1865 = vpop.permute.xlu0 %1864
          %v1867 = vsel %vm1715, %v1860, %v1855
          %v1868 = vsel %vm1715, %v1865, %v1856
          %s1869 = scalar_lea.vmem [#allocation17], 16
          %1870 = vst [vmem:[%s1869] sm:$0xff] %v1867
          %1871 = vst [vmem:[%s1869 + $0x8] sm:$0xff] %v1868
          %s1872 = scalar_lea.vmem [#allocation3], 32
          %v1873 = vld [vmem:[%s1872] sm:$0xff]
          %v1874 = vld [vmem:[%s1872 + $0x8] sm:$0xff]
          %v1875 = vpack.c.bf16 %v1874, %v1873
          %v1876 = vld [vmem:[#allocation11] sm:$0xf]
          %v1877 = vld [vmem:[#allocation11 + $0x4] sm:$0xf]
          %v1878 = vld [vmem:[#allocation11 + $0x8] sm:$0xf]
          %v1879 = vld [vmem:[#allocation11 + $0xc] sm:$0xf]
          %v1880 = vld [vmem:[#allocation11 + $0x10] sm:$0xf]
          %v1881 = vld [vmem:[#allocation11 + $0x14] sm:$0xf]
          %v1882 = vld [vmem:[#allocation11 + $0x18] sm:$0xf]
          %v1883 = vld [vmem:[#allocation11 + $0x1c] sm:$0xf]
          %v1884 = vld [vmem:[#allocation11 + $0x20] sm:$0xf]
          %v1885 = vld [vmem:[#allocation11 + $0x24] sm:$0xf]
          %v1886 = vld [vmem:[#allocation11 + $0x28] sm:$0xf]
          %v1887 = vld [vmem:[#allocation11 + $0x2c] sm:$0xf]
          %v1888 = vld [vmem:[#allocation11 + $0x30] sm:$0xf]
          %v1889 = vld [vmem:[#allocation11 + $0x34] sm:$0xf]
          %v1890 = vld [vmem:[#allocation11 + $0x38] sm:$0xf]
          %v1891 = vld [vmem:[#allocation11 + $0x3c] sm:$0xf]
          %v1908 = vunpack.c.l.b16 %v1876
          %v1909 = vunpack.c.l.b16 %v1877
          %v1910 = vunpack.c.l.b16 %v1878
          %v1911 = vunpack.c.l.b16 %v1879
          %v1912 = vunpack.c.l.b16 %v1880
          %v1913 = vunpack.c.l.b16 %v1881
          %v1914 = vunpack.c.l.b16 %v1882
          %v1915 = vunpack.c.l.b16 %v1883
          %v1916 = vunpack.c.l.b16 %v1884
          %v1917 = vunpack.c.l.b16 %v1885
          %v1918 = vunpack.c.l.b16 %v1886
          %v1919 = vunpack.c.l.b16 %v1887
          %v1920 = vunpack.c.l.b16 %v1888
          %v1921 = vunpack.c.l.b16 %v1889
          %v1922 = vunpack.c.l.b16 %v1890
          %v1923 = vunpack.c.l.b16 %v1891
          %v1924 = vpack.c.b16 %v1909, %v1908
          %v1925 = vpack.c.b16 %v1911, %v1910
          %v1926 = vpack.c.b16 %v1913, %v1912
          %v1927 = vpack.c.b16 %v1915, %v1914
          %v1928 = vpack.c.b16 %v1917, %v1916
          %v1929 = vpack.c.b16 %v1919, %v1918
          %v1930 = vpack.c.b16 %v1921, %v1920
          %v1931 = vpack.c.b16 %v1923, %v1922
          %1940 = vmatpush.bf16.msra.mxu0 %v1931
          %1941 = vmatpush.bf16.msra.mxu0 %v1930
          %1942 = vmatpush.bf16.msra.mxu0 %v1929
          %1943 = vmatpush.bf16.msra.mxu0 %v1928
          %1944 = vmatpush.bf16.msra.mxu0 %v1927
          %1945 = vmatpush.bf16.msra.mxu0 %v1926
          %1946 = vmatpush.bf16.msra.mxu0 %v1925
          %1947 = vmatpush.bf16.msra.mxu0 %v1924
          %1948 = vmatmul.bf16.gmra.mxu0 %v1875
          %v1949 = vpop.f32.mrf.mxu0
          %v1950 = vadd.f32 0.0, %v1949
          %v1951 = vpop.f32.mrf.mxu0
          %v1952 = vadd.f32 0.0, %v1951
          %1953 = vdwg.mxu0
          %v1954 = vmul.f32 %v1610, %v1950
          %v1955 = vmul.f32 %v1611, %v1952
          %1956 = vadd.xlane.f32.xlu0 %v1954
          %v1957 = vpop.xlane.xlu0 %1956
          %1958 = vadd.xlane.f32.xlu0 %v1955
          %v1959 = vpop.xlane.xlu0 %1958
          %v1960 = vld [vmem:[#allocation4] sm:$0x1]
          %v1962 = vperm.slane %v1960, 0
          %v1964 = vadd.f32 %v1957, %v1962
          %v1965 = vadd.f32 %v1959, %v1962
          %v1966 = vmul.f32 %v1603, %v1950
          %v1967 = vmul.f32 %v1604, %v1952
          %1968 = vadd.xlane.f32.xlu0 %v1966
          %v1969 = vpop.xlane.xlu0 %1968
          %1970 = vadd.xlane.f32.xlu0 %v1967
          %v1971 = vpop.xlane.xlu0 %1970
          %v1972 = vadd.f32 %v1969, %v1962
          %v1973 = vadd.f32 %v1971, %v1962
          %1975 = vset.pattern.permute.xlu0 0
          %1976 = vperm.xlu0 %1975, %v1972
          %v1977 = vpop.permute.xlu0 %1976
          %1980 = vset.pattern.permute.xlu0 0
          %1981 = vperm.xlu0 %1980, %v1973
          %v1982 = vpop.permute.xlu0 %1981
          %v1984 = vsel %vm1716, %v1977, 0.0
          %v1985 = vsel %vm1716, %v1982, 0.0
          %1987 = vset.pattern.permute.xlu0 0
          %1988 = vperm.xlu0 %1987, %v1964
          %v1989 = vpop.permute.xlu0 %1988
          %1992 = vset.pattern.permute.xlu0 0
          %1993 = vperm.xlu0 %1992, %v1965
          %v1994 = vpop.permute.xlu0 %1993
          %v1996 = vsel %vm1715, %v1989, %v1984
          %v1997 = vsel %vm1715, %v1994, %v1985
          %s1998 = scalar_lea.vmem [#allocation17], 32
          %1999 = vst [vmem:[%s1998] sm:$0xff] %v1996
          %2000 = vst [vmem:[%s1998 + $0x8] sm:$0xff] %v1997
          %v2001 = vpack.c.bf16 %v1599, %v1598
          %v2002 = vld [vmem:[#allocation13] sm:$0xf]
          %v2003 = vld [vmem:[#allocation13 + $0x4] sm:$0xf]
          %v2004 = vld [vmem:[#allocation13 + $0x8] sm:$0xf]
          %v2005 = vld [vmem:[#allocation13 + $0xc] sm:$0xf]
          %v2006 = vld [vmem:[#allocation13 + $0x10] sm:$0xf]
          %v2007 = vld [vmem:[#allocation13 + $0x14] sm:$0xf]
          %v2008 = vld [vmem:[#allocation13 + $0x18] sm:$0xf]
          %v2009 = vld [vmem:[#allocation13 + $0x1c] sm:$0xf]
          %v2010 = vld [vmem:[#allocation13 + $0x20] sm:$0xf]
          %v2011 = vld [vmem:[#allocation13 + $0x24] sm:$0xf]
          %v2012 = vld [vmem:[#allocation13 + $0x28] sm:$0xf]
          %v2013 = vld [vmem:[#allocation13 + $0x2c] sm:$0xf]
          %v2014 = vld [vmem:[#allocation13 + $0x30] sm:$0xf]
          %v2015 = vld [vmem:[#allocation13 + $0x34] sm:$0xf]
          %v2016 = vld [vmem:[#allocation13 + $0x38] sm:$0xf]
          %v2017 = vld [vmem:[#allocation13 + $0x3c] sm:$0xf]
          %v2018 = vld [vmem:[%s12] sm:$0x1]
          %v2020 = vperm.slane %v2018, 0
          %v2038 = vunpack.c.l.b16 %v2002
          %v2039 = vunpack.c.l.b16 %v2003
          %v2040 = vunpack.c.l.b16 %v2004
          %v2041 = vunpack.c.l.b16 %v2005
          %v2042 = vunpack.c.l.b16 %v2006
          %v2043 = vunpack.c.l.b16 %v2007
          %v2044 = vunpack.c.l.b16 %v2008
          %v2045 = vunpack.c.l.b16 %v2009
          %v2046 = vunpack.c.l.b16 %v2010
          %v2047 = vunpack.c.l.b16 %v2011
          %v2048 = vunpack.c.l.b16 %v2012
          %v2049 = vunpack.c.l.b16 %v2013
          %v2050 = vunpack.c.l.b16 %v2014
          %v2051 = vunpack.c.l.b16 %v2015
          %v2052 = vunpack.c.l.b16 %v2016
          %v2053 = vunpack.c.l.b16 %v2017
          %v2054 = vpack.c.b16 %v2039, %v2038
          %v2055 = vpack.c.b16 %v2041, %v2040
          %v2056 = vpack.c.b16 %v2043, %v2042
          %v2057 = vpack.c.b16 %v2045, %v2044
          %v2058 = vpack.c.b16 %v2047, %v2046
          %v2059 = vpack.c.b16 %v2049, %v2048
          %v2060 = vpack.c.b16 %v2051, %v2050
          %v2061 = vpack.c.b16 %v2053, %v2052
          %2070 = vmatpush.bf16.msra.mxu0 %v2061
          %2071 = vmatpush.bf16.msra.mxu0 %v2060
          %2072 = vmatpush.bf16.msra.mxu0 %v2059
          %2073 = vmatpush.bf16.msra.mxu0 %v2058
          %2074 = vmatpush.bf16.msra.mxu0 %v2057
          %2075 = vmatpush.bf16.msra.mxu0 %v2056
          %2076 = vmatpush.bf16.msra.mxu0 %v2055
          %2077 = vmatpush.bf16.msra.mxu0 %v2054
          %2078 = vmatmul.bf16.gmra.mxu0 %v2001
          %v2079 = vpop.f32.mrf.mxu0
          %v2080 = vadd.f32 %v2020, %v2079
          %v2081 = vpop.f32.mrf.mxu0
          %v2082 = vadd.f32 %v2020, %v2081
          %2083 = vdwg.mxu0
          %2084 = vst [vmem:[#allocation18] sm:$0xff] %v2080
          %2085 = vst [vmem:[#allocation18 + $0x8] sm:$0xff] %v2082
          %v2086 = vpack.c.bf16 %v1602, %v1601
          %v2087 = vld [vmem:[#allocation13] sm:$0xf]
          %v2088 = vld [vmem:[#allocation13 + $0x4] sm:$0xf]
          %v2089 = vld [vmem:[#allocation13 + $0x8] sm:$0xf]
          %v2090 = vld [vmem:[#allocation13 + $0xc] sm:$0xf]
          %v2091 = vld [vmem:[#allocation13 + $0x10] sm:$0xf]
          %v2092 = vld [vmem:[#allocation13 + $0x14] sm:$0xf]
          %v2093 = vld [vmem:[#allocation13 + $0x18] sm:$0xf]
          %v2094 = vld [vmem:[#allocation13 + $0x1c] sm:$0xf]
          %v2095 = vld [vmem:[#allocation13 + $0x20] sm:$0xf]
          %v2096 = vld [vmem:[#allocation13 + $0x24] sm:$0xf]
          %v2097 = vld [vmem:[#allocation13 + $0x28] sm:$0xf]
          %v2098 = vld [vmem:[#allocation13 + $0x2c] sm:$0xf]
          %v2099 = vld [vmem:[#allocation13 + $0x30] sm:$0xf]
          %v2100 = vld [vmem:[#allocation13 + $0x34] sm:$0xf]
          %v2101 = vld [vmem:[#allocation13 + $0x38] sm:$0xf]
          %v2102 = vld [vmem:[#allocation13 + $0x3c] sm:$0xf]
          %v2103 = vld [vmem:[%s12] sm:$0x1]
          %v2105 = vperm.slane %v2103, 0
          %v2123 = vunpack.c.l.b16 %v2087
          %v2124 = vunpack.c.l.b16 %v2088
          %v2125 = vunpack.c.l.b16 %v2089
          %v2126 = vunpack.c.l.b16 %v2090
          %v2127 = vunpack.c.l.b16 %v2091
          %v2128 = vunpack.c.l.b16 %v2092
          %v2129 = vunpack.c.l.b16 %v2093
          %v2130 = vunpack.c.l.b16 %v2094
          %v2131 = vunpack.c.l.b16 %v2095
          %v2132 = vunpack.c.l.b16 %v2096
          %v2133 = vunpack.c.l.b16 %v2097
          %v2134 = vunpack.c.l.b16 %v2098
          %v2135 = vunpack.c.l.b16 %v2099
          %v2136 = vunpack.c.l.b16 %v2100
          %v2137 = vunpack.c.l.b16 %v2101
          %v2138 = vunpack.c.l.b16 %v2102
          %v2139 = vpack.c.b16 %v2124, %v2123
          %v2140 = vpack.c.b16 %v2126, %v2125
          %v2141 = vpack.c.b16 %v2128, %v2127
          %v2142 = vpack.c.b16 %v2130, %v2129
          %v2143 = vpack.c.b16 %v2132, %v2131
          %v2144 = vpack.c.b16 %v2134, %v2133
          %v2145 = vpack.c.b16 %v2136, %v2135
          %v2146 = vpack.c.b16 %v2138, %v2137
          %2155 = vmatpush.bf16.msra.mxu0 %v2146
          %2156 = vmatpush.bf16.msra.mxu0 %v2145
          %2157 = vmatpush.bf16.msra.mxu0 %v2144
          %2158 = vmatpush.bf16.msra.mxu0 %v2143
          %2159 = vmatpush.bf16.msra.mxu0 %v2142
          %2160 = vmatpush.bf16.msra.mxu0 %v2141
          %2161 = vmatpush.bf16.msra.mxu0 %v2140
          %2162 = vmatpush.bf16.msra.mxu0 %v2139
          %2163 = vmatmul.bf16.gmra.mxu0 %v2086
          %v2164 = vpop.f32.mrf.mxu0
          %v2165 = vadd.f32 %v2105, %v2164
          %v2166 = vpop.f32.mrf.mxu0
          %v2167 = vadd.f32 %v2105, %v2166
          %2168 = vdwg.mxu0
          %2169 = vst [vmem:[#allocation20] sm:$0xff] %v2165
          %2170 = vst [vmem:[#allocation20 + $0x8] sm:$0xff] %v2167
          %vm2171 = vcmp.lt.s32.totalorder %v1613, 32
          %v2172 = vmul.f32 %v1601, 1.1111112
          %v2173 = vmul.f32 %v1602, 1.1111112
          %v2174 = vsel %vm2171, %v2172, -1e+30
          %v2175 = vsel %vm2171, %v2173, -1e+30
          %2176 = vmax.xlane.f32.xlu0 %v2174
          %v2177 = vpop.xlane.xlu0 %2176
          %2178 = vmax.xlane.f32.xlu0 %v2175
          %v2179 = vpop.xlane.xlu0 %2178
          %v2180 = vsub.f32 %v2174, %v2177
          %v2181 = vsub.f32 %v2175, %v2179
          %v2182 = vmul.f32 %v2180, 1.442695
          %v2183 = vpow.pop %v2182
          %v2184 = vmul.f32 %v2181, 1.442695
          %v2185 = vpow.pop %v2184
          %2186 = vadd.xlane.f32.xlu0 %v2183
          %v2187 = vpop.xlane.xlu0 %2186
          %2188 = vadd.xlane.f32.xlu0 %v2185
          %v2189 = vpop.xlane.xlu0 %2188
          %v2190 = vlog2.pop %v2187
          %v2191 = vmul.f32 %v2190, 0.6931472
          %v2192 = vlog2.pop %v2189
          %v2193 = vmul.f32 %v2192, 0.6931472
          %v2194 = vsub.f32 %v2180, %v2191
          %v2195 = vsub.f32 %v2181, %v2193
          %v2196 = vmul.f32 %v1598, 16.666666
          %v2197 = vmul.f32 %v1599, 16.666666
          %v2198 = vsel %vm2171, %v2196, -1e+30
          %v2199 = vsel %vm2171, %v2197, -1e+30
          %2200 = vmax.xlane.f32.xlu0 %v2198
          %v2201 = vpop.xlane.xlu0 %2200
          %2202 = vmax.xlane.f32.xlu0 %v2199
          %v2203 = vpop.xlane.xlu0 %2202
          %v2204 = vsub.f32 %v2198, %v2201
          %v2205 = vsub.f32 %v2199, %v2203
          %v2206 = vmul.f32 %v2204, 1.442695
          %v2207 = vpow.pop %v2206
          %v2208 = vmul.f32 %v2205, 1.442695
          %v2209 = vpow.pop %v2208
          %2210 = vadd.xlane.f32.xlu0 %v2207
          %v2211 = vpop.xlane.xlu0 %2210
          %2212 = vadd.xlane.f32.xlu0 %v2209
          %v2213 = vpop.xlane.xlu0 %2212
          %v2214 = vrcp.pop %v2211
          %v2215 = vmul.f32 %v2211, %v2214
          %v2216 = vsub.f32 1.0, %v2215
          %v2217 = vmul.f32 %v2214, %v2216
          %v2218 = vadd.f32 %v2214, %v2217
          %vm2219 = vweird.f32 %v2211
          %vm2220 = vweird.f32 %v2214
          %vm2221 = vmor %vm2219, %vm2220
          %v2222 = vsel %vm2221, %v2214, %v2218
          %v2223 = vand.u32 2147483647, %v2211
          %vm2224 = vcmp.eq.f32.partialorder %v2223, 8.507059e+37
          %v2225 = vand.u32 %v2211, 2147483648
          %v2226 = vor.u32 1.1754944e-38, %v2225
          %v2227 = vsel %vm2224, %v2226, %v2222
          %v2228 = vmul.f32 %v2207, %v2227
          %v2229 = vrcp.pop %v2213
          %v2230 = vmul.f32 %v2213, %v2229
          %v2231 = vsub.f32 1.0, %v2230
          %v2232 = vmul.f32 %v2229, %v2231
          %v2233 = vadd.f32 %v2229, %v2232
          %vm2234 = vweird.f32 %v2213
          %vm2235 = vweird.f32 %v2229
          %vm2236 = vmor %vm2234, %vm2235
          %v2237 = vsel %vm2236, %v2229, %v2233
          %v2238 = vand.u32 2147483647, %v2213
          %vm2239 = vcmp.eq.f32.partialorder %v2238, 8.507059e+37
          %v2240 = vand.u32 %v2213, 2147483648
          %v2241 = vor.u32 1.1754944e-38, %v2240
          %v2242 = vsel %vm2239, %v2241, %v2237
          %v2243 = vmul.f32 %v2209, %v2242
          %v2244 = vmul.f32 %v2228, %v2194
          %v2245 = vmul.f32 %v2243, %v2195
          %v2246 = vsel %vm2171, %v2244, 0.0
          %v2247 = vsel %vm2171, %v2245, 0.0
          %2248 = vadd.xlane.f32.xlu0 %v2246
          %v2249 = vpop.xlane.xlu0 %2248
          %2250 = vadd.xlane.f32.xlu0 %v2247
          %v2251 = vpop.xlane.xlu0 %2250
          %v2252 = vsub.f32 0.0, %v2249
          %v2253 = vsub.f32 0.0, %v2251
          %v2254 = vadd.f32 %v2252, %v2253
          %v2255 = vrot.slane %v2254, 4
          %v2256 = vadd.f32 %v2254, %v2255
          %v2257 = vrot.slane %v2256, 2
          %v2258 = vadd.f32 %v2256, %v2257
          %v2259 = vrot.slane %v2258, 1
          %v2260 = vadd.f32 %v2258, %v2259
          %v2261 = vrcp.pop 16.0
          %v2262 = vmul.f32 16.0, %v2261
          %v2263 = vsub.f32 1.0, %v2262
          %v2264 = vmul.f32 %v2261, %v2263
          %v2265 = vadd.f32 %v2261, %v2264
          %vm2266 = vweird.f32 %v2261
          %v2267 = vsel %vm2266, %v2261, %v2265
          %v2268 = vmul.f32 %v2260, %v2267
          %v2269 = vmul.f32 %v1598, 1.1111112
          %v2270 = vmul.f32 %v1599, 1.1111112
          %v2271 = vsel %vm2171, %v2269, -1e+30
          %v2272 = vsel %vm2171, %v2270, -1e+30
          %2273 = vmax.xlane.f32.xlu0 %v2271
          %v2274 = vpop.xlane.xlu0 %2273
          %2275 = vmax.xlane.f32.xlu0 %v2272
          %v2276 = vpop.xlane.xlu0 %2275
          %v2277 = vsub.f32 %v2271, %v2274
          %v2278 = vsub.f32 %v2272, %v2276
          %v2279 = vmul.f32 %v2277, 1.442695
          %v2280 = vpow.pop %v2279
          %v2281 = vmul.f32 %v2278, 1.442695
          %v2282 = vpow.pop %v2281
          %2283 = vadd.xlane.f32.xlu0 %v2280
          %v2284 = vpop.xlane.xlu0 %2283
          %2285 = vadd.xlane.f32.xlu0 %v2282
          %v2286 = vpop.xlane.xlu0 %2285
          %v2287 = vlog2.pop %v2284
          %v2288 = vmul.f32 %v2287, 0.6931472
          %v2289 = vlog2.pop %v2286
          %v2290 = vmul.f32 %v2289, 0.6931472
          %v2291 = vsub.f32 %v2277, %v2288
          %v2292 = vsub.f32 %v2278, %v2290
          %v2293 = vmul.f32 %v1601, 16.666666
          %v2294 = vmul.f32 %v1602, 16.666666
          %v2295 = vsel %vm2171, %v2293, -1e+30
          %v2296 = vsel %vm2171, %v2294, -1e+30
          %2297 = vmax.xlane.f32.xlu0 %v2295
          %v2298 = vpop.xlane.xlu0 %2297
          %2299 = vmax.xlane.f32.xlu0 %v2296
          %v2300 = vpop.xlane.xlu0 %2299
          %v2301 = vsub.f32 %v2295, %v2298
          %v2302 = vsub.f32 %v2296, %v2300
          %v2303 = vmul.f32 %v2301, 1.442695
          %v2304 = vpow.pop %v2303
          %v2305 = vmul.f32 %v2302, 1.442695
          %v2306 = vpow.pop %v2305
          %2307 = vadd.xlane.f32.xlu0 %v2304
          %v2308 = vpop.xlane.xlu0 %2307
          %2309 = vadd.xlane.f32.xlu0 %v2306
          %v2310 = vpop.xlane.xlu0 %2309
          %v2311 = vrcp.pop %v2308
          %v2312 = vmul.f32 %v2308, %v2311
          %v2313 = vsub.f32 1.0, %v2312
          %v2314 = vmul.f32 %v2311, %v2313
          %v2315 = vadd.f32 %v2311, %v2314
          %vm2316 = vweird.f32 %v2308
          %vm2317 = vweird.f32 %v2311
          %vm2318 = vmor %vm2316, %vm2317
          %v2319 = vsel %vm2318, %v2311, %v2315
          %v2320 = vand.u32 2147483647, %v2308
          %vm2321 = vcmp.eq.f32.partialorder %v2320, 8.507059e+37
          %v2322 = vand.u32 %v2308, 2147483648
          %v2323 = vor.u32 1.1754944e-38, %v2322
          %v2324 = vsel %vm2321, %v2323, %v2319
          %v2325 = vmul.f32 %v2304, %v2324
          %v2326 = vrcp.pop %v2310
          %v2327 = vmul.f32 %v2310, %v2326
          %v2328 = vsub.f32 1.0, %v2327
          %v2329 = vmul.f32 %v2326, %v2328
          %v2330 = vadd.f32 %v2326, %v2329
          %vm2331 = vweird.f32 %v2310
          %vm2332 = vweird.f32 %v2326
          %vm2333 = vmor %vm2331, %vm2332
          %v2334 = vsel %vm2333, %v2326, %v2330
          %v2335 = vand.u32 2147483647, %v2310
          %vm2336 = vcmp.eq.f32.partialorder %v2335, 8.507059e+37
          %v2337 = vand.u32 %v2310, 2147483648
          %v2338 = vor.u32 1.1754944e-38, %v2337
          %v2339 = vsel %vm2336, %v2338, %v2334
          %v2340 = vmul.f32 %v2306, %v2339
          %v2341 = vmul.f32 %v2325, %v2291
          %v2342 = vmul.f32 %v2340, %v2292
          %v2343 = vsel %vm2171, %v2341, 0.0
          %v2344 = vsel %vm2171, %v2342, 0.0
          %2345 = vadd.xlane.f32.xlu0 %v2343
          %v2346 = vpop.xlane.xlu0 %2345
          %2347 = vadd.xlane.f32.xlu0 %v2344
          %v2348 = vpop.xlane.xlu0 %2347
          %v2349 = vsub.f32 0.0, %v2346
          %v2350 = vsub.f32 0.0, %v2348
          %v2351 = vadd.f32 %v2349, %v2350
          %v2352 = vrot.slane %v2351, 4
          %v2353 = vadd.f32 %v2351, %v2352
          %v2354 = vrot.slane %v2353, 2
          %v2355 = vadd.f32 %v2353, %v2354
          %v2356 = vrot.slane %v2355, 1
          %v2357 = vadd.f32 %v2355, %v2356
          %v2358 = vmul.f32 %v2357, %v2267
          %v2359 = vadd.f32 %v2268, %v2358
          %v2360 = vmul.f32 %v2359, 0.5
          %vm2361 = vcmask 0
          %2362 = vst.msk [vmem:[#allocation21] sm:$0x1] %vm2361, %v2360
        $region112: #{tpu_custom_call.1} parent=71 // pred_fallthru
          _
        // Predicated region
        $region113: #{tpu_custom_call.1} parent=71 // pred_check
          %p2363 = pneg %p330
        $region114: #{tpu_custom_call.1} parent=71 // pred_check_branch
          %2365 = sbr.rel (%p2363) target = $region116
        $region115: #{tpu_custom_call.1} parent=71 // pred_region
          %2367 = vsyncadd [#allocation7], 0
          %s2368 = sshll.u32 [#allocation14], 4
          %s2369 = int_to_ptr.vmem [resolvable:$true] %s2368
          %s2370 = sshll.u32 %s13, 4
          %s2371 = int_to_ptr.hbm [resolvable:$true] %s2370
          %2376 = dma.vmem_to_hbm [thread:$0]  %s2369, 256, %s2371, [#allocation7], 128, 128, 8
        $region116: #{tpu_custom_call.1} parent=71 // pred_fallthru
          _
        // Predicated region
        $region117: #{tpu_custom_call.1} parent=71 // pred_check
          %p2377 = pneg %p351
        $region118: #{tpu_custom_call.1} parent=71 // pred_check_branch
          %2379 = sbr.rel (%p2377) target = $region120
        $region119: #{tpu_custom_call.1} parent=71 // pred_region
          %2381 = vsyncadd [#allocation16], 0
          %s2382 = sshll.u32 [#allocation15], 4
          %s2383 = int_to_ptr.vmem [resolvable:$true] %s2382
          %s2384 = sshll.u32 %s14, 4
          %s2385 = int_to_ptr.hbm [resolvable:$true] %s2384
          %2390 = dma.vmem_to_hbm [thread:$0]  %s2383, 256, %s2385, [#allocation16], 128, 128, 8
        $region120: #{tpu_custom_call.1} parent=71 // pred_fallthru
          _
        // Predicated region
        $region121: #{tpu_custom_call.1} parent=71 // pred_check
          %p2391 = pneg %p372
        $region122: #{tpu_custom_call.1} parent=71 // pred_check_branch
          %2393 = sbr.rel (%p2391) target = $region124
        $region123: #{tpu_custom_call.1} parent=71 // pred_region
          %2395 = vsyncadd [#allocation16], 0
          %s2396 = sshll.u32 [#allocation17], 4
          %s2397 = int_to_ptr.vmem [resolvable:$true] %s2396
          %s2398 = sshll.u32 %s15, 4
          %s2399 = int_to_ptr.hbm [resolvable:$true] %s2398
          %2404 = dma.vmem_to_hbm [thread:$0]  %s2397, 768, %s2399, [#allocation16], 128, 128, 8
        $region124: #{tpu_custom_call.1} parent=71 // pred_fallthru
          _
        // Predicated region
        $region125: #{tpu_custom_call.1} parent=71 // pred_check
          %p2405 = pneg %p393
        $region126: #{tpu_custom_call.1} parent=71 // pred_check_branch
          %2407 = sbr.rel (%p2405) target = $region128
        $region127: #{tpu_custom_call.1} parent=71 // pred_region
          %2409 = vsyncadd [#allocation19], 0
          %s2410 = sshll.u32 [#allocation18], 4
          %s2411 = int_to_ptr.vmem [resolvable:$true] %s2410
          %s2412 = sshll.u32 %s16, 4
          %s2413 = int_to_ptr.hbm [resolvable:$true] %s2412
          %2418 = dma.vmem_to_hbm [thread:$0]  %s2411, 256, %s2413, [#allocation19], 128, 128, 8
        $region128: #{tpu_custom_call.1} parent=71 // pred_fallthru
          _
        // Predicated region
        $region129: #{tpu_custom_call.1} parent=71 // pred_check
          %p2419 = pneg %p414
        $region130: #{tpu_custom_call.1} parent=71 // pred_check_branch
          %2421 = sbr.rel (%p2419) target = $region132
        $region131: #{tpu_custom_call.1} parent=71 // pred_region
          %2423 = vsyncadd [#allocation19], 0
          %s2424 = sshll.u32 [#allocation20], 4
          %s2425 = int_to_ptr.vmem [resolvable:$true] %s2424
          %s2426 = sshll.u32 %s17, 4
          %s2427 = int_to_ptr.hbm [resolvable:$true] %s2426
          %2432 = dma.vmem_to_hbm [thread:$0]  %s2425, 256, %s2427, [#allocation19], 128, 128, 8
        $region132: #{tpu_custom_call.1} parent=71 // pred_fallthru
          _
        // Predicated region
        $region133: #{tpu_custom_call.1} parent=71 // pred_check
          %p2433 = pneg %p435
        $region134: #{tpu_custom_call.1} parent=71 // pred_check_branch
          %2435 = sbr.rel (%p2433) target = $region136
        $region135: #{tpu_custom_call.1} parent=71 // pred_region
          %2437 = vsyncadd [#allocation22], 0
          %s2439 = sshll.u32 [#allocation21], 4
          %s2440 = int_to_ptr.vmem [resolvable:$true] %s2439
          %s2441 = sshll.u32 %s18, 4
          %s2442 = int_to_ptr.hbm [resolvable:$true] %s2441
          %2444 = dma.vmem_to_hbm [thread:$0]  %s2440, 16, %s2442, [#allocation22]
        $region136: #{tpu_custom_call.1} parent=71 // pred_fallthru
          _
        // Predicated region
        $region137: #{tpu_custom_call.1} parent=71 // pred_check
          %p2445 = pneg %p330
        $region138: #{tpu_custom_call.1} parent=71 // pred_check_branch
          %2447 = sbr.rel (%p2445) target = $region140
        $region139: #{tpu_custom_call.1} parent=71 // pred_region
          %2449 = dma.done [#allocation7], 256
        $region140: #{tpu_custom_call.1} parent=71 // pred_fallthru
          _
        // Predicated region
        $region141: #{tpu_custom_call.1} parent=71 // pred_check
          %p2450 = pneg %p351
        $region142: #{tpu_custom_call.1} parent=71 // pred_check_branch
          %2452 = sbr.rel (%p2450) target = $region144
        $region143: #{tpu_custom_call.1} parent=71 // pred_region
          %2454 = dma.done [#allocation16], 256
        $region144: #{tpu_custom_call.1} parent=71 // pred_fallthru
          _
        // Predicated region
        $region145: #{tpu_custom_call.1} parent=71 // pred_check
          %p2455 = pneg %p372
        $region146: #{tpu_custom_call.1} parent=71 // pred_check_branch
          %2457 = sbr.rel (%p2455) target = $region148
        $region147: #{tpu_custom_call.1} parent=71 // pred_region
          %2459 = dma.done [#allocation16], 768
        $region148: #{tpu_custom_call.1} parent=71 // pred_fallthru
          _
        // Predicated region
        $region149: #{tpu_custom_call.1} parent=71 // pred_check
          %p2460 = pneg %p393
        $region150: #{tpu_custom_call.1} parent=71 // pred_check_branch
          %2462 = sbr.rel (%p2460) target = $region152
        $region151: #{tpu_custom_call.1} parent=71 // pred_region
          %2464 = dma.done [#allocation19], 256
        $region152: #{tpu_custom_call.1} parent=71 // pred_fallthru
          _
        // Predicated region
        $region153: #{tpu_custom_call.1} parent=71 // pred_check
          %p2465 = pneg %p414
        $region154: #{tpu_custom_call.1} parent=71 // pred_check_branch
          %2467 = sbr.rel (%p2465) target = $region156
        $region155: #{tpu_custom_call.1} parent=71 // pred_region
          %2469 = dma.done [#allocation19], 256
        $region156: #{tpu_custom_call.1} parent=71 // pred_fallthru
          _
        // Predicated region
        $region157: #{tpu_custom_call.1} parent=71 // pred_check
          %p2470 = pneg %p435
        $region158: #{tpu_custom_call.1} parent=71 // pred_check_branch
          %2472 = sbr.rel (%p2470) target = $region160
        $region159: #{tpu_custom_call.1} parent=71 // pred_region
          %2474 = dma.done [#allocation22], 16
        $region160: #{tpu_custom_call.1} parent=71 // pred_fallthru
          _
      $region72: #{tpu_custom_call.1} parent=5 // pred_fallthru
        _
      %p2475 = scmp.le.s32.totalorder 2, %s34
      // Predicated region
      $region161: #{tpu_custom_call.1} parent=5 // pred_check
        %p2476 = pneg %p2475
      $region162: #{tpu_custom_call.1} parent=5 // pred_check_branch
        %2478 = sbr.rel (%p2476) target = $region164
      $region163: #{tpu_custom_call.1} parent=5 // pred_region
        %s2479 = ssub.s32 %s34, 2
      $region164: #{tpu_custom_call.1} parent=5 // pred_fallthru
        _
    $region6: #{tpu_custom_call.1} parent=1 // loop_footer
      %s38 = sadd.s32 1, %s34
    $region7: #{tpu_custom_call.1} parent=1 // loop_footer_branch
      %33 = sbr.rel target = $region3
    $region8: #{tpu_custom_call.1} parent=1 // loop_exit
      _
    %2480 = vsyncpa [#allocation6], 1
    %s2481 = scalar_lea.sflag [#allocation6], 1
    %2482 = vsyncpa %s2481, 1
    %2483 = vsyncpa [#allocation9], 1
    %2484 = vsyncpa [#allocation12], 1
    %2485 = vsyncpa [#allocation7], 1
    %s2486 = scalar_lea.sflag [#allocation7], 1
    %2487 = vsyncpa %s2486, 1
    %2488 = vsyncpa [#allocation16], 1
    %2489 = vsyncpa [#allocation19], 1
    %2490 = vsyncpa [#allocation22], 1

</llo_original>
